<compile_context>
chip_gen: v7x
topology: tpu7x:2x2x1
jax: 0.10.0
libtpu: 0.0.40
codegen_flags: <defaults>
</compile_context>

<pallas_src>
import numpy as np
import jax
import jax.numpy as jnp
from jax.experimental import pallas as pl
from jax.experimental.pallas import tpu as pltpu

_NEG = -1.0e30            # finite stand-in for -inf (keeps exp/log NaN-free on the VPU)
_ZERO_INF_THRESH = -1.0e20
_TC = 8                   # CTC time steps per chunk / per grid block (sublane-aligned)


def _round_up(x, m):
    return ((x + m - 1) // m) * m


# ----------------------------------------------------------------------------
# Fused matcher-cost kernel (one grid step per (image, time-chunk)).
#   x_ref    : [TC, Qp, V]   raw text logits, t-major chunk (Q padded to 128, V unpadded)
#   ohm_ref  : [SJ, V+5]     cols [0:V]   one-hot extended label per DP row (r = s*Jp + j)
#                            col  V       additive skip mask (0 if (s-2)->s allowed else _NEG)
#                            col  V+1/V+2 one-hot readout selectors for states 2L-1 / 2L
#                            col  V+3     1 / max(len, 1)        (valid on the s = 0 rows)
#                            col  V+4     additive init mask (0 for s in {0,1} else _NEG)
#   pa_ref   : [D, Qp]       pred ctrl points (queries on lanes)
#   pb_ref   : [Jp, D]       target ctrl points
#   text_ref : [Jp, Qp]      CTC text cost (written in the last chunk only)
#   kpt_ref  : [Jp, Qp]      L1 ctrl-point cost (written in the last chunk only)
#   alpha_ref: [2*Jp + SJ, Qp] scratch; top 2*Jp rows are permanent _NEG guards
#   g_ref    : [SJ, TC*Qp]   scratch; per-chunk gathered log-probs, lane index = t_local*Qp + q
# ----------------------------------------------------------------------------
def _make_matcher_kernel(*, S, Jp, V, TC, T_real):
    SJ = S * Jp
    G = 2 * Jp
    nc_py = (T_real + TC - 1) // TC
    rem = T_real - (nc_py - 1) * TC      # number of real (non-padded) steps in the last chunk

    def kernel(x_ref, ohm_ref, pa_ref, pb_ref, text_ref, kpt_ref, alpha_ref, g_ref):
        c = pl.program_id(1)
        nc = pl.num_programs(1)
        Qp = x_ref.shape[1]
        D = pa_ref.shape[0]

        # ---- per-chunk fused log_softmax + one-hot MXU gather (hoisted off the serial DP) ----
        xf = x_ref[...].reshape(TC * Qp, V)                     # t-major rows: r = t_local*Qp + q
        mx = jnp.max(xf, axis=-1, keepdims=True)
        z = xf - mx
        lp = z - jnp.log(jnp.sum(jnp.exp(z), axis=-1, keepdims=True))      # [TC*Qp, V]
        oh = ohm_ref[:, 0:V]                                               # [SJ, V]
        g_ref[...] = jax.lax.dot_general(
            oh, lp, (((1,), (1,)), ((), ())),
            preferred_element_type=jnp.float32)                            # [SJ, TC*Qp]

        a3m = ohm_ref[:, V:V + 1]            # 0 where the (s-2)->s skip is allowed, else _NEG
        init_add = ohm_ref[:, V + 4:V + 5]   # 0 for s in {0,1}, else _NEG

        @pl.when(c == 0)
        def _():
            # permanent guard rows + defined starting state for the whole DP buffer
            alpha_ref[...] = jnp.full(alpha_ref.shape, _NEG, jnp.float32)

        # ---- TC statically-unrolled DP steps (scheduler sees the whole chunk) ----
        for tl in range(TC):
            t = c * TC + tl
            gt = g_ref[:, tl * Qp:(tl + 1) * Qp]                # 128-aligned static lane slice
            a1 = alpha_ref[pl.ds(G, SJ), :]                     # alpha[s]
            a2 = alpha_ref[pl.ds(G - Jp, SJ), :]                # alpha[s-1]  (guards at s=0)
            a3 = alpha_ref[pl.ds(G - 2 * Jp, SJ), :] + a3m      # alpha[s-2]  (skip mask + guards)
            mm = jnp.maximum(jnp.maximum(a1, a2), a3)
            lse = mm + jnp.log(jnp.exp(a1 - mm) + jnp.exp(a2 - mm) + jnp.exp(a3 - mm))
            new = jnp.maximum(gt + lse, _NEG)                   # clamp: no -inf drift
            if tl == 0:
                # t == 0 init: alpha_0(s) = lp(ext_s) for s in {0,1}, else _NEG
                ini = jnp.maximum(gt + init_add, _NEG)
                new = jnp.where(t == 0, ini, new)
            if tl >= rem:
                new = jnp.where(t < T_real, new, a1)            # padded time steps are no-ops
            alpha_ref[pl.ds(G, SJ), :] = new

        # ---- epilogue (last chunk only): fused CTC readout + block-diagonal L1 cost ----
        @pl.when(c == nc - 1)
        def _():
            alpha = alpha_ref[pl.ds(G, SJ), :]                  # [SJ, Qp]
            a3d = alpha.reshape(S, Jp, Qp)                      # sublane-aligned split (Jp % 8 == 0)
            w_lo = ohm_ref[:, V + 1:V + 2].reshape(S, Jp, 1)
            w_hi = ohm_ref[:, V + 2:V + 3].reshape(S, Jp, 1)
            p_lo = jnp.sum(a3d * w_lo, axis=0)                  # exact one-hot row selection
            p_hi = jnp.sum(a3d * w_hi, axis=0)                  # [Jp, Qp]
            m2 = jnp.maximum(p_lo, p_hi)
            lse2 = m2 + jnp.log(jnp.exp(p_lo - m2) + jnp.exp(p_hi - m2))
            inv_len = ohm_ref[0:Jp, V + 3:V + 4]                # [Jp, 1]  (rows 0..Jp-1 <=> s = 0)
            text_ref[...] = jnp.where(lse2 < _ZERO_INF_THRESH, 0.0, -lse2) * inv_len

            # block-diagonal L1 between pred ctrl points (lanes = queries) and targets
            a_t = pa_ref[...]                                   # [D, Qp]
            b = pb_ref[...]                                     # [Jp, D]
            acc = jnp.zeros((Jp, Qp), jnp.float32)
            for d in range(D):                                  # D tiny & static
                acc = acc + jnp.abs(b[:, d:d + 1] - a_t[d:d + 1, :])
            kpt_ref[...] = acc

    return kernel


def _fused_matcher_costs(x, ohm, pts_a, pts_b, *, S, Jp, V, TC, T_real):
    bs, Tp, Qp, _ = x.shape
    SJ = S * Jp
    Vm = ohm.shape[-1]
    D = pts_a.shape[1]
    NC = Tp // TC
    G = 2 * Jp
    kernel = _make_matcher_kernel(S=S, Jp=Jp, V=V, TC=TC, T_real=T_real)
    return pl.pallas_call(
        kernel,
        out_shape=(jax.ShapeDtypeStruct((bs, Jp, Qp), jnp.float32),
                   jax.ShapeDtypeStruct((bs, Jp, Qp), jnp.float32)),
        grid_spec=pltpu.PrefetchScalarGridSpec(
            num_scalar_prefetch=0,
            grid=(bs, NC),
            in_specs=[
                pl.BlockSpec((None, TC, Qp, V), lambda b, c: (b, c, 0, 0)),
                pl.BlockSpec((None, SJ, Vm), lambda b, c: (b, 0, 0)),
                pl.BlockSpec((None, D, Qp), lambda b, c: (b, 0, 0)),
                pl.BlockSpec((None, Jp, D), lambda b, c: (b, 0, 0)),
            ],
            out_specs=[
                pl.BlockSpec((None, Jp, Qp), lambda b, c: (b, 0, 0)),
                pl.BlockSpec((None, Jp, Qp), lambda b, c: (b, 0, 0)),
            ],
            scratch_shapes=[
                pltpu.VMEM((G + SJ, Qp), jnp.float32),          # alpha (guards + DP state)
                pltpu.VMEM((SJ, TC * Qp), jnp.float32),         # per-chunk gathered log-probs
            ],
        ),
        compiler_params=pltpu.CompilerParams(
            dimension_semantics=("parallel", "arbitrary")),
    )(x, ohm, pts_a, pts_b)


# ----------------------------------------------------------------------------
# Tiny XLA-side construction of the packed side-input (one-hot + metadata columns).
# ----------------------------------------------------------------------------
def _build_side_inputs(texts, blank, S, Jp, V):
    bs, J, Lmax = texts.shape
    texts_p = jnp.pad(texts, ((0, 0), (0, Jp - J), (0, 0)), constant_values=blank)  # [bs,Jp,Lmax]
    len_p = jnp.sum(texts_p != blank, axis=-1)                                       # [bs,Jp]

    s_idx = jnp.arange(S)
    k_idx = (s_idx - 1) // 2
    is_label = (s_idx % 2) == 1

    k_clip = jnp.clip(k_idx, 0, Lmax - 1)
    cur = jnp.take_along_axis(
        texts_p, jnp.broadcast_to(k_clip[None, None, :], (bs, Jp, S)), axis=-1)
    ext = jnp.where(is_label[None, None, :], cur, blank)                             # [bs,Jp,S]
    km1 = jnp.clip(k_idx - 1, 0, Lmax - 1)
    prev = jnp.take_along_axis(
        texts_p, jnp.broadcast_to(km1[None, None, :], (bs, Jp, S)), axis=-1)
    skip_ok = is_label[None, None, :] & (k_idx[None, None, :] >= 1) & (ext != prev)

    # rows ordered r = s*Jp + j (s-major, sublane stride Jp)
    ext_rows = jnp.transpose(ext, (0, 2, 1)).reshape(bs, S * Jp)
    skip_rows = jnp.transpose(skip_ok, (0, 2, 1)).reshape(bs, S * Jp)

    onehot = jax.nn.one_hot(ext_rows, V, dtype=jnp.float32)                          # [bs,SJ,V]
    a3_col = jnp.where(skip_rows, 0.0, _NEG).astype(jnp.float32)[..., None]

    s_rows = jnp.repeat(jnp.arange(S), Jp)                                           # [SJ]
    j_rows = jnp.tile(jnp.arange(Jp), S)                                             # [SJ]
    lo = jnp.clip(2 * len_p - 1, 0, S - 1)
    hi = jnp.clip(2 * len_p, 0, S - 1)
    w_lo = (s_rows[None, :] == jnp.take(lo, j_rows, axis=1)).astype(jnp.float32)[..., None]
    w_hi = (s_rows[None, :] == jnp.take(hi, j_rows, axis=1)).astype(jnp.float32)[..., None]
    inv_len = 1.0 / jnp.maximum(len_p, 1).astype(jnp.float32)                        # guarded 1/len
    inv_col = jnp.take(inv_len, j_rows, axis=1)[..., None]
    init_col = jnp.broadcast_to(
        jnp.where(s_rows < 2, 0.0, _NEG).astype(jnp.float32)[None, :, None],
        (bs, S * Jp, 1))

    return jnp.concatenate([onehot, a3_col, w_lo, w_hi, inv_col, init_col], axis=-1)  # [bs,SJ,V+5]


@jax.jit
def _device_costs(pred_text_logits, pred_ctrl_points, texts, tgt_ctrl_points,
                  coord_weight, text_weight):
    bs, Q, T, V = pred_text_logits.shape
    J = texts.shape[1]
    Lmax = texts.shape[2]
    voc = V - 1
    S = 2 * Lmax + 1
    Jp = _round_up(max(J, 1), 8)        # state stride multiple of 8 -> aligned alpha shifts
    Qp = _round_up(Q, 128)              # lane-dense queries
    TC = _TC
    Tp = _round_up(T, TC)

    # packed one-hot + per-row metadata (rides in the one-hot's lane padding: zero extra VMEM/HBM)
    ohm = _build_side_inputs(texts.astype(jnp.int32), voc, S, Jp, V)

    # single fused pad(Q->Qp, T->Tp) + transpose copy over the logits -> t-major blocks.
    # (no vocab padding; the old separate log_softmax pass is fused into the kernel)
    x = jnp.pad(pred_text_logits.astype(jnp.float32),
                ((0, 0), (0, Qp - Q), (0, Tp - T), (0, 0)))
    x = jnp.transpose(x, (0, 2, 1, 3))                          # [bs, Tp, Qp, V]

    # ctrl points: pred transposed so queries sit on the lane axis; targets padded to Jp
    D = int(np.prod(pred_ctrl_points.shape[2:]))
    pp = pred_ctrl_points.reshape(bs, Q, D).astype(jnp.float32)
    pp = jnp.pad(pp, ((0, 0), (0, Qp - Q), (0, 0)))
    pts_a = jnp.transpose(pp, (0, 2, 1))                        # [bs, D, Qp]
    tpts = tgt_ctrl_points.reshape(bs, J, D).astype(jnp.float32)
    pts_b = jnp.pad(tpts, ((0, 0), (0, Jp - J), (0, 0)))        # [bs, Jp, D]

    text_p, kpt_p = _fused_matcher_costs(x, ohm, pts_a, pts_b,
                                         S=S, Jp=Jp, V=V, TC=TC, T_real=T)
    text_cost = text_p[:, :J, :Q]                               # drop padded targets / queries
    kpt_cost = kpt_p[:, :J, :Q]
    C = coord_weight * kpt_cost + text_weight * text_cost       # tiny [bs, J, Q]
    return C, text_cost, kpt_cost


# ----------------------------------------------------------------------------
# Host-side Hungarian matching (the reference also moves costs to CPU + scipy)
# ----------------------------------------------------------------------------
# TODO(synk): linear_sum_assignment is an inherently sequential host-side algorithm
# (the reference runs it on CPU via scipy); it is not implemented as a Pallas kernel.
def _linear_sum_assignment(cost):
    try:
        from scipy.optimize import linear_sum_assignment as lsa
        r, c = lsa(cost)
        return np.asarray(r, np.int64), np.asarray(c, np.int64)
    except Exception:
        import itertools
        n_r, n_c = cost.shape
        assert n_c <= n_r, "fallback assumes #targets <= #queries"
        best, best_val = None, np.inf
        for rows in itertools.permutations(range(n_r), n_c):
            v = cost[list(rows), list(range(n_c))].sum()
            if v < best_val:
                best_val, best = v, rows
        rows = np.asarray(best, np.int64)
        cols = np.arange(n_c, dtype=np.int64)
        order = np.argsort(rows)
        return rows[order], cols[order]


# ----------------------------------------------------------------------------
# Forward pass of CtrlPointRecCostMatcher
# ----------------------------------------------------------------------------
def ctrl_point_rec_cost_matcher(outputs, targets, class_weight=1.0, coord_weight=1.0,
                                text_weight=1.0, focal_alpha=0.25, focal_gamma=2.0):
    # class_weight / focal_alpha / focal_gamma are unused in the reference forward (kept for parity)
    del class_weight, focal_alpha, focal_gamma
    pred_text_logits = outputs['pred_text_logits']              # [bs, Q, T, V]
    pred_ctrl_points = outputs['pred_ctrl_points']              # [bs, Q, n_ctrl, 2]
    bs, Q = outputs['pred_logits'].shape[:2]

    # static, equal number of instances per image (matches the reference for equal-sized targets)
    texts = jnp.stack([t['texts'] for t in targets], axis=0)            # [bs, J, Lmax]
    tgt_pts = jnp.stack([t['ctrl_points'] for t in targets], axis=0)    # [bs, J, n_ctrl, 2]
    J = int(texts.shape[1])

    if J > 0:
        C, text_cost, kpt_cost = _device_costs(pred_text_logits, pred_ctrl_points,
                                               texts, tgt_pts, coord_weight, text_weight)
        C_host = np.asarray(jax.device_get(C))                  # one small [bs, J, Q] transfer
        indices = [_linear_sum_assignment(C_host[i].T) for i in range(bs)]  # [Q, J] cost matrix
    else:
        C = jnp.zeros((bs, 0, Q), jnp.float32)
        text_cost = kpt_cost = C
        indices = [(np.array([], np.int64), np.array([], np.int64)) for _ in range(bs)]

    debug = {'text_cost': text_cost, 'kpt_cost': kpt_cost, 'C': C}
    return indices, debug


# ----------------------------------------------------------------------------
# NumPy reference (for verification only)
# ----------------------------------------------------------------------------
def _ctc_loss_np(lp, tgt, blank):
    T = lp.shape[0]
    L = len(tgt)
    ext = [blank]
    for ch in tgt:
        ext += [int(ch), blank]
    S = 2 * L + 1
    alpha = np.full(S, -np.inf)
    alpha[0] = lp[0, blank]
    if S > 1:
        alpha[1] = lp[0, ext[1]]
    for t in range(1, T):
        new = np.full(S, -np.inf)
        for s in range(S):
            terms = [alpha[s]]
            if s >= 1:
                terms.append(alpha[s - 1])
            if s >= 2 and ext[s] != blank and ext[s] != ext[s - 2]:
                terms.append(alpha[s - 2])
            m = max(terms)
            lse = -np.inf if np.isneginf(m) else m + np.log(sum(np.exp(v - m) for v in terms))
            new[s] = lp[t, ext[s]] + lse
        alpha = new
    terms = [alpha[S - 1]]
    if S >= 2:
        terms.append(alpha[S - 2])
    m = max(terms)
    ll = -np.inf if np.isneginf(m) else m + np.log(sum(np.exp(v - m) for v in terms))
    loss = -ll
    return 0.0 if np.isinf(loss) else loss


if __name__ == "__main__":
    key = jax.random.PRNGKey(0)
    bs, Q, T, V = 2, 8, 12, 32          # batch, queries, n_pts (CTC time), voc+1
    n_ctrl, J, Lmax = 8, 3, 4           # ctrl points per instance, targets per image, max text len
    voc = V - 1

    k1, k2, k3, k4, k5, k6 = jax.random.split(key, 6)
    pred_logits = jax.random.normal(k1, (bs, Q, 1), jnp.float32)
    pred_text_logits = jax.random.normal(k2, (bs, Q, T, V), jnp.float32)
    pred_ctrl_points = jax.random.uniform(k3, (bs, Q, n_ctrl, 2), jnp.float32)

    lengths = jax.random.randint(k4, (bs, J), 1, Lmax + 1)
    labels = jax.random.randint(k5, (bs, J, Lmax), 0, voc)
    pad_mask = jnp.arange(Lmax)[None, None, :] < lengths[..., None]
    texts = jnp.where(pad_mask, labels, voc).astype(jnp.int32)          # padded with blank(=voc)
    ctrl_points = jax.random.uniform(k6, (bs, J, n_ctrl, 2), jnp.float32)

    outputs = {'pred_logits': pred_logits,
               'pred_text_logits': pred_text_logits,
               'pred_ctrl_points': pred_ctrl_points}
    targets = [{'texts': texts[b], 'ctrl_points': ctrl_points[b]} for b in range(bs)]

    indices, dbg = ctrl_point_rec_cost_matcher(outputs, targets)
    jax.block_until_ready((dbg['text_cost'], dbg['kpt_cost'], dbg['C']))

    # ---- verification against plain numpy references ----
    x = np.asarray(pred_text_logits, np.float64)
    lp = x - x.max(-1, keepdims=True)
    lp = lp - np.log(np.exp(lp).sum(-1, keepdims=True))

    texts_np = np.asarray(texts)
    lens_np = (texts_np != voc).sum(-1)
    ref_text = np.zeros((bs, J, Q))
    for b in range(bs):
        for j in range(J):
            tgt = texts_np[b, j, :lens_np[b, j]]
            for q in range(Q):
                ref_text[b, j, q] = _ctc_loss_np(lp[b, q], tgt, voc) / max(int(lens_np[b, j]), 1)
    assert np.allclose(np.asarray(dbg['text_cost']), ref_text, rtol=2e-3, atol=2e-3), \
        "CTC cost mismatch"

    p = np.asarray(pred_ctrl_points, np.float64).reshape(bs, Q, -1)
    g = np.asarray(ctrl_points, np.float64).reshape(bs, J, -1)
    ref_kpt = np.abs(p[:, :, None, :] - g[:, None, :, :]).sum(-1)        # [bs, Q, J]
    assert np.allclose(np.asarray(dbg['kpt_cost']).transpose(0, 2, 1), ref_kpt,
                       rtol=1e-4, atol=1e-4), "cdist mismatch"

    for r, c in indices:
        assert r.dtype == np.int64 and len(r) == len(c) == J

    print("KERNEL_OK")
</pallas_src>

<mosaic_0001>
module attributes {stable_mosaic.version = 11 : i64} {
  func.func @kernel(%arg0: i32, %arg1: i32, %arg2: memref<1x8x128x32xf32, #tpu.memory_space<vmem>>, %arg3: memref<1x72x37xf32, #tpu.memory_space<vmem>>, %arg4: memref<1x16x128xf32, #tpu.memory_space<vmem>>, %arg5: memref<1x8x16xf32, #tpu.memory_space<vmem>>, %arg6: memref<1x8x128xf32, #tpu.memory_space<vmem>>, %arg7: memref<1x8x128xf32, #tpu.memory_space<vmem>>, %arg8: memref<88x128xf32, #tpu.memory_space<vmem>>, %arg9: memref<72x1024xf32, #tpu.memory_space<vmem>>) attributes {dimension_semantics = [#tpu.dimension_semantics<parallel>, #tpu.dimension_semantics<arbitrary>], iteration_bounds = array<i64: 2, 2>, scalar_prefetch = 0 : i64, scratch_operands = 2 : i64, tpu.core_type = #tpu.core_type<tc>, window_params = [{transform_indices = @transform_0, window_bounds = array<i64: 1, 8, 128, 32>}, {transform_indices = @transform_1, window_bounds = array<i64: 1, 72, 37>}, {transform_indices = @transform_2, window_bounds = array<i64: 1, 16, 128>}, {transform_indices = @transform_3, window_bounds = array<i64: 1, 8, 16>}, {transform_indices = @transform_4, window_bounds = array<i64: 1, 8, 128>}, {transform_indices = @transform_5, window_bounds = array<i64: 1, 8, 128>}]} {
    %c0 = arith.constant 0 : index
    %c0_0 = arith.constant 0 : index
    %c0_1 = arith.constant 0 : index
    %c0_2 = arith.constant 0 : index
    %0 = vector.load %arg2[%c0, %c0_0, %c0_1, %c0_2] : memref<1x8x128x32xf32, #tpu.memory_space<vmem>>, vector<1x8x128x32xf32>
    %1 = vector.shape_cast %0 : vector<1x8x128x32xf32> to vector<8x128x32xf32>
    %2 = vector.shape_cast %1 : vector<8x128x32xf32> to vector<1024x32xf32>
    %cst = arith.constant dense<0xFF800000> : vector<1024xf32>
    %3 = vector.multi_reduction <maximumf>, %2, %cst [1] : vector<1024x32xf32> to vector<1024xf32>
    %4 = vector.shape_cast %3 : vector<1024xf32> to vector<1024x1xf32>
    %5 = vector.broadcast %4 : vector<1024x1xf32> to vector<1024x32xf32>
    %6 = arith.subf %2, %5 : vector<1024x32xf32>
    %7 = math.exp %6 : vector<1024x32xf32>
    %cst_3 = arith.constant dense<0.000000e+00> : vector<1024xf32>
    %8 = vector.multi_reduction <add>, %7, %cst_3 [1] : vector<1024x32xf32> to vector<1024xf32>
    %9 = vector.shape_cast %8 : vector<1024xf32> to vector<1024x1xf32>
    %10 = math.log %9 : vector<1024x1xf32>
    %11 = vector.broadcast %10 : vector<1024x1xf32> to vector<1024x32xf32>
    %12 = arith.subf %6, %11 : vector<1024x32xf32>
    %c0_4 = arith.constant 0 : index
    %c0_5 = arith.constant 0 : index
    %c0_6 = arith.constant 0 : index
    %13 = vector.load %arg3[%c0_4, %c0_5, %c0_6] : memref<1x72x37xf32, #tpu.memory_space<vmem>>, vector<1x72x32xf32>
    %14 = vector.shape_cast %13 : vector<1x72x32xf32> to vector<72x32xf32>
    %cst_7 = arith.constant dense<0.000000e+00> : vector<72x1024xf32>
    %15 = tpu.matmul %14, %12, %cst_7 {dimension_numbers = #tpu.dot_dimension_numbers<[1], [1], [0], [0], [0, 0, 1, 0], [], []>} : vector<72x32xf32>, vector<1024x32xf32>, vector<72x1024xf32> -> vector<72x1024xf32>
    %c0_8 = arith.constant 0 : index
    %c0_9 = arith.constant 0 : index
    %16 = vector.load %arg9[%c0_8, %c0_9] : memref<72x1024xf32, #tpu.memory_space<vmem>>, vector<72x1024xf32>
    tpu.vector_store %arg9[%c0_8, %c0_9], %15 {strides = array<i32>} : memref<72x1024xf32, #tpu.memory_space<vmem>>, vector<72x1024xf32>,
    %c0_10 = arith.constant 0 : index
    %c0_11 = arith.constant 0 : index
    %c32 = arith.constant 32 : index
    %17 = vector.load %arg3[%c0_10, %c0_11, %c32] : memref<1x72x37xf32, #tpu.memory_space<vmem>>, vector<1x72x1xf32>
    %18 = vector.shape_cast %17 : vector<1x72x1xf32> to vector<72x1xf32>
    %c0_12 = arith.constant 0 : index
    %c0_13 = arith.constant 0 : index
    %c36 = arith.constant 36 : index
    %19 = vector.load %arg3[%c0_12, %c0_13, %c36] : memref<1x72x37xf32, #tpu.memory_space<vmem>>, vector<1x72x1xf32>
    %20 = vector.shape_cast %19 : vector<1x72x1xf32> to vector<72x1xf32>
    %c0_i32 = arith.constant 0 : i32
    %21 = arith.cmpi eq, %arg1, %c0_i32 : i32
    %22 = arith.extui %21 : i1 to i32
    %c0_i32_14 = arith.constant 0 : i32
    %23 = arith.cmpi ne, %22, %c0_i32_14 : i32
    scf.if %23 {
      %cst_105 = arith.constant -1.000000e+30 : f32
      %227 = vector.broadcast %cst_105 : f32 to vector<88x128xf32>
      %c0_106 = arith.constant 0 : index
      %c0_107 = arith.constant 0 : index
      %228 = vector.load %arg8[%c0_106, %c0_107] : memref<88x128xf32, #tpu.memory_space<vmem>>, vector<88x128xf32>
      tpu.vector_store %arg8[%c0_106, %c0_107], %227 {strides = array<i32>} : memref<88x128xf32, #tpu.memory_space<vmem>>, vector<88x128xf32>,
    } else {
    }
    %c8_i32 = arith.constant 8 : i32
    %24 = arith.muli %arg1, %c8_i32 : i32
    %c0_i32_15 = arith.constant 0 : i32
    %25 = arith.addi %24, %c0_i32_15 : i32
    %c0_16 = arith.constant 0 : index
    %c0_17 = arith.constant 0 : index
    %26 = vector.load %arg9[%c0_16, %c0_17] : memref<72x1024xf32, #tpu.memory_space<vmem>>, vector<72x128xf32>
    %c16 = arith.constant 16 : index
    %c0_18 = arith.constant 0 : index
    %27 = vector.load %arg8[%c16, %c0_18] : memref<88x128xf32, #tpu.memory_space<vmem>>, vector<72x128xf32>
    %c8 = arith.constant 8 : index
    %c0_19 = arith.constant 0 : index
    %28 = vector.load %arg8[%c8, %c0_19] : memref<88x128xf32, #tpu.memory_space<vmem>>, vector<72x128xf32>
    %c0_20 = arith.constant 0 : index
    %c0_21 = arith.constant 0 : index
    %29 = vector.load %arg8[%c0_20, %c0_21] : memref<88x128xf32, #tpu.memory_space<vmem>>, vector<72x128xf32>
    %30 = vector.broadcast %18 : vector<72x1xf32> to vector<72x128xf32>
    %31 = arith.addf %29, %30 : vector<72x128xf32>
    %32 = arith.maximumf %27, %28 : vector<72x128xf32>
    %33 = arith.maximumf %32, %31 : vector<72x128xf32>
    %34 = arith.subf %27, %33 : vector<72x128xf32>
    %35 = math.exp %34 : vector<72x128xf32>
    %36 = arith.subf %28, %33 : vector<72x128xf32>
    %37 = math.exp %36 : vector<72x128xf32>
    %38 = arith.addf %35, %37 : vector<72x128xf32>
    %39 = arith.subf %31, %33 : vector<72x128xf32>
    %40 = math.exp %39 : vector<72x128xf32>
    %41 = arith.addf %38, %40 : vector<72x128xf32>
    %42 = math.log %41 : vector<72x128xf32>
    %43 = arith.addf %33, %42 : vector<72x128xf32>
    %44 = arith.addf %26, %43 : vector<72x128xf32>
    %cst_22 = arith.constant -1.000000e+30 : f32
    %45 = vector.broadcast %cst_22 : f32 to vector<72x128xf32>
    %46 = arith.maximumf %44, %45 : vector<72x128xf32>
    %47 = vector.broadcast %20 : vector<72x1xf32> to vector<72x128xf32>
    %48 = arith.addf %26, %47 : vector<72x128xf32>
    %cst_23 = arith.constant -1.000000e+30 : f32
    %49 = vector.broadcast %cst_23 : f32 to vector<72x128xf32>
    %50 = arith.maximumf %48, %49 : vector<72x128xf32>
    %c0_i32_24 = arith.constant 0 : i32
    %51 = arith.cmpi eq, %25, %c0_i32_24 : i32
    %52 = arith.select %51, %50, %46 : vector<72x128xf32>
    %c16_25 = arith.constant 16 : index
    %c0_26 = arith.constant 0 : index
    %53 = vector.load %arg8[%c16_25, %c0_26] : memref<88x128xf32, #tpu.memory_space<vmem>>, vector<72x128xf32>
    tpu.vector_store %arg8[%c16_25, %c0_26], %52 {strides = array<i32>} : memref<88x128xf32, #tpu.memory_space<vmem>>, vector<72x128xf32>,
    %c0_27 = arith.constant 0 : index
    %c128 = arith.constant 128 : index
    %54 = vector.load %arg9[%c0_27, %c128] : memref<72x1024xf32, #tpu.memory_space<vmem>>, vector<72x128xf32>
    %c16_28 = arith.constant 16 : index
    %c0_29 = arith.constant 0 : index
    %55 = vector.load %arg8[%c16_28, %c0_29] : memref<88x128xf32, #tpu.memory_space<vmem>>, vector<72x128xf32>
    %c8_30 = arith.constant 8 : index
    %c0_31 = arith.constant 0 : index
    %56 = vector.load %arg8[%c8_30, %c0_31] : memref<88x128xf32, #tpu.memory_space<vmem>>, vector<72x128xf32>
    %c0_32 = arith.constant 0 : index
    %c0_33 = arith.constant 0 : index
    %57 = vector.load %arg8[%c0_32, %c0_33] : memref<88x128xf32, #tpu.memory_space<vmem>>, vector<72x128xf32>
    %58 = vector.broadcast %18 : vector<72x1xf32> to vector<72x128xf32>
    %59 = arith.addf %57, %58 : vector<72x128xf32>
    %60 = arith.maximumf %55, %56 : vector<72x128xf32>
    %61 = arith.maximumf %60, %59 : vector<72x128xf32>
    %62 = arith.subf %55, %61 : vector<72x128xf32>
    %63 = math.exp %62 : vector<72x128xf32>
    %64 = arith.subf %56, %61 : vector<72x128xf32>
    %65 = math.exp %64 : vector<72x128xf32>
    %66 = arith.addf %63, %65 : vector<72x128xf32>
    %67 = arith.subf %59, %61 : vector<72x128xf32>
    %68 = math.exp %67 : vector<72x128xf32>
    %69 = arith.addf %66, %68 : vector<72x128xf32>
    %70 = math.log %69 : vector<72x128xf32>
    %71 = arith.addf %61, %70 : vector<72x128xf32>
    %72 = arith.addf %54, %71 : vector<72x128xf32>
    %cst_34 = arith.constant -1.000000e+30 : f32
    %73 = vector.broadcast %cst_34 : f32 to vector<72x128xf32>
    %74 = arith.maximumf %72, %73 : vector<72x128xf32>
    %c16_35 = arith.constant 16 : index
    %c0_36 = arith.constant 0 : index
    %75 = vector.load %arg8[%c16_35, %c0_36] : memref<88x128xf32, #tpu.memory_space<vmem>>, vector<72x128xf32>
    tpu.vector_store %arg8[%c16_35, %c0_36], %74 {strides = array<i32>} : memref<88x128xf32, #tpu.memory_space<vmem>>, vector<72x128xf32>,
    %c0_37 = arith.constant 0 : index
    %c256 = arith.constant 256 : index
    %76 = vector.load %arg9[%c0_37, %c256] : memref<72x1024xf32, #tpu.memory_space<vmem>>, vector<72x128xf32>
    %c16_38 = arith.constant 16 : index
    %c0_39 = arith.constant 0 : index
    %77 = vector.load %arg8[%c16_38, %c0_39] : memref<88x128xf32, #tpu.memory_space<vmem>>, vector<72x128xf32>
    %c8_40 = arith.constant 8 : index
    %c0_41 = arith.constant 0 : index
    %78 = vector.load %arg8[%c8_40, %c0_41] : memref<88x128xf32, #tpu.memory_space<vmem>>, vector<72x128xf32>
    %c0_42 = arith.constant 0 : index
    %c0_43 = arith.constant 0 : index
    %79 = vector.load %arg8[%c0_42, %c0_43] : memref<88x128xf32, #tpu.memory_space<vmem>>, vector<72x128xf32>
    %80 = vector.broadcast %18 : vector<72x1xf32> to vector<72x128xf32>
    %81 = arith.addf %79, %80 : vector<72x128xf32>
    %82 = arith.maximumf %77, %78 : vector<72x128xf32>
    %83 = arith.maximumf %82, %81 : vector<72x128xf32>
    %84 = arith.subf %77, %83 : vector<72x128xf32>
    %85 = math.exp %84 : vector<72x128xf32>
    %86 = arith.subf %78, %83 : vector<72x128xf32>
    %87 = math.exp %86 : vector<72x128xf32>
    %88 = arith.addf %85, %87 : vector<72x128xf32>
    %89 = arith.subf %81, %83 : vector<72x128xf32>
    %90 = math.exp %89 : vector<72x128xf32>
    %91 = arith.addf %88, %90 : vector<72x128xf32>
    %92 = math.log %91 : vector<72x128xf32>
    %93 = arith.addf %83, %92 : vector<72x128xf32>
    %94 = arith.addf %76, %93 : vector<72x128xf32>
    %cst_44 = arith.constant -1.000000e+30 : f32
    %95 = vector.broadcast %cst_44 : f32 to vector<72x128xf32>
    %96 = arith.maximumf %94, %95 : vector<72x128xf32>
    %c16_45 = arith.constant 16 : index
    %c0_46 = arith.constant 0 : index
    %97 = vector.load %arg8[%c16_45, %c0_46] : memref<88x128xf32, #tpu.memory_space<vmem>>, vector<72x128xf32>
    tpu.vector_store %arg8[%c16_45, %c0_46], %96 {strides = array<i32>} : memref<88x128xf32, #tpu.memory_space<vmem>>, vector<72x128xf32>,
    %c0_47 = arith.constant 0 : index
    %c384 = arith.constant 384 : index
    %98 = vector.load %arg9[%c0_47, %c384] : memref<72x1024xf32, #tpu.memory_space<vmem>>, vector<72x128xf32>
    %c16_48 = arith.constant 16 : index
    %c0_49 = arith.constant 0 : index
    %99 = vector.load %arg8[%c16_48, %c0_49] : memref<88x128xf32, #tpu.memory_space<vmem>>, vector<72x128xf32>
    %c8_50 = arith.constant 8 : index
    %c0_51 = arith.constant 0 : index
    %100 = vector.load %arg8[%c8_50, %c0_51] : memref<88x128xf32, #tpu.memory_space<vmem>>, vector<72x128xf32>
    %c0_52 = arith.constant 0 : index
    %c0_53 = arith.constant 0 : index
    %101 = vector.load %arg8[%c0_52, %c0_53] : memref<88x128xf32, #tpu.memory_space<vmem>>, vector<72x128xf32>
    %102 = vector.broadcast %18 : vector<72x1xf32> to vector<72x128xf32>
    %103 = arith.addf %101, %102 : vector<72x128xf32>
    %104 = arith.maximumf %99, %100 : vector<72x128xf32>
    %105 = arith.maximumf %104, %103 : vector<72x128xf32>
    %106 = arith.subf %99, %105 : vector<72x128xf32>
    %107 = math.exp %106 : vector<72x128xf32>
    %108 = arith.subf %100, %105 : vector<72x128xf32>
    %109 = math.exp %108 : vector<72x128xf32>
    %110 = arith.addf %107, %109 : vector<72x128xf32>
    %111 = arith.subf %103, %105 : vector<72x128xf32>
    %112 = math.exp %111 : vector<72x128xf32>
    %113 = arith.addf %110, %112 : vector<72x128xf32>
    %114 = math.log %113 : vector<72x128xf32>
    %115 = arith.addf %105, %114 : vector<72x128xf32>
    %116 = arith.addf %98, %115 : vector<72x128xf32>
    %cst_54 = arith.constant -1.000000e+30 : f32
    %117 = vector.broadcast %cst_54 : f32 to vector<72x128xf32>
    %118 = arith.maximumf %116, %117 : vector<72x128xf32>
    %c16_55 = arith.constant 16 : index
    %c0_56 = arith.constant 0 : index
    %119 = vector.load %arg8[%c16_55, %c0_56] : memref<88x128xf32, #tpu.memory_space<vmem>>, vector<72x128xf32>
    tpu.vector_store %arg8[%c16_55, %c0_56], %118 {strides = array<i32>} : memref<88x128xf32, #tpu.memory_space<vmem>>, vector<72x128xf32>,
    %c8_i32_57 = arith.constant 8 : i32
    %120 = arith.muli %arg1, %c8_i32_57 : i32
    %c4_i32 = arith.constant 4 : i32
    %121 = arith.addi %120, %c4_i32 : i32
    %c0_58 = arith.constant 0 : index
    %c512 = arith.constant 512 : index
    %122 = vector.load %arg9[%c0_58, %c512] : memref<72x1024xf32, #tpu.memory_space<vmem>>, vector<72x128xf32>
    %c16_59 = arith.constant 16 : index
    %c0_60 = arith.constant 0 : index
    %123 = vector.load %arg8[%c16_59, %c0_60] : memref<88x128xf32, #tpu.memory_space<vmem>>, vector<72x128xf32>
    %c8_61 = arith.constant 8 : index
    %c0_62 = arith.constant 0 : index
    %124 = vector.load %arg8[%c8_61, %c0_62] : memref<88x128xf32, #tpu.memory_space<vmem>>, vector<72x128xf32>
    %c0_63 = arith.constant 0 : index
    %c0_64 = arith.constant 0 : index
    %125 = vector.load %arg8[%c0_63, %c0_64] : memref<88x128xf32, #tpu.memory_space<vmem>>, vector<72x128xf32>
    %126 = vector.broadcast %18 : vector<72x1xf32> to vector<72x128xf32>
    %127 = arith.addf %125, %126 : vector<72x128xf32>
    %128 = arith.maximumf %123, %124 : vector<72x128xf32>
    %129 = arith.maximumf %128, %127 : vector<72x128xf32>
    %130 = arith.subf %123, %129 : vector<72x128xf32>
    %131 = math.exp %130 : vector<72x128xf32>
    %132 = arith.subf %124, %129 : vector<72x128xf32>
    %133 = math.exp %132 : vector<72x128xf32>
    %134 = arith.addf %131, %133 : vector<72x128xf32>
    %135 = arith.subf %127, %129 : vector<72x128xf32>
    %136 = math.exp %135 : vector<72x128xf32>
    %137 = arith.addf %134, %136 : vector<72x128xf32>
    %138 = math.log %137 : vector<72x128xf32>
    %139 = arith.addf %129, %138 : vector<72x128xf32>
    %140 = arith.addf %122, %139 : vector<72x128xf32>
    %cst_65 = arith.constant -1.000000e+30 : f32
    %141 = vector.broadcast %cst_65 : f32 to vector<72x128xf32>
    %142 = arith.maximumf %140, %141 : vector<72x128xf32>
    %c12_i32 = arith.constant 12 : i32
    %143 = arith.cmpi slt, %121, %c12_i32 : i32
    %144 = arith.select %143, %142, %123 : vector<72x128xf32>
    %c16_66 = arith.constant 16 : index
    %c0_67 = arith.constant 0 : index
    %145 = vector.load %arg8[%c16_66, %c0_67] : memref<88x128xf32, #tpu.memory_space<vmem>>, vector<72x128xf32>
    tpu.vector_store %arg8[%c16_66, %c0_67], %144 {strides = array<i32>} : memref<88x128xf32, #tpu.memory_space<vmem>>, vector<72x128xf32>,
    %c8_i32_68 = arith.constant 8 : i32
    %146 = arith.muli %arg1, %c8_i32_68 : i32
    %c5_i32 = arith.constant 5 : i32
    %147 = arith.addi %146, %c5_i32 : i32
    %c0_69 = arith.constant 0 : index
    %c640 = arith.constant 640 : index
    %148 = vector.load %arg9[%c0_69, %c640] : memref<72x1024xf32, #tpu.memory_space<vmem>>, vector<72x128xf32>
    %c16_70 = arith.constant 16 : index
    %c0_71 = arith.constant 0 : index
    %149 = vector.load %arg8[%c16_70, %c0_71] : memref<88x128xf32, #tpu.memory_space<vmem>>, vector<72x128xf32>
    %c8_72 = arith.constant 8 : index
    %c0_73 = arith.constant 0 : index
    %150 = vector.load %arg8[%c8_72, %c0_73] : memref<88x128xf32, #tpu.memory_space<vmem>>, vector<72x128xf32>
    %c0_74 = arith.constant 0 : index
    %c0_75 = arith.constant 0 : index
    %151 = vector.load %arg8[%c0_74, %c0_75] : memref<88x128xf32, #tpu.memory_space<vmem>>, vector<72x128xf32>
    %152 = vector.broadcast %18 : vector<72x1xf32> to vector<72x128xf32>
    %153 = arith.addf %151, %152 : vector<72x128xf32>
    %154 = arith.maximumf %149, %150 : vector<72x128xf32>
    %155 = arith.maximumf %154, %153 : vector<72x128xf32>
    %156 = arith.subf %149, %155 : vector<72x128xf32>
    %157 = math.exp %156 : vector<72x128xf32>
    %158 = arith.subf %150, %155 : vector<72x128xf32>
    %159 = math.exp %158 : vector<72x128xf32>
    %160 = arith.addf %157, %159 : vector<72x128xf32>
    %161 = arith.subf %153, %155 : vector<72x128xf32>
    %162 = math.exp %161 : vector<72x128xf32>
    %163 = arith.addf %160, %162 : vector<72x128xf32>
    %164 = math.log %163 : vector<72x128xf32>
    %165 = arith.addf %155, %164 : vector<72x128xf32>
    %166 = arith.addf %148, %165 : vector<72x128xf32>
    %cst_76 = arith.constant -1.000000e+30 : f32
    %167 = vector.broadcast %cst_76 : f32 to vector<72x128xf32>
    %168 = arith.maximumf %166, %167 : vector<72x128xf32>
    %c12_i32_77 = arith.constant 12 : i32
    %169 = arith.cmpi slt, %147, %c12_i32_77 : i32
    %170 = arith.select %169, %168, %149 : vector<72x128xf32>
    %c16_78 = arith.constant 16 : index
    %c0_79 = arith.constant 0 : index
    %171 = vector.load %arg8[%c16_78, %c0_79] : memref<88x128xf32, #tpu.memory_space<vmem>>, vector<72x128xf32>
    tpu.vector_store %arg8[%c16_78, %c0_79], %170 {strides = array<i32>} : memref<88x128xf32, #tpu.memory_space<vmem>>, vector<72x128xf32>,
    %c8_i32_80 = arith.constant 8 : i32
    %172 = arith.muli %arg1, %c8_i32_80 : i32
    %c6_i32 = arith.constant 6 : i32
    %173 = arith.addi %172, %c6_i32 : i32
    %c0_81 = arith.constant 0 : index
    %c768 = arith.constant 768 : index
    %174 = vector.load %arg9[%c0_81, %c768] : memref<72x1024xf32, #tpu.memory_space<vmem>>, vector<72x128xf32>
    %c16_82 = arith.constant 16 : index
    %c0_83 = arith.constant 0 : index
    %175 = vector.load %arg8[%c16_82, %c0_83] : memref<88x128xf32, #tpu.memory_space<vmem>>, vector<72x128xf32>
    %c8_84 = arith.constant 8 : index
    %c0_85 = arith.constant 0 : index
    %176 = vector.load %arg8[%c8_84, %c0_85] : memref<88x128xf32, #tpu.memory_space<vmem>>, vector<72x128xf32>
    %c0_86 = arith.constant 0 : index
    %c0_87 = arith.constant 0 : index
    %177 = vector.load %arg8[%c0_86, %c0_87] : memref<88x128xf32, #tpu.memory_space<vmem>>, vector<72x128xf32>
    %178 = vector.broadcast %18 : vector<72x1xf32> to vector<72x128xf32>
    %179 = arith.addf %177, %178 : vector<72x128xf32>
    %180 = arith.maximumf %175, %176 : vector<72x128xf32>
    %181 = arith.maximumf %180, %179 : vector<72x128xf32>
    %182 = arith.subf %175, %181 : vector<72x128xf32>
    %183 = math.exp %182 : vector<72x128xf32>
    %184 = arith.subf %176, %181 : vector<72x128xf32>
    %185 = math.exp %184 : vector<72x128xf32>
    %186 = arith.addf %183, %185 : vector<72x128xf32>
    %187 = arith.subf %179, %181 : vector<72x128xf32>
    %188 = math.exp %187 : vector<72x128xf32>
    %189 = arith.addf %186, %188 : vector<72x128xf32>
    %190 = math.log %189 : vector<72x128xf32>
    %191 = arith.addf %181, %190 : vector<72x128xf32>
    %192 = arith.addf %174, %191 : vector<72x128xf32>
    %cst_88 = arith.constant -1.000000e+30 : f32
    %193 = vector.broadcast %cst_88 : f32 to vector<72x128xf32>
    %194 = arith.maximumf %192, %193 : vector<72x128xf32>
    %c12_i32_89 = arith.constant 12 : i32
    %195 = arith.cmpi slt, %173, %c12_i32_89 : i32
    %196 = arith.select %195, %194, %175 : vector<72x128xf32>
    %c16_90 = arith.constant 16 : index
    %c0_91 = arith.constant 0 : index
    %197 = vector.load %arg8[%c16_90, %c0_91] : memref<88x128xf32, #tpu.memory_space<vmem>>, vector<72x128xf32>
    tpu.vector_store %arg8[%c16_90, %c0_91], %196 {strides = array<i32>} : memref<88x128xf32, #tpu.memory_space<vmem>>, vector<72x128xf32>,
    %c8_i32_92 = arith.constant 8 : i32
    %198 = arith.muli %arg1, %c8_i32_92 : i32
    %c7_i32 = arith.constant 7 : i32
    %199 = arith.addi %198, %c7_i32 : i32
    %c0_93 = arith.constant 0 : index
    %c896 = arith.constant 896 : index
    %200 = vector.load %arg9[%c0_93, %c896] : memref<72x1024xf32, #tpu.memory_space<vmem>>, vector<72x128xf32>
    %c16_94 = arith.constant 16 : index
    %c0_95 = arith.constant 0 : index
    %201 = vector.load %arg8[%c16_94, %c0_95] : memref<88x128xf32, #tpu.memory_space<vmem>>, vector<72x128xf32>
    %c8_96 = arith.constant 8 : index
    %c0_97 = arith.constant 0 : index
    %202 = vector.load %arg8[%c8_96, %c0_97] : memref<88x128xf32, #tpu.memory_space<vmem>>, vector<72x128xf32>
    %c0_98 = arith.constant 0 : index
    %c0_99 = arith.constant 0 : index
    %203 = vector.load %arg8[%c0_98, %c0_99] : memref<88x128xf32, #tpu.memory_space<vmem>>, vector<72x128xf32>
    %204 = vector.broadcast %18 : vector<72x1xf32> to vector<72x128xf32>
    %205 = arith.addf %203, %204 : vector<72x128xf32>
    %206 = arith.maximumf %201, %202 : vector<72x128xf32>
    %207 = arith.maximumf %206, %205 : vector<72x128xf32>
    %208 = arith.subf %201, %207 : vector<72x128xf32>
    %209 = math.exp %208 : vector<72x128xf32>
    %210 = arith.subf %202, %207 : vector<72x128xf32>
    %211 = math.exp %210 : vector<72x128xf32>
    %212 = arith.addf %209, %211 : vector<72x128xf32>
    %213 = arith.subf %205, %207 : vector<72x128xf32>
    %214 = math.exp %213 : vector<72x128xf32>
    %215 = arith.addf %212, %214 : vector<72x128xf32>
    %216 = math.log %215 : vector<72x128xf32>
    %217 = arith.addf %207, %216 : vector<72x128xf32>
    %218 = arith.addf %200, %217 : vector<72x128xf32>
    %cst_100 = arith.constant -1.000000e+30 : f32
    %219 = vector.broadcast %cst_100 : f32 to vector<72x128xf32>
    %220 = arith.maximumf %218, %219 : vector<72x128xf32>
    %c12_i32_101 = arith.constant 12 : i32
    %221 = arith.cmpi slt, %199, %c12_i32_101 : i32
    %222 = arith.select %221, %220, %201 : vector<72x128xf32>
    %c16_102 = arith.constant 16 : index
    %c0_103 = arith.constant 0 : index
    %223 = vector.load %arg8[%c16_102, %c0_103] : memref<88x128xf32, #tpu.memory_space<vmem>>, vector<72x128xf32>
    tpu.vector_store %arg8[%c16_102, %c0_103], %222 {strides = array<i32>} : memref<88x128xf32, #tpu.memory_space<vmem>>, vector<72x128xf32>,
    %c1_i32 = arith.constant 1 : i32
    %224 = arith.cmpi eq, %arg1, %c1_i32 : i32
    %225 = arith.extui %224 : i1 to i32
    %c0_i32_104 = arith.constant 0 : i32
    %226 = arith.cmpi ne, %225, %c0_i32_104 : i32
    scf.if %226 {
      %c16_105 = arith.constant 16 : index
      %c0_106 = arith.constant 0 : index
      %227 = vector.load %arg8[%c16_105, %c0_106] : memref<88x128xf32, #tpu.memory_space<vmem>>, vector<72x128xf32>
      %228 = vector.shape_cast %227 : vector<72x128xf32> to vector<9x8x128xf32>
      %c0_107 = arith.constant 0 : index
      %c0_108 = arith.constant 0 : index
      %c33 = arith.constant 33 : index
      %229 = vector.load %arg3[%c0_107, %c0_108, %c33] : memref<1x72x37xf32, #tpu.memory_space<vmem>>, vector<1x72x1xf32>
      %230 = vector.shape_cast %229 : vector<1x72x1xf32> to vector<72x1xf32>
      %231 = vector.shape_cast %230 : vector<72x1xf32> to vector<9x8x1xf32>
      %c0_109 = arith.constant 0 : index
      %c0_110 = arith.constant 0 : index
      %c34 = arith.constant 34 : index
      %232 = vector.load %arg3[%c0_109, %c0_110, %c34] : memref<1x72x37xf32, #tpu.memory_space<vmem>>, vector<1x72x1xf32>
      %233 = vector.shape_cast %232 : vector<1x72x1xf32> to vector<72x1xf32>
      %234 = vector.shape_cast %233 : vector<72x1xf32> to vector<9x8x1xf32>
      %235 = vector.broadcast %231 : vector<9x8x1xf32> to vector<9x8x128xf32>
      %236 = arith.mulf %228, %235 : vector<9x8x128xf32>
      %cst_111 = arith.constant dense<0.000000e+00> : vector<8x128xf32>
      %237 = vector.multi_reduction <add>, %236, %cst_111 [0] : vector<9x8x128xf32> to vector<8x128xf32>
      %238 = vector.broadcast %234 : vector<9x8x1xf32> to vector<9x8x128xf32>
      %239 = arith.mulf %228, %238 : vector<9x8x128xf32>
      %cst_112 = arith.constant dense<0.000000e+00> : vector<8x128xf32>
      %240 = vector.multi_reduction <add>, %239, %cst_112 [0] : vector<9x8x128xf32> to vector<8x128xf32>
      %241 = arith.maximumf %237, %240 : vector<8x128xf32>
      %242 = arith.subf %237, %241 : vector<8x128xf32>
      %243 = math.exp %242 : vector<8x128xf32>
      %244 = arith.subf %240, %241 : vector<8x128xf32>
      %245 = math.exp %244 : vector<8x128xf32>
      %246 = arith.addf %243, %245 : vector<8x128xf32>
      %247 = math.log %246 : vector<8x128xf32>
      %248 = arith.addf %241, %247 : vector<8x128xf32>
      %c0_113 = arith.constant 0 : index
      %c0_114 = arith.constant 0 : index
      %c35 = arith.constant 35 : index
      %249 = vector.load %arg3[%c0_113, %c0_114, %c35] : memref<1x72x37xf32, #tpu.memory_space<vmem>>, vector<1x8x1xf32>
      %250 = vector.shape_cast %249 : vector<1x8x1xf32> to vector<8x1xf32>
      %cst_115 = arith.constant -1.000000e+20 : f32
      %251 = vector.broadcast %cst_115 : f32 to vector<8x128xf32>
      %252 = arith.cmpf olt, %248, %251 : vector<8x128xf32>
      %cst_116 = arith.constant 0.000000e+00 : f32
      %253 = vector.broadcast %cst_116 : f32 to vector<8x128xf32>
      %254 = arith.subf %253, %248 : vector<8x128xf32>
      %cst_117 = arith.constant 0.000000e+00 : f32
      %255 = vector.broadcast %cst_117 : f32 to vector<8x128xf32>
      %256 = arith.select %252, %255, %254 : vector<8x128xi1>, vector<8x128xf32>
      %257 = vector.broadcast %250 : vector<8x1xf32> to vector<8x128xf32>
      %258 = arith.mulf %256, %257 : vector<8x128xf32>
      %c0_118 = arith.constant 0 : index
      %c0_119 = arith.constant 0 : index
      %c0_120 = arith.constant 0 : index
      %259 = vector.load %arg6[%c0_118, %c0_119, %c0_120] : memref<1x8x128xf32, #tpu.memory_space<vmem>>, vector<1x8x128xf32>
      %260 = vector.shape_cast %259 : vector<1x8x128xf32> to vector<8x128xf32>
      %261 = vector.shape_cast %258 : vector<8x128xf32> to vector<1x8x128xf32>
      tpu.vector_store %arg6[%c0_118, %c0_119, %c0_120], %261 {strides = array<i32>} : memref<1x8x128xf32, #tpu.memory_space<vmem>>, vector<1x8x128xf32>,
      %c0_121 = arith.constant 0 : index
      %c0_122 = arith.constant 0 : index
      %c0_123 = arith.constant 0 : index
      %262 = vector.load %arg4[%c0_121, %c0_122, %c0_123] : memref<1x16x128xf32, #tpu.memory_space<vmem>>, vector<1x16x128xf32>
      %263 = vector.shape_cast %262 : vector<1x16x128xf32> to vector<16x128xf32>
      %c0_124 = arith.constant 0 : index
      %c0_125 = arith.constant 0 : index
      %c0_126 = arith.constant 0 : index
      %264 = vector.load %arg5[%c0_124, %c0_125, %c0_126] : memref<1x8x16xf32, #tpu.memory_space<vmem>>, vector<1x8x16xf32>
      %265 = vector.shape_cast %264 : vector<1x8x16xf32> to vector<8x16xf32>
      %cst_127 = arith.constant 0.000000e+00 : f32
      %266 = vector.broadcast %cst_127 : f32 to vector<8x128xf32>
      %267 = vector.extract_strided_slice %265 {offsets = [0, 0], sizes = [8, 1], strides = [1, 1]} : vector<8x16xf32> to vector<8x1xf32>
      %268 = vector.extract_strided_slice %263 {offsets = [0, 0], sizes = [1, 128], strides = [1, 1]} : vector<16x128xf32> to vector<1x128xf32>
      %269 = vector.broadcast %267 : vector<8x1xf32> to vector<8x128xf32>
      %270 = vector.broadcast %268 : vector<1x128xf32> to vector<8x128xf32>
      %271 = arith.subf %269, %270 : vector<8x128xf32>
      %272 = math.absf %271 : vector<8x128xf32>
      %273 = arith.addf %266, %272 : vector<8x128xf32>
      %274 = vector.extract_strided_slice %265 {offsets = [0, 1], sizes = [8, 1], strides = [1, 1]} : vector<8x16xf32> to vector<8x1xf32>
      %275 = vector.extract_strided_slice %263 {offsets = [1, 0], sizes = [1, 128], strides = [1, 1]} : vector<16x128xf32> to vector<1x128xf32>
      %276 = vector.broadcast %274 : vector<8x1xf32> to vector<8x128xf32>
      %277 = vector.broadcast %275 : vector<1x128xf32> to vector<8x128xf32>
      %278 = arith.subf %276, %277 : vector<8x128xf32>
      %279 = math.absf %278 : vector<8x128xf32>
      %280 = arith.addf %273, %279 : vector<8x128xf32>
      %281 = vector.extract_strided_slice %265 {offsets = [0, 2], sizes = [8, 1], strides = [1, 1]} : vector<8x16xf32> to vector<8x1xf32>
      %282 = vector.extract_strided_slice %263 {offsets = [2, 0], sizes = [1, 128], strides = [1, 1]} : vector<16x128xf32> to vector<1x128xf32>
      %283 = vector.broadcast %281 : vector<8x1xf32> to vector<8x128xf32>
      %284 = vector.broadcast %282 : vector<1x128xf32> to vector<8x128xf32>
      %285 = arith.subf %283, %284 : vector<8x128xf32>
      %286 = math.absf %285 : vector<8x128xf32>
      %287 = arith.addf %280, %286 : vector<8x128xf32>
      %288 = vector.extract_strided_slice %265 {offsets = [0, 3], sizes = [8, 1], strides = [1, 1]} : vector<8x16xf32> to vector<8x1xf32>
      %289 = vector.extract_strided_slice %263 {offsets = [3, 0], sizes = [1, 128], strides = [1, 1]} : vector<16x128xf32> to vector<1x128xf32>
      %290 = vector.broadcast %288 : vector<8x1xf32> to vector<8x128xf32>
      %291 = vector.broadcast %289 : vector<1x128xf32> to vector<8x128xf32>
      %292 = arith.subf %290, %291 : vector<8x128xf32>
      %293 = math.absf %292 : vector<8x128xf32>
      %294 = arith.addf %287, %293 : vector<8x128xf32>
      %295 = vector.extract_strided_slice %265 {offsets = [0, 4], sizes = [8, 1], strides = [1, 1]} : vector<8x16xf32> to vector<8x1xf32>
      %296 = vector.extract_strided_slice %263 {offsets = [4, 0], sizes = [1, 128], strides = [1, 1]} : vector<16x128xf32> to vector<1x128xf32>
      %297 = vector.broadcast %295 : vector<8x1xf32> to vector<8x128xf32>
      %298 = vector.broadcast %296 : vector<1x128xf32> to vector<8x128xf32>
      %299 = arith.subf %297, %298 : vector<8x128xf32>
      %300 = math.absf %299 : vector<8x128xf32>
      %301 = arith.addf %294, %300 : vector<8x128xf32>
      %302 = vector.extract_strided_slice %265 {offsets = [0, 5], sizes = [8, 1], strides = [1, 1]} : vector<8x16xf32> to vector<8x1xf32>
      %303 = vector.extract_strided_slice %263 {offsets = [5, 0], sizes = [1, 128], strides = [1, 1]} : vector<16x128xf32> to vector<1x128xf32>
      %304 = vector.broadcast %302 : vector<8x1xf32> to vector<8x128xf32>
      %305 = vector.broadcast %303 : vector<1x128xf32> to vector<8x128xf32>
      %306 = arith.subf %304, %305 : vector<8x128xf32>
      %307 = math.absf %306 : vector<8x128xf32>
      %308 = arith.addf %301, %307 : vector<8x128xf32>
      %309 = vector.extract_strided_slice %265 {offsets = [0, 6], sizes = [8, 1], strides = [1, 1]} : vector<8x16xf32> to vector<8x1xf32>
      %310 = vector.extract_strided_slice %263 {offsets = [6, 0], sizes = [1, 128], strides = [1, 1]} : vector<16x128xf32> to vector<1x128xf32>
      %311 = vector.broadcast %309 : vector<8x1xf32> to vector<8x128xf32>
      %312 = vector.broadcast %310 : vector<1x128xf32> to vector<8x128xf32>
      %313 = arith.subf %311, %312 : vector<8x128xf32>
      %314 = math.absf %313 : vector<8x128xf32>
      %315 = arith.addf %308, %314 : vector<8x128xf32>
      %316 = vector.extract_strided_slice %265 {offsets = [0, 7], sizes = [8, 1], strides = [1, 1]} : vector<8x16xf32> to vector<8x1xf32>
      %317 = vector.extract_strided_slice %263 {offsets = [7, 0], sizes = [1, 128], strides = [1, 1]} : vector<16x128xf32> to vector<1x128xf32>
      %318 = vector.broadcast %316 : vector<8x1xf32> to vector<8x128xf32>
      %319 = vector.broadcast %317 : vector<1x128xf32> to vector<8x128xf32>
      %320 = arith.subf %318, %319 : vector<8x128xf32>
      %321 = math.absf %320 : vector<8x128xf32>
      %322 = arith.addf %315, %321 : vector<8x128xf32>
      %323 = vector.extract_strided_slice %265 {offsets = [0, 8], sizes = [8, 1], strides = [1, 1]} : vector<8x16xf32> to vector<8x1xf32>
      %324 = vector.extract_strided_slice %263 {offsets = [8, 0], sizes = [1, 128], strides = [1, 1]} : vector<16x128xf32> to vector<1x128xf32>
      %325 = vector.broadcast %323 : vector<8x1xf32> to vector<8x128xf32>
      %326 = vector.broadcast %324 : vector<1x128xf32> to vector<8x128xf32>
      %327 = arith.subf %325, %326 : vector<8x128xf32>
      %328 = math.absf %327 : vector<8x128xf32>
      %329 = arith.addf %322, %328 : vector<8x128xf32>
      %330 = vector.extract_strided_slice %265 {offsets = [0, 9], sizes = [8, 1], strides = [1, 1]} : vector<8x16xf32> to vector<8x1xf32>
      %331 = vector.extract_strided_slice %263 {offsets = [9, 0], sizes = [1, 128], strides = [1, 1]} : vector<16x128xf32> to vector<1x128xf32>
      %332 = vector.broadcast %330 : vector<8x1xf32> to vector<8x128xf32>
      %333 = vector.broadcast %331 : vector<1x128xf32> to vector<8x128xf32>
      %334 = arith.subf %332, %333 : vector<8x128xf32>
      %335 = math.absf %334 : vector<8x128xf32>
      %336 = arith.addf %329, %335 : vector<8x128xf32>
      %337 = vector.extract_strided_slice %265 {offsets = [0, 10], sizes = [8, 1], strides = [1, 1]} : vector<8x16xf32> to vector<8x1xf32>
      %338 = vector.extract_strided_slice %263 {offsets = [10, 0], sizes = [1, 128], strides = [1, 1]} : vector<16x128xf32> to vector<1x128xf32>
      %339 = vector.broadcast %337 : vector<8x1xf32> to vector<8x128xf32>
      %340 = vector.broadcast %338 : vector<1x128xf32> to vector<8x128xf32>
      %341 = arith.subf %339, %340 : vector<8x128xf32>
      %342 = math.absf %341 : vector<8x128xf32>
      %343 = arith.addf %336, %342 : vector<8x128xf32>
      %344 = vector.extract_strided_slice %265 {offsets = [0, 11], sizes = [8, 1], strides = [1, 1]} : vector<8x16xf32> to vector<8x1xf32>
      %345 = vector.extract_strided_slice %263 {offsets = [11, 0], sizes = [1, 128], strides = [1, 1]} : vector<16x128xf32> to vector<1x128xf32>
      %346 = vector.broadcast %344 : vector<8x1xf32> to vector<8x128xf32>
      %347 = vector.broadcast %345 : vector<1x128xf32> to vector<8x128xf32>
      %348 = arith.subf %346, %347 : vector<8x128xf32>
      %349 = math.absf %348 : vector<8x128xf32>
      %350 = arith.addf %343, %349 : vector<8x128xf32>
      %351 = vector.extract_strided_slice %265 {offsets = [0, 12], sizes = [8, 1], strides = [1, 1]} : vector<8x16xf32> to vector<8x1xf32>
      %352 = vector.extract_strided_slice %263 {offsets = [12, 0], sizes = [1, 128], strides = [1, 1]} : vector<16x128xf32> to vector<1x128xf32>
      %353 = vector.broadcast %351 : vector<8x1xf32> to vector<8x128xf32>
      %354 = vector.broadcast %352 : vector<1x128xf32> to vector<8x128xf32>
      %355 = arith.subf %353, %354 : vector<8x128xf32>
      %356 = math.absf %355 : vector<8x128xf32>
      %357 = arith.addf %350, %356 : vector<8x128xf32>
      %358 = vector.extract_strided_slice %265 {offsets = [0, 13], sizes = [8, 1], strides = [1, 1]} : vector<8x16xf32> to vector<8x1xf32>
      %359 = vector.extract_strided_slice %263 {offsets = [13, 0], sizes = [1, 128], strides = [1, 1]} : vector<16x128xf32> to vector<1x128xf32>
      %360 = vector.broadcast %358 : vector<8x1xf32> to vector<8x128xf32>
      %361 = vector.broadcast %359 : vector<1x128xf32> to vector<8x128xf32>
      %362 = arith.subf %360, %361 : vector<8x128xf32>
      %363 = math.absf %362 : vector<8x128xf32>
      %364 = arith.addf %357, %363 : vector<8x128xf32>
      %365 = vector.extract_strided_slice %265 {offsets = [0, 14], sizes = [8, 1], strides = [1, 1]} : vector<8x16xf32> to vector<8x1xf32>
      %366 = vector.extract_strided_slice %263 {offsets = [14, 0], sizes = [1, 128], strides = [1, 1]} : vector<16x128xf32> to vector<1x128xf32>
      %367 = vector.broadcast %365 : vector<8x1xf32> to vector<8x128xf32>
      %368 = vector.broadcast %366 : vector<1x128xf32> to vector<8x128xf32>
      %369 = arith.subf %367, %368 : vector<8x128xf32>
      %370 = math.absf %369 : vector<8x128xf32>
      %371 = arith.addf %364, %370 : vector<8x128xf32>
      %372 = vector.extract_strided_slice %265 {offsets = [0, 15], sizes = [8, 1], strides = [1, 1]} : vector<8x16xf32> to vector<8x1xf32>
      %373 = vector.extract_strided_slice %263 {offsets = [15, 0], sizes = [1, 128], strides = [1, 1]} : vector<16x128xf32> to vector<1x128xf32>
      %374 = vector.broadcast %372 : vector<8x1xf32> to vector<8x128xf32>
      %375 = vector.broadcast %373 : vector<1x128xf32> to vector<8x128xf32>
      %376 = arith.subf %374, %375 : vector<8x128xf32>
      %377 = math.absf %376 : vector<8x128xf32>
      %378 = arith.addf %371, %377 : vector<8x128xf32>
      %c0_128 = arith.constant 0 : index
      %c0_129 = arith.constant 0 : index
      %c0_130 = arith.constant 0 : index
      %379 = vector.load %arg7[%c0_128, %c0_129, %c0_130] : memref<1x8x128xf32, #tpu.memory_space<vmem>>, vector<1x8x128xf32>
      %380 = vector.shape_cast %379 : vector<1x8x128xf32> to vector<8x128xf32>
      %381 = vector.shape_cast %378 : vector<8x128xf32> to vector<1x8x128xf32>
      tpu.vector_store %arg7[%c0_128, %c0_129, %c0_130], %381 {strides = array<i32>} : memref<1x8x128xf32, #tpu.memory_space<vmem>>, vector<1x8x128xf32>,
    } else {
    }
    return
  }
  func.func @transform_0(%arg0: i32, %arg1: i32) -> (i32, i32, i32, i32) {
    %c0_i32 = arith.constant 0 : i32
    %c0_i32_0 = arith.constant 0 : i32
    %c0_i32_1 = arith.constant 0 : i32
    return %arg0, %arg1, %c0_i32, %c0_i32_0 : i32, i32, i32, i32
  }
  func.func @transform_1(%arg0: i32, %arg1: i32) -> (i32, i32, i32) {
    %c0_i32 = arith.constant 0 : i32
    %c0_i32_0 = arith.constant 0 : i32
    %c0_i32_1 = arith.constant 0 : i32
    return %arg0, %c0_i32, %c0_i32_0 : i32, i32, i32
  }
  func.func @transform_2(%arg0: i32, %arg1: i32) -> (i32, i32, i32) {
    %c0_i32 = arith.constant 0 : i32
    %c0_i32_0 = arith.constant 0 : i32
    %c0_i32_1 = arith.constant 0 : i32
    return %arg0, %c0_i32, %c0_i32_0 : i32, i32, i32
  }
  func.func @transform_3(%arg0: i32, %arg1: i32) -> (i32, i32, i32) {
    %c0_i32 = arith.constant 0 : i32
    %c0_i32_0 = arith.constant 0 : i32
    %c0_i32_1 = arith.constant 0 : i32
    return %arg0, %c0_i32, %c0_i32_0 : i32, i32, i32
  }
  func.func @transform_4(%arg0: i32, %arg1: i32) -> (i32, i32, i32) {
    %c0_i32 = arith.constant 0 : i32
    %c0_i32_0 = arith.constant 0 : i32
    %c0_i32_1 = arith.constant 0 : i32
    return %arg0, %c0_i32, %c0_i32_0 : i32, i32, i32
  }
  func.func @transform_5(%arg0: i32, %arg1: i32) -> (i32, i32, i32) {
    %c0_i32 = arith.constant 0 : i32
    %c0_i32_0 = arith.constant 0 : i32
    %c0_i32_1 = arith.constant 0 : i32
    return %arg0, %c0_i32, %c0_i32_0 : i32, i32, i32
  }
}

</mosaic_0001>

<llo_original>
// kernel: eq.3
$region0: #{eq.3}
  %s0 = inlined_call_operand.vmem [shape: s32[2,9,8], index: 0, kind: input, shape index: {}]
  %s1 = inlined_call_operand.vmem [shape: s32[2,72], index: 1, kind: output, shape index: {}]
  $region1: #{eq.3} parent=0
    #allocation0 [shape = 'u8[4096]{0}', space=vmem, size = 0x1000, scoped, tag = 'scoped mem for output reshape']
    %s2 = smov 3
    %v3 = vld [vmem:[%s0] ss:$16 sm:%s2]
    %vm4 = vcmask 64512
    %5 = vst.msk [vmem:[#allocation0] sm:$0x3] %vm4, %v3
    %s6 = scalar_lea.vmem %s0, 8
    %s7 = smov 3
    %v8 = vld [vmem:[%s6] ss:$16 sm:%s7]
    %9 = vrot.lane.b32.xlu0 %v8, 64
    %v10 = vpop.permute.xlu0 %9
    %vm11 = vcmask 589312
    %12 = vst.msk [vmem:[#allocation0] sm:$0x3] %vm11, %v10
    %s13 = scalar_lea.vmem %s0, 7
    %s14 = smov 3
    %v15 = vld [vmem:[%s13] ss:$16 sm:%s14]
    %16 = vrot.lane.b32.xlu0 %v15, 56
    %v17 = vpop.permute.xlu0 %16
    %vm18 = vcmask 523712
    %19 = vst.msk [vmem:[#allocation0] sm:$0x3] %vm18, %v17
    %s20 = scalar_lea.vmem %s0, 6
    %s21 = smov 3
    %v22 = vld [vmem:[%s20] ss:$16 sm:%s21]
    %23 = vrot.lane.b32.xlu0 %v22, 48
    %v24 = vpop.permute.xlu0 %23
    %vm25 = vcmask 458112
    %26 = vst.msk [vmem:[#allocation0] sm:$0x3] %vm25, %v24
    %s27 = scalar_lea.vmem %s0, 5
    %s28 = smov 3
    %v29 = vld [vmem:[%s27] ss:$16 sm:%s28]
    %30 = vrot.lane.b32.xlu0 %v29, 40
    %v31 = vpop.permute.xlu0 %30
    %vm32 = vcmask 392512
    %33 = vst.msk [vmem:[#allocation0] sm:$0x3] %vm32, %v31
    %s34 = scalar_lea.vmem %s0, 4
    %s35 = smov 3
    %v36 = vld [vmem:[%s34] ss:$16 sm:%s35]
    %37 = vrot.lane.b32.xlu0 %v36, 32
    %v38 = vpop.permute.xlu0 %37
    %vm39 = vcmask 326912
    %40 = vst.msk [vmem:[#allocation0] sm:$0x3] %vm39, %v38
    %s41 = scalar_lea.vmem %s0, 3
    %s42 = smov 3
    %v43 = vld [vmem:[%s41] ss:$16 sm:%s42]
    %44 = vrot.lane.b32.xlu0 %v43, 24
    %v45 = vpop.permute.xlu0 %44
    %vm46 = vcmask 261312
    %47 = vst.msk [vmem:[#allocation0] sm:$0x3] %vm46, %v45
    %s48 = scalar_lea.vmem %s0, 2
    %s49 = smov 3
    %v50 = vld [vmem:[%s48] ss:$16 sm:%s49]
    %51 = vrot.lane.b32.xlu0 %v50, 16
    %v52 = vpop.permute.xlu0 %51
    %vm53 = vcmask 195712
    %54 = vst.msk [vmem:[#allocation0] sm:$0x3] %vm53, %v52
    %s55 = scalar_lea.vmem %s0, 1
    %s56 = smov 3
    %v57 = vld [vmem:[%s55] ss:$16 sm:%s56]
    %58 = vrot.lane.b32.xlu0 %v57, 8
    %v59 = vpop.permute.xlu0 %58
    %vm60 = vcmask 130112
    %61 = vst.msk [vmem:[#allocation0] sm:$0x3] %vm60, %v59
    %s63 = sshllo.u32 0, 2
    %v65 = vld [vmem:[#allocation0] sm:%s63]
    %s66 = sshllo.u32 0, 2
    %67 = vst [vmem:[%s1] sm:%s66] %v65

// kernel: tile.9
$region0: #{tile.9}
  %s0 = inlined_call_operand.vmem [shape: s32[9,8], index: 0, kind: input, shape index: {}]
  %s1 = inlined_call_operand.vmem [shape: s32[72], index: 1, kind: output, shape index: {}]
  $region1: #{tile.9} parent=0
    #allocation0 [shape = 'u8[4096]{0}', space=vmem, size = 0x1000, scoped, tag = 'scoped mem for output reshape']
    %v2 = vld [vmem:[%s0] sm:$0x1]
    %vm3 = vcmask 64512
    %4 = vst.msk [vmem:[#allocation0] sm:$0x1] %vm3, %v2
    %s5 = scalar_lea.vmem %s0, 8
    %v6 = vld [vmem:[%s5] sm:$0x1]
    %7 = vrot.lane.b32.xlu0 %v6, 64
    %v8 = vpop.permute.xlu0 %7
    %vm9 = vcmask 589312
    %10 = vst.msk [vmem:[#allocation0] sm:$0x1] %vm9, %v8
    %s11 = scalar_lea.vmem %s0, 7
    %v12 = vld [vmem:[%s11] sm:$0x1]
    %13 = vrot.lane.b32.xlu0 %v12, 56
    %v14 = vpop.permute.xlu0 %13
    %vm15 = vcmask 523712
    %16 = vst.msk [vmem:[#allocation0] sm:$0x1] %vm15, %v14
    %s17 = scalar_lea.vmem %s0, 6
    %v18 = vld [vmem:[%s17] sm:$0x1]
    %19 = vrot.lane.b32.xlu0 %v18, 48
    %v20 = vpop.permute.xlu0 %19
    %vm21 = vcmask 458112
    %22 = vst.msk [vmem:[#allocation0] sm:$0x1] %vm21, %v20
    %s23 = scalar_lea.vmem %s0, 5
    %v24 = vld [vmem:[%s23] sm:$0x1]
    %25 = vrot.lane.b32.xlu0 %v24, 40
    %v26 = vpop.permute.xlu0 %25
    %vm27 = vcmask 392512
    %28 = vst.msk [vmem:[#allocation0] sm:$0x1] %vm27, %v26
    %s29 = scalar_lea.vmem %s0, 4
    %v30 = vld [vmem:[%s29] sm:$0x1]
    %31 = vrot.lane.b32.xlu0 %v30, 32
    %v32 = vpop.permute.xlu0 %31
    %vm33 = vcmask 326912
    %34 = vst.msk [vmem:[#allocation0] sm:$0x1] %vm33, %v32
    %s35 = scalar_lea.vmem %s0, 3
    %v36 = vld [vmem:[%s35] sm:$0x1]
    %37 = vrot.lane.b32.xlu0 %v36, 24
    %v38 = vpop.permute.xlu0 %37
    %vm39 = vcmask 261312
    %40 = vst.msk [vmem:[#allocation0] sm:$0x1] %vm39, %v38
    %s41 = scalar_lea.vmem %s0, 2
    %v42 = vld [vmem:[%s41] sm:$0x1]
    %43 = vrot.lane.b32.xlu0 %v42, 16
    %v44 = vpop.permute.xlu0 %43
    %vm45 = vcmask 195712
    %46 = vst.msk [vmem:[#allocation0] sm:$0x1] %vm45, %v44
    %s47 = scalar_lea.vmem %s0, 1
    %v48 = vld [vmem:[%s47] sm:$0x1]
    %49 = vrot.lane.b32.xlu0 %v48, 8
    %v50 = vpop.permute.xlu0 %49
    %vm51 = vcmask 130112
    %52 = vst.msk [vmem:[#allocation0] sm:$0x1] %vm51, %v50
    %s54 = sshllo.u32 0, 1
    %v56 = vld [vmem:[#allocation0] sm:%s54]
    %s57 = sshllo.u32 0, 1
    %58 = vst [vmem:[%s1] sm:%s57] %v56

// kernel: _device_costs.1
$region0: #{_device_costs.1}
  #allocation0 [shape = 'u32[]', space=smem, size = 0x4, offset = 0x4, fixed_abs, tag = 'smem constant byte address 0x4 - core index']
  #allocation1 [shape = 'u32[144,128]{1,0:T(1,128)}', space=vmem, size = 0x12000, scoped, tag = 'internal scratch']
  #allocation2 [shape = 'f32[88,128]{1,0:T(8,128)}', space=vmem, size = 0xb000, scoped, tag = 'scratch operand']
  #allocation3 [shape = 'f32[72,1024]{1,0:T(8,128)}', space=vmem, size = 0x48000, scoped, tag = 'scratch operand']
  %s0 = inlined_call_operand.vmem [shape: f32[2,16,128,32], index: 0, kind: input, shape index: {}]
  %s1 = inlined_call_operand.vmem [shape: f32[2,72,37], index: 1, kind: input, shape index: {}]
  %s2 = inlined_call_operand.vmem [shape: f32[2,16,128], index: 2, kind: input, shape index: {}]
  %s3 = inlined_call_operand.vmem [shape: f32[2,8,16], index: 3, kind: input, shape index: {}]
  %s4 = inlined_call_operand.vmem [shape: f32[2,8,128], index: 4, kind: output, shape index: {0}]
  %s5 = inlined_call_operand.vmem [shape: f32[2,8,128], index: 5, kind: output, shape index: {1}]
  %6 = xla_tuple %s4, %s5
  %s7 = sld [smem:[#allocation0]]
  $region65: #{_device_costs.1} parent=0
    _
  %s9 = ssub.s32 1, %s7
  %s10 = scalar_select 0, %s9, %s7
  loop: start=0, step=1, limit=6
  $region2: #{_device_costs.1} parent=0 // loop_pre_header
    _
  $region3: #{_device_costs.1} parent=0 // loop_header
    %s12 = sphi 0, %s16
    %p13 = scmp.ge.s32.totalorder %s12, 6
    %s19 = sphi 0, %s31
    %s20 = sphi 0, %s27
    %s21 = sphi 0, %s19
    %s22 = sphi 0, %s20
    %s23 = sphi 0, %s21
    %s24 = sphi 0, %s22
    %s36 = sphi 0, %s38
    %s39 = sphi 0, %s36
    %s40 = sphi 0, %s39
    %s56 = sphi 0, %s40
    %s62 = sphi 0, %s64
    %s65 = sphi 0, %s62
    %s66 = sphi 0, %s65
    %s82 = sphi 0, %s66
    %s88 = sphi 0, %s90
    %s91 = sphi 0, %s88
    %s92 = sphi 0, %s91
    %s108 = sphi 0, %s92
    %s114 = sphi 0, %s116
    %s117 = sphi 0, %s114
    %s118 = sphi 0, %s117
    %s134 = sphi 0, %s118
    %s140 = sphi 0, %s142
    %s143 = sphi 0, %s140
    %s144 = sphi 0, %s143
    %s160 = sphi 0, %s144
    %s166 = sphi 0, %s168
    %s169 = sphi 0, %s166
    %s170 = sphi 0, %s169
    %s186 = sphi 0, %s170
  $region4: #{_device_costs.1} parent=0 // loop_header_branch
    %15 = sbr.rel (%p13) target = $region8
  $region5: #{_device_costs.1} parent=0 // loop_body
    %s17 = ssub.s32 %s12, 1
    %s18 = ssub.s32 %s12, 2
    %s25 = sadd.s32 1, %s20
    %p26 = scmp.ge.s32.totalorder %s25, 2
    %s27 = scalar_select %p26, 0, %s25
    %s28 = sadd.s32 1, %s19
    %s29 = scalar_select %p26, %s28, %s19
    %p30 = scmp.ge.s32.totalorder %s29, 2
    %s31 = scalar_select %p30, 0, %s29
    %s32 = ssub.s32 %s19, %s31
    %s33 = ssub.s32 %s20, %s27
    %s34 = sor.u32 %s32, %s33
    %p35 = scmp.eq.s32.totalorder %s34, 0
    %s37 = sadd.s32 %s36, 1
    %s38 = scalar_select %p35, %s36, %s37
    %p41 = pneg %p35
    %p42 = scmp.eq.s32.totalorder %s12, 3
    %p43 = por %p41, %p42
    %p44 = scmp.ne.s32.totalorder %s36, %s39
    %p45 = scmp.eq.s32.totalorder %s12, 0
    %p46 = por %p44, %p45
    %p47 = scmp.ne.s32.totalorder %s36, %s39
    %p48 = scmp.eq.s32.totalorder %s17, 3
    %p49 = por %p47, %p48
    %p50 = scmp.ne.s32.totalorder %s39, %s40
    %p51 = scmp.eq.s32.totalorder %s17, 0
    %p52 = por %p50, %p51
    %p53 = scmp.ne.s32.totalorder %s39, %s40
    %p54 = scmp.eq.s32.totalorder %s18, 3
    %p55 = por %p53, %p54
    %p57 = scmp.ne.s32.totalorder %s40, %s56
    %p58 = scmp.eq.s32.totalorder %s18, 0
    %p59 = por %p57, %p58
    %s60 = ssub.s32 %s19, %s31
    %p61 = scmp.eq.s32.totalorder %s60, 0
    %s63 = sadd.s32 %s62, 1
    %s64 = scalar_select %p61, %s62, %s63
    %p67 = pneg %p61
    %p68 = scmp.eq.s32.totalorder %s12, 3
    %p69 = por %p67, %p68
    %p70 = scmp.ne.s32.totalorder %s62, %s65
    %p71 = scmp.eq.s32.totalorder %s12, 0
    %p72 = por %p70, %p71
    %p73 = scmp.ne.s32.totalorder %s62, %s65
    %p74 = scmp.eq.s32.totalorder %s17, 3
    %p75 = por %p73, %p74
    %p76 = scmp.ne.s32.totalorder %s65, %s66
    %p77 = scmp.eq.s32.totalorder %s17, 0
    %p78 = por %p76, %p77
    %p79 = scmp.ne.s32.totalorder %s65, %s66
    %p80 = scmp.eq.s32.totalorder %s18, 3
    %p81 = por %p79, %p80
    %p83 = scmp.ne.s32.totalorder %s66, %s82
    %p84 = scmp.eq.s32.totalorder %s18, 0
    %p85 = por %p83, %p84
    %s86 = ssub.s32 %s19, %s31
    %p87 = scmp.eq.s32.totalorder %s86, 0
    %s89 = sadd.s32 %s88, 1
    %s90 = scalar_select %p87, %s88, %s89
    %p93 = pneg %p87
    %p94 = scmp.eq.s32.totalorder %s12, 3
    %p95 = por %p93, %p94
    %p96 = scmp.ne.s32.totalorder %s88, %s91
    %p97 = scmp.eq.s32.totalorder %s12, 0
    %p98 = por %p96, %p97
    %p99 = scmp.ne.s32.totalorder %s88, %s91
    %p100 = scmp.eq.s32.totalorder %s17, 3
    %p101 = por %p99, %p100
    %p102 = scmp.ne.s32.totalorder %s91, %s92
    %p103 = scmp.eq.s32.totalorder %s17, 0
    %p104 = por %p102, %p103
    %p105 = scmp.ne.s32.totalorder %s91, %s92
    %p106 = scmp.eq.s32.totalorder %s18, 3
    %p107 = por %p105, %p106
    %p109 = scmp.ne.s32.totalorder %s92, %s108
    %p110 = scmp.eq.s32.totalorder %s18, 0
    %p111 = por %p109, %p110
    %s112 = ssub.s32 %s19, %s31
    %p113 = scmp.eq.s32.totalorder %s112, 0
    %s115 = sadd.s32 %s114, 1
    %s116 = scalar_select %p113, %s114, %s115
    %p119 = pneg %p113
    %p120 = scmp.eq.s32.totalorder %s12, 3
    %p121 = por %p119, %p120
    %p122 = scmp.ne.s32.totalorder %s114, %s117
    %p123 = scmp.eq.s32.totalorder %s12, 0
    %p124 = por %p122, %p123
    %p125 = scmp.ne.s32.totalorder %s114, %s117
    %p126 = scmp.eq.s32.totalorder %s17, 3
    %p127 = por %p125, %p126
    %p128 = scmp.ne.s32.totalorder %s117, %s118
    %p129 = scmp.eq.s32.totalorder %s17, 0
    %p130 = por %p128, %p129
    %p131 = scmp.ne.s32.totalorder %s117, %s118
    %p132 = scmp.eq.s32.totalorder %s18, 3
    %p133 = por %p131, %p132
    %p135 = scmp.ne.s32.totalorder %s118, %s134
    %p136 = scmp.eq.s32.totalorder %s18, 0
    %p137 = por %p135, %p136
    %s138 = ssub.s32 %s19, %s31
    %p139 = scmp.eq.s32.totalorder %s138, 0
    %s141 = sadd.s32 %s140, 1
    %s142 = scalar_select %p139, %s140, %s141
    %p145 = pneg %p139
    %p146 = scmp.eq.s32.totalorder %s12, 3
    %p147 = por %p145, %p146
    %p148 = scmp.ne.s32.totalorder %s140, %s143
    %p149 = scmp.eq.s32.totalorder %s12, 0
    %p150 = por %p148, %p149
    %p151 = scmp.ne.s32.totalorder %s140, %s143
    %p152 = scmp.eq.s32.totalorder %s17, 3
    %p153 = por %p151, %p152
    %p154 = scmp.ne.s32.totalorder %s143, %s144
    %p155 = scmp.eq.s32.totalorder %s17, 0
    %p156 = por %p154, %p155
    %p157 = scmp.ne.s32.totalorder %s143, %s144
    %p158 = scmp.eq.s32.totalorder %s18, 3
    %p159 = por %p157, %p158
    %p161 = scmp.ne.s32.totalorder %s144, %s160
    %p162 = scmp.eq.s32.totalorder %s18, 0
    %p163 = por %p161, %p162
    %s164 = ssub.s32 %s19, %s31
    %p165 = scmp.eq.s32.totalorder %s164, 0
    %s167 = sadd.s32 %s166, 1
    %s168 = scalar_select %p165, %s166, %s167
    %p171 = pneg %p165
    %p172 = scmp.eq.s32.totalorder %s12, 3
    %p173 = por %p171, %p172
    %p174 = scmp.ne.s32.totalorder %s166, %s169
    %p175 = scmp.eq.s32.totalorder %s12, 0
    %p176 = por %p174, %p175
    %p177 = scmp.ne.s32.totalorder %s166, %s169
    %p178 = scmp.eq.s32.totalorder %s17, 3
    %p179 = por %p177, %p178
    %p180 = scmp.ne.s32.totalorder %s169, %s170
    %p181 = scmp.eq.s32.totalorder %s17, 0
    %p182 = por %p180, %p181
    %p183 = scmp.ne.s32.totalorder %s169, %s170
    %p184 = scmp.eq.s32.totalorder %s18, 3
    %p185 = por %p183, %p184
    %p187 = scmp.ne.s32.totalorder %s170, %s186
    %p188 = scmp.eq.s32.totalorder %s18, 0
    %p189 = por %p187, %p188
    %p190 = scmp.le.s32.totalorder 1, %s12
    %p191 = scmp.lt.s32.totalorder %s12, 5
    %p192 = pnand %p190, %p191
    %p193 = pneg %p192
    // Predicated region
    $region9: #{_device_costs.1} parent=5 // pred_check
      _
    $region10: #{_device_costs.1} parent=5 // pred_check_branch
      %195 = sbr.rel (%p192) target = $region12
    $region11: #{_device_costs.1} parent=5 // pred_region
      %s196 = ssub.s32 %s12, 1
    $region12: #{_device_costs.1} parent=5 // pred_fallthru
      _
    %p197 = scmp.lt.s32.totalorder %s12, 4
    // Predicated region
    $region13: #{_device_costs.1} parent=5 // pred_check
      %p198 = pneg %p197
    $region14: #{_device_costs.1} parent=5 // pred_check_branch
      %200 = sbr.rel (%p198) target = $region16
    $region15: #{_device_costs.1} parent=5 // pred_region
      // Predicated region
      $region17: #{_device_costs.1} parent=15 // pred_check
        %p201 = pneg %p46
      $region18: #{_device_costs.1} parent=15 // pred_check_branch
        %203 = sbr.rel (%p201) target = $region20
      $region19: #{_device_costs.1} parent=15 // pred_region
        %s204 = smul.u32 8, %s20
        %p205 = scmp.lt.s32.totalorder %s19, 1
        %s206 = scalar_select %p205, %s19, 1
        %p207 = scmp.lt.s32.totalorder %s204, 15
        %s208 = scalar_select %p207, %s204, 15
        %s209 = smul.addr %s208, 16
        %s210 = smul.addr %s206, 256
        %s211 = sadd.s32 %s209, %s210
        %s212 = smul.addr %s211, 8
        %s213 = scalar_lea.vmem %s0, %s212
        %s214 = smul.u32 8, %s20
      $region20: #{_device_costs.1} parent=15 // pred_fallthru
        _
      // Predicated region
      $region21: #{_device_costs.1} parent=15 // pred_check
        %p215 = pneg %p72
      $region22: #{_device_costs.1} parent=15 // pred_check_branch
        %217 = sbr.rel (%p215) target = $region24
      $region23: #{_device_costs.1} parent=15 // pred_region
        %p218 = scmp.lt.s32.totalorder %s19, 1
        %s219 = scalar_select %p218, %s19, 1
        %s220 = smul.addr %s219, 9
        %s221 = smul.addr %s220, 8
        %s222 = scalar_lea.vmem %s1, %s221
      $region24: #{_device_costs.1} parent=15 // pred_fallthru
        _
      // Predicated region
      $region25: #{_device_costs.1} parent=15 // pred_check
        %p223 = pneg %p98
      $region26: #{_device_costs.1} parent=15 // pred_check_branch
        %225 = sbr.rel (%p223) target = $region28
      $region27: #{_device_costs.1} parent=15 // pred_region
        %p226 = scmp.lt.s32.totalorder %s19, 1
        %s227 = scalar_select %p226, %s19, 1
        %s228 = smul.addr %s227, 2
        %s229 = smul.addr %s228, 8
        %s230 = scalar_lea.vmem %s2, %s229
      $region28: #{_device_costs.1} parent=15 // pred_fallthru
        _
      // Predicated region
      $region29: #{_device_costs.1} parent=15 // pred_check
        %p231 = pneg %p124
      $region30: #{_device_costs.1} parent=15 // pred_check_branch
        %233 = sbr.rel (%p231) target = $region32
      $region31: #{_device_costs.1} parent=15 // pred_region
        %p234 = scmp.lt.s32.totalorder %s19, 1
        %s235 = scalar_select %p234, %s19, 1
        %s236 = smul.addr %s235, 8
        %s237 = scalar_lea.vmem %s3, %s236
      $region32: #{_device_costs.1} parent=15 // pred_fallthru
        _
    $region16: #{_device_costs.1} parent=5 // pred_fallthru
      _
    %p238 = scmp.le.s32.totalorder 1, %s12
    %p239 = scmp.lt.s32.totalorder %s12, 5
    %p240 = pnand %p238, %p239
    %p241 = pneg %p240
    // Predicated region
    $region33: #{_device_costs.1} parent=5 // pred_check
      _
    $region34: #{_device_costs.1} parent=5 // pred_check_branch
      %243 = sbr.rel (%p240) target = $region36
    $region35: #{_device_costs.1} parent=5 // pred_region
      %s244 = ssub.s32 %s12, 1
      %s245 = smul.u32 8, %s22
      %p246 = scmp.lt.s32.totalorder %s21, 1
      %s247 = scalar_select %p246, %s21, 1
      %p248 = scmp.lt.s32.totalorder %s245, 15
      %s249 = scalar_select %p248, %s245, 15
      %s250 = smul.addr %s249, 16
      %s251 = smul.addr %s247, 256
      %s252 = sadd.s32 %s250, %s251
      %s253 = smul.addr %s252, 8
      %s254 = scalar_lea.vmem %s0, %s253
      %p255 = pneg %p52
      %p256 = pneg %p49
      %p257 = scmp.lt.s32.totalorder %s21, 1
      %s258 = scalar_select %p257, %s21, 1
      %s259 = smul.addr %s258, 9
      %s260 = smul.addr %s259, 8
      %s261 = scalar_lea.vmem %s1, %s260
      %p262 = pneg %p78
      %p263 = pneg %p75
      %p264 = scmp.lt.s32.totalorder %s21, 1
      %s265 = scalar_select %p264, %s21, 1
      %s266 = smul.addr %s265, 2
      %s267 = smul.addr %s266, 8
      %s268 = scalar_lea.vmem %s2, %s267
      %p269 = pneg %p104
      %p270 = pneg %p101
      %p271 = scmp.lt.s32.totalorder %s21, 1
      %s272 = scalar_select %p271, %s21, 1
      %s273 = smul.addr %s272, 8
      %s274 = scalar_lea.vmem %s3, %s273
      %p275 = pneg %p130
      %p276 = pneg %p127
      %p277 = pneg %p156
      %p278 = pneg %p153
      %p279 = scmp.lt.s32.totalorder %s21, 1
      %s280 = scalar_select %p279, %s21, 1
      %s281 = smul.addr %s280, 8
      %s282 = scalar_lea.vmem %s4, %s281
      %p283 = pneg %p182
      %p284 = pneg %p179
      %p285 = scmp.lt.s32.totalorder %s21, 1
      %s286 = scalar_select %p285, %s21, 1
      %s287 = smul.addr %s286, 8
      %s288 = scalar_lea.vmem %s5, %s287
      %s289 = smul.u32 8, %s22
      %p290 = scmp.lt.s32.totalorder %s21, 1
      %s291 = scalar_select %p290, %s21, 1
      %p292 = scmp.lt.s32.totalorder %s289, 15
      %s293 = scalar_select %p292, %s289, 15
      %s294 = smul.addr %s293, 16
      %s295 = smul.addr %s291, 256
      %s296 = sadd.s32 %s294, %s295
      %s297 = smul.addr %s296, 8
      %s298 = scalar_lea.vmem %s0, %s297
      %s299 = smul.u32 8, %s22
      %p300 = scmp.lt.s32.totalorder %s21, 1
      %s301 = scalar_select %p300, %s21, 1
      %s302 = smul.addr %s301, 9
      %s303 = smul.addr %s302, 8
      %s304 = scalar_lea.vmem %s1, %s303
      %p305 = scmp.lt.s32.totalorder %s21, 1
      %s306 = scalar_select %p305, %s21, 1
      %s307 = smul.addr %s306, 2
      %s308 = smul.addr %s307, 8
      %s309 = scalar_lea.vmem %s2, %s308
      %p310 = scmp.lt.s32.totalorder %s21, 1
      %s311 = scalar_select %p310, %s21, 1
      %s312 = smul.addr %s311, 8
      %s313 = scalar_lea.vmem %s3, %s312
      %p314 = scmp.lt.s32.totalorder %s21, 1
      %s315 = scalar_select %p314, %s21, 1
      %s316 = smul.addr %s315, 8
      %s317 = scalar_lea.vmem %s4, %s316
      %p318 = scmp.lt.s32.totalorder %s21, 1
      %s319 = scalar_select %p318, %s21, 1
      %s320 = smul.addr %s319, 8
      %s321 = scalar_lea.vmem %s5, %s320
      %v322 = vld [vmem:[%s298] sm:$0xff]
      %v323 = vld [vmem:[%s298 + $0x8] sm:$0xff]
      %v324 = vld [vmem:[%s298 + $0x10] sm:$0xff]
      %v325 = vld [vmem:[%s298 + $0x18] sm:$0xff]
      %v326 = vld [vmem:[%s298 + $0x20] sm:$0xff]
      %v327 = vld [vmem:[%s298 + $0x28] sm:$0xff]
      %v328 = vld [vmem:[%s298 + $0x30] sm:$0xff]
      %v329 = vld [vmem:[%s298 + $0x38] sm:$0xff]
      %v330 = vld [vmem:[%s298 + $0x40] sm:$0xff]
      %v331 = vld [vmem:[%s298 + $0x48] sm:$0xff]
      %v332 = vld [vmem:[%s298 + $0x50] sm:$0xff]
      %v333 = vld [vmem:[%s298 + $0x58] sm:$0xff]
      %v334 = vld [vmem:[%s298 + $0x60] sm:$0xff]
      %v335 = vld [vmem:[%s298 + $0x68] sm:$0xff]
      %v336 = vld [vmem:[%s298 + $0x70] sm:$0xff]
      %v337 = vld [vmem:[%s298 + $0x78] sm:$0xff]
      %v338 = vld [vmem:[%s298 + $0x80] sm:$0xff]
      %v339 = vld [vmem:[%s298 + $0x88] sm:$0xff]
      %v340 = vld [vmem:[%s298 + $0x90] sm:$0xff]
      %v341 = vld [vmem:[%s298 + $0x98] sm:$0xff]
      %v342 = vld [vmem:[%s298 + $0xa0] sm:$0xff]
      %v343 = vld [vmem:[%s298 + $0xa8] sm:$0xff]
      %v344 = vld [vmem:[%s298 + $0xb0] sm:$0xff]
      %v345 = vld [vmem:[%s298 + $0xb8] sm:$0xff]
      %v346 = vld [vmem:[%s298 + $0xc0] sm:$0xff]
      %v347 = vld [vmem:[%s298 + $0xc8] sm:$0xff]
      %v348 = vld [vmem:[%s298 + $0xd0] sm:$0xff]
      %v349 = vld [vmem:[%s298 + $0xd8] sm:$0xff]
      %v350 = vld [vmem:[%s298 + $0xe0] sm:$0xff]
      %v351 = vld [vmem:[%s298 + $0xe8] sm:$0xff]
      %v352 = vld [vmem:[%s298 + $0xf0] sm:$0xff]
      %v353 = vld [vmem:[%s298 + $0xf8] sm:$0xff]
      %v354 = vld [vmem:[%s298 + $0x100] sm:$0xff]
      %v355 = vld [vmem:[%s298 + $0x108] sm:$0xff]
      %v356 = vld [vmem:[%s298 + $0x110] sm:$0xff]
      %v357 = vld [vmem:[%s298 + $0x118] sm:$0xff]
      %v358 = vld [vmem:[%s298 + $0x120] sm:$0xff]
      %v359 = vld [vmem:[%s298 + $0x128] sm:$0xff]
      %v360 = vld [vmem:[%s298 + $0x130] sm:$0xff]
      %v361 = vld [vmem:[%s298 + $0x138] sm:$0xff]
      %v362 = vld [vmem:[%s298 + $0x140] sm:$0xff]
      %v363 = vld [vmem:[%s298 + $0x148] sm:$0xff]
      %v364 = vld [vmem:[%s298 + $0x150] sm:$0xff]
      %v365 = vld [vmem:[%s298 + $0x158] sm:$0xff]
      %v366 = vld [vmem:[%s298 + $0x160] sm:$0xff]
      %v367 = vld [vmem:[%s298 + $0x168] sm:$0xff]
      %v368 = vld [vmem:[%s298 + $0x170] sm:$0xff]
      %v369 = vld [vmem:[%s298 + $0x178] sm:$0xff]
      %v370 = vld [vmem:[%s298 + $0x180] sm:$0xff]
      %v371 = vld [vmem:[%s298 + $0x188] sm:$0xff]
      %v372 = vld [vmem:[%s298 + $0x190] sm:$0xff]
      %v373 = vld [vmem:[%s298 + $0x198] sm:$0xff]
      %v374 = vld [vmem:[%s298 + $0x1a0] sm:$0xff]
      %v375 = vld [vmem:[%s298 + $0x1a8] sm:$0xff]
      %v376 = vld [vmem:[%s298 + $0x1b0] sm:$0xff]
      %v377 = vld [vmem:[%s298 + $0x1b8] sm:$0xff]
      %v378 = vld [vmem:[%s298 + $0x1c0] sm:$0xff]
      %v379 = vld [vmem:[%s298 + $0x1c8] sm:$0xff]
      %v380 = vld [vmem:[%s298 + $0x1d0] sm:$0xff]
      %v381 = vld [vmem:[%s298 + $0x1d8] sm:$0xff]
      %v382 = vld [vmem:[%s298 + $0x1e0] sm:$0xff]
      %v383 = vld [vmem:[%s298 + $0x1e8] sm:$0xff]
      %v384 = vld [vmem:[%s298 + $0x1f0] sm:$0xff]
      %v385 = vld [vmem:[%s298 + $0x1f8] sm:$0xff]
      %v386 = vld [vmem:[%s298 + $0x200] sm:$0xff]
      %v387 = vld [vmem:[%s298 + $0x208] sm:$0xff]
      %v388 = vld [vmem:[%s298 + $0x210] sm:$0xff]
      %v389 = vld [vmem:[%s298 + $0x218] sm:$0xff]
      %v390 = vld [vmem:[%s298 + $0x220] sm:$0xff]
      %v391 = vld [vmem:[%s298 + $0x228] sm:$0xff]
      %v392 = vld [vmem:[%s298 + $0x230] sm:$0xff]
      %v393 = vld [vmem:[%s298 + $0x238] sm:$0xff]
      %v394 = vld [vmem:[%s298 + $0x240] sm:$0xff]
      %v395 = vld [vmem:[%s298 + $0x248] sm:$0xff]
      %v396 = vld [vmem:[%s298 + $0x250] sm:$0xff]
      %v397 = vld [vmem:[%s298 + $0x258] sm:$0xff]
      %v398 = vld [vmem:[%s298 + $0x260] sm:$0xff]
      %v399 = vld [vmem:[%s298 + $0x268] sm:$0xff]
      %v400 = vld [vmem:[%s298 + $0x270] sm:$0xff]
      %v401 = vld [vmem:[%s298 + $0x278] sm:$0xff]
      %v402 = vld [vmem:[%s298 + $0x280] sm:$0xff]
      %v403 = vld [vmem:[%s298 + $0x288] sm:$0xff]
      %v404 = vld [vmem:[%s298 + $0x290] sm:$0xff]
      %v405 = vld [vmem:[%s298 + $0x298] sm:$0xff]
      %v406 = vld [vmem:[%s298 + $0x2a0] sm:$0xff]
      %v407 = vld [vmem:[%s298 + $0x2a8] sm:$0xff]
      %v408 = vld [vmem:[%s298 + $0x2b0] sm:$0xff]
      %v409 = vld [vmem:[%s298 + $0x2b8] sm:$0xff]
      %v410 = vld [vmem:[%s298 + $0x2c0] sm:$0xff]
      %v411 = vld [vmem:[%s298 + $0x2c8] sm:$0xff]
      %v412 = vld [vmem:[%s298 + $0x2d0] sm:$0xff]
      %v413 = vld [vmem:[%s298 + $0x2d8] sm:$0xff]
      %v414 = vld [vmem:[%s298 + $0x2e0] sm:$0xff]
      %v415 = vld [vmem:[%s298 + $0x2e8] sm:$0xff]
      %v416 = vld [vmem:[%s298 + $0x2f0] sm:$0xff]
      %v417 = vld [vmem:[%s298 + $0x2f8] sm:$0xff]
      %v418 = vld [vmem:[%s298 + $0x300] sm:$0xff]
      %v419 = vld [vmem:[%s298 + $0x308] sm:$0xff]
      %v420 = vld [vmem:[%s298 + $0x310] sm:$0xff]
      %v421 = vld [vmem:[%s298 + $0x318] sm:$0xff]
      %v422 = vld [vmem:[%s298 + $0x320] sm:$0xff]
      %v423 = vld [vmem:[%s298 + $0x328] sm:$0xff]
      %v424 = vld [vmem:[%s298 + $0x330] sm:$0xff]
      %v425 = vld [vmem:[%s298 + $0x338] sm:$0xff]
      %v426 = vld [vmem:[%s298 + $0x340] sm:$0xff]
      %v427 = vld [vmem:[%s298 + $0x348] sm:$0xff]
      %v428 = vld [vmem:[%s298 + $0x350] sm:$0xff]
      %v429 = vld [vmem:[%s298 + $0x358] sm:$0xff]
      %v430 = vld [vmem:[%s298 + $0x360] sm:$0xff]
      %v431 = vld [vmem:[%s298 + $0x368] sm:$0xff]
      %v432 = vld [vmem:[%s298 + $0x370] sm:$0xff]
      %v433 = vld [vmem:[%s298 + $0x378] sm:$0xff]
      %v434 = vld [vmem:[%s298 + $0x380] sm:$0xff]
      %v435 = vld [vmem:[%s298 + $0x388] sm:$0xff]
      %v436 = vld [vmem:[%s298 + $0x390] sm:$0xff]
      %v437 = vld [vmem:[%s298 + $0x398] sm:$0xff]
      %v438 = vld [vmem:[%s298 + $0x3a0] sm:$0xff]
      %v439 = vld [vmem:[%s298 + $0x3a8] sm:$0xff]
      %v440 = vld [vmem:[%s298 + $0x3b0] sm:$0xff]
      %v441 = vld [vmem:[%s298 + $0x3b8] sm:$0xff]
      %v442 = vld [vmem:[%s298 + $0x3c0] sm:$0xff]
      %v443 = vld [vmem:[%s298 + $0x3c8] sm:$0xff]
      %v444 = vld [vmem:[%s298 + $0x3d0] sm:$0xff]
      %v445 = vld [vmem:[%s298 + $0x3d8] sm:$0xff]
      %v446 = vld [vmem:[%s298 + $0x3e0] sm:$0xff]
      %v447 = vld [vmem:[%s298 + $0x3e8] sm:$0xff]
      %v448 = vld [vmem:[%s298 + $0x3f0] sm:$0xff]
      %v449 = vld [vmem:[%s298 + $0x3f8] sm:$0xff]
      %vm450 = vcmask 261120
      %v451 = vsel %vm450, %v322, -inf
      %452 = vmax.xlane.f32.xlu0 %v451
      %v453 = vpop.xlane.xlu0 %452
      %v454 = vsel %vm450, %v323, -inf
      %455 = vmax.xlane.f32.xlu0 %v454
      %v456 = vpop.xlane.xlu0 %455
      %v457 = vsel %vm450, %v324, -inf
      %458 = vmax.xlane.f32.xlu0 %v457
      %v459 = vpop.xlane.xlu0 %458
      %v460 = vsel %vm450, %v325, -inf
      %461 = vmax.xlane.f32.xlu0 %v460
      %v462 = vpop.xlane.xlu0 %461
      %v463 = vsel %vm450, %v326, -inf
      %464 = vmax.xlane.f32.xlu0 %v463
      %v465 = vpop.xlane.xlu0 %464
      %v466 = vsel %vm450, %v327, -inf
      %467 = vmax.xlane.f32.xlu0 %v466
      %v468 = vpop.xlane.xlu0 %467
      %v469 = vsel %vm450, %v328, -inf
      %470 = vmax.xlane.f32.xlu0 %v469
      %v471 = vpop.xlane.xlu0 %470
      %v472 = vsel %vm450, %v329, -inf
      %473 = vmax.xlane.f32.xlu0 %v472
      %v474 = vpop.xlane.xlu0 %473
      %v475 = vsel %vm450, %v330, -inf
      %476 = vmax.xlane.f32.xlu0 %v475
      %v477 = vpop.xlane.xlu0 %476
      %v478 = vsel %vm450, %v331, -inf
      %479 = vmax.xlane.f32.xlu0 %v478
      %v480 = vpop.xlane.xlu0 %479
      %v481 = vsel %vm450, %v332, -inf
      %482 = vmax.xlane.f32.xlu0 %v481
      %v483 = vpop.xlane.xlu0 %482
      %v484 = vsel %vm450, %v333, -inf
      %485 = vmax.xlane.f32.xlu0 %v484
      %v486 = vpop.xlane.xlu0 %485
      %v487 = vsel %vm450, %v334, -inf
      %488 = vmax.xlane.f32.xlu0 %v487
      %v489 = vpop.xlane.xlu0 %488
      %v490 = vsel %vm450, %v335, -inf
      %491 = vmax.xlane.f32.xlu0 %v490
      %v492 = vpop.xlane.xlu0 %491
      %v493 = vsel %vm450, %v336, -inf
      %494 = vmax.xlane.f32.xlu0 %v493
      %v495 = vpop.xlane.xlu0 %494
      %v496 = vsel %vm450, %v337, -inf
      %497 = vmax.xlane.f32.xlu0 %v496
      %v498 = vpop.xlane.xlu0 %497
      %v499 = vsel %vm450, %v338, -inf
      %500 = vmax.xlane.f32.xlu0 %v499
      %v501 = vpop.xlane.xlu0 %500
      %v502 = vsel %vm450, %v339, -inf
      %503 = vmax.xlane.f32.xlu0 %v502
      %v504 = vpop.xlane.xlu0 %503
      %v505 = vsel %vm450, %v340, -inf
      %506 = vmax.xlane.f32.xlu0 %v505
      %v507 = vpop.xlane.xlu0 %506
      %v508 = vsel %vm450, %v341, -inf
      %509 = vmax.xlane.f32.xlu0 %v508
      %v510 = vpop.xlane.xlu0 %509
      %v511 = vsel %vm450, %v342, -inf
      %512 = vmax.xlane.f32.xlu0 %v511
      %v513 = vpop.xlane.xlu0 %512
      %v514 = vsel %vm450, %v343, -inf
      %515 = vmax.xlane.f32.xlu0 %v514
      %v516 = vpop.xlane.xlu0 %515
      %v517 = vsel %vm450, %v344, -inf
      %518 = vmax.xlane.f32.xlu0 %v517
      %v519 = vpop.xlane.xlu0 %518
      %v520 = vsel %vm450, %v345, -inf
      %521 = vmax.xlane.f32.xlu0 %v520
      %v522 = vpop.xlane.xlu0 %521
      %v523 = vsel %vm450, %v346, -inf
      %524 = vmax.xlane.f32.xlu0 %v523
      %v525 = vpop.xlane.xlu0 %524
      %v526 = vsel %vm450, %v347, -inf
      %527 = vmax.xlane.f32.xlu0 %v526
      %v528 = vpop.xlane.xlu0 %527
      %v529 = vsel %vm450, %v348, -inf
      %530 = vmax.xlane.f32.xlu0 %v529
      %v531 = vpop.xlane.xlu0 %530
      %v532 = vsel %vm450, %v349, -inf
      %533 = vmax.xlane.f32.xlu0 %v532
      %v534 = vpop.xlane.xlu0 %533
      %v535 = vsel %vm450, %v350, -inf
      %536 = vmax.xlane.f32.xlu0 %v535
      %v537 = vpop.xlane.xlu0 %536
      %v538 = vsel %vm450, %v351, -inf
      %539 = vmax.xlane.f32.xlu0 %v538
      %v540 = vpop.xlane.xlu0 %539
      %v541 = vsel %vm450, %v352, -inf
      %542 = vmax.xlane.f32.xlu0 %v541
      %v543 = vpop.xlane.xlu0 %542
      %v544 = vsel %vm450, %v353, -inf
      %545 = vmax.xlane.f32.xlu0 %v544
      %v546 = vpop.xlane.xlu0 %545
      %v547 = vsel %vm450, %v354, -inf
      %548 = vmax.xlane.f32.xlu0 %v547
      %v549 = vpop.xlane.xlu0 %548
      %v550 = vsel %vm450, %v355, -inf
      %551 = vmax.xlane.f32.xlu0 %v550
      %v552 = vpop.xlane.xlu0 %551
      %v553 = vsel %vm450, %v356, -inf
      %554 = vmax.xlane.f32.xlu0 %v553
      %v555 = vpop.xlane.xlu0 %554
      %v556 = vsel %vm450, %v357, -inf
      %557 = vmax.xlane.f32.xlu0 %v556
      %v558 = vpop.xlane.xlu0 %557
      %v559 = vsel %vm450, %v358, -inf
      %560 = vmax.xlane.f32.xlu0 %v559
      %v561 = vpop.xlane.xlu0 %560
      %v562 = vsel %vm450, %v359, -inf
      %563 = vmax.xlane.f32.xlu0 %v562
      %v564 = vpop.xlane.xlu0 %563
      %v565 = vsel %vm450, %v360, -inf
      %566 = vmax.xlane.f32.xlu0 %v565
      %v567 = vpop.xlane.xlu0 %566
      %v568 = vsel %vm450, %v361, -inf
      %569 = vmax.xlane.f32.xlu0 %v568
      %v570 = vpop.xlane.xlu0 %569
      %v571 = vsel %vm450, %v362, -inf
      %572 = vmax.xlane.f32.xlu0 %v571
      %v573 = vpop.xlane.xlu0 %572
      %v574 = vsel %vm450, %v363, -inf
      %575 = vmax.xlane.f32.xlu0 %v574
      %v576 = vpop.xlane.xlu0 %575
      %v577 = vsel %vm450, %v364, -inf
      %578 = vmax.xlane.f32.xlu0 %v577
      %v579 = vpop.xlane.xlu0 %578
      %v580 = vsel %vm450, %v365, -inf
      %581 = vmax.xlane.f32.xlu0 %v580
      %v582 = vpop.xlane.xlu0 %581
      %v583 = vsel %vm450, %v366, -inf
      %584 = vmax.xlane.f32.xlu0 %v583
      %v585 = vpop.xlane.xlu0 %584
      %v586 = vsel %vm450, %v367, -inf
      %587 = vmax.xlane.f32.xlu0 %v586
      %v588 = vpop.xlane.xlu0 %587
      %v589 = vsel %vm450, %v368, -inf
      %590 = vmax.xlane.f32.xlu0 %v589
      %v591 = vpop.xlane.xlu0 %590
      %v592 = vsel %vm450, %v369, -inf
      %593 = vmax.xlane.f32.xlu0 %v592
      %v594 = vpop.xlane.xlu0 %593
      %v595 = vsel %vm450, %v370, -inf
      %596 = vmax.xlane.f32.xlu0 %v595
      %v597 = vpop.xlane.xlu0 %596
      %v598 = vsel %vm450, %v371, -inf
      %599 = vmax.xlane.f32.xlu0 %v598
      %v600 = vpop.xlane.xlu0 %599
      %v601 = vsel %vm450, %v372, -inf
      %602 = vmax.xlane.f32.xlu0 %v601
      %v603 = vpop.xlane.xlu0 %602
      %v604 = vsel %vm450, %v373, -inf
      %605 = vmax.xlane.f32.xlu0 %v604
      %v606 = vpop.xlane.xlu0 %605
      %v607 = vsel %vm450, %v374, -inf
      %608 = vmax.xlane.f32.xlu0 %v607
      %v609 = vpop.xlane.xlu0 %608
      %v610 = vsel %vm450, %v375, -inf
      %611 = vmax.xlane.f32.xlu0 %v610
      %v612 = vpop.xlane.xlu0 %611
      %v613 = vsel %vm450, %v376, -inf
      %614 = vmax.xlane.f32.xlu0 %v613
      %v615 = vpop.xlane.xlu0 %614
      %v616 = vsel %vm450, %v377, -inf
      %617 = vmax.xlane.f32.xlu0 %v616
      %v618 = vpop.xlane.xlu0 %617
      %v619 = vsel %vm450, %v378, -inf
      %620 = vmax.xlane.f32.xlu0 %v619
      %v621 = vpop.xlane.xlu0 %620
      %v622 = vsel %vm450, %v379, -inf
      %623 = vmax.xlane.f32.xlu0 %v622
      %v624 = vpop.xlane.xlu0 %623
      %v625 = vsel %vm450, %v380, -inf
      %626 = vmax.xlane.f32.xlu0 %v625
      %v627 = vpop.xlane.xlu0 %626
      %v628 = vsel %vm450, %v381, -inf
      %629 = vmax.xlane.f32.xlu0 %v628
      %v630 = vpop.xlane.xlu0 %629
      %v631 = vsel %vm450, %v382, -inf
      %632 = vmax.xlane.f32.xlu0 %v631
      %v633 = vpop.xlane.xlu0 %632
      %v634 = vsel %vm450, %v383, -inf
      %635 = vmax.xlane.f32.xlu0 %v634
      %v636 = vpop.xlane.xlu0 %635
      %v637 = vsel %vm450, %v384, -inf
      %638 = vmax.xlane.f32.xlu0 %v637
      %v639 = vpop.xlane.xlu0 %638
      %v640 = vsel %vm450, %v385, -inf
      %641 = vmax.xlane.f32.xlu0 %v640
      %v642 = vpop.xlane.xlu0 %641
      %v643 = vsel %vm450, %v386, -inf
      %644 = vmax.xlane.f32.xlu0 %v643
      %v645 = vpop.xlane.xlu0 %644
      %v646 = vsel %vm450, %v387, -inf
      %647 = vmax.xlane.f32.xlu0 %v646
      %v648 = vpop.xlane.xlu0 %647
      %v649 = vsel %vm450, %v388, -inf
      %650 = vmax.xlane.f32.xlu0 %v649
      %v651 = vpop.xlane.xlu0 %650
      %v652 = vsel %vm450, %v389, -inf
      %653 = vmax.xlane.f32.xlu0 %v652
      %v654 = vpop.xlane.xlu0 %653
      %v655 = vsel %vm450, %v390, -inf
      %656 = vmax.xlane.f32.xlu0 %v655
      %v657 = vpop.xlane.xlu0 %656
      %v658 = vsel %vm450, %v391, -inf
      %659 = vmax.xlane.f32.xlu0 %v658
      %v660 = vpop.xlane.xlu0 %659
      %v661 = vsel %vm450, %v392, -inf
      %662 = vmax.xlane.f32.xlu0 %v661
      %v663 = vpop.xlane.xlu0 %662
      %v664 = vsel %vm450, %v393, -inf
      %665 = vmax.xlane.f32.xlu0 %v664
      %v666 = vpop.xlane.xlu0 %665
      %v667 = vsel %vm450, %v394, -inf
      %668 = vmax.xlane.f32.xlu0 %v667
      %v669 = vpop.xlane.xlu0 %668
      %v670 = vsel %vm450, %v395, -inf
      %671 = vmax.xlane.f32.xlu0 %v670
      %v672 = vpop.xlane.xlu0 %671
      %v673 = vsel %vm450, %v396, -inf
      %674 = vmax.xlane.f32.xlu0 %v673
      %v675 = vpop.xlane.xlu0 %674
      %v676 = vsel %vm450, %v397, -inf
      %677 = vmax.xlane.f32.xlu0 %v676
      %v678 = vpop.xlane.xlu0 %677
      %v679 = vsel %vm450, %v398, -inf
      %680 = vmax.xlane.f32.xlu0 %v679
      %v681 = vpop.xlane.xlu0 %680
      %v682 = vsel %vm450, %v399, -inf
      %683 = vmax.xlane.f32.xlu0 %v682
      %v684 = vpop.xlane.xlu0 %683
      %v685 = vsel %vm450, %v400, -inf
      %686 = vmax.xlane.f32.xlu0 %v685
      %v687 = vpop.xlane.xlu0 %686
      %v688 = vsel %vm450, %v401, -inf
      %689 = vmax.xlane.f32.xlu0 %v688
      %v690 = vpop.xlane.xlu0 %689
      %v691 = vsel %vm450, %v402, -inf
      %692 = vmax.xlane.f32.xlu0 %v691
      %v693 = vpop.xlane.xlu0 %692
      %v694 = vsel %vm450, %v403, -inf
      %695 = vmax.xlane.f32.xlu0 %v694
      %v696 = vpop.xlane.xlu0 %695
      %v697 = vsel %vm450, %v404, -inf
      %698 = vmax.xlane.f32.xlu0 %v697
      %v699 = vpop.xlane.xlu0 %698
      %v700 = vsel %vm450, %v405, -inf
      %701 = vmax.xlane.f32.xlu0 %v700
      %v702 = vpop.xlane.xlu0 %701
      %v703 = vsel %vm450, %v406, -inf
      %704 = vmax.xlane.f32.xlu0 %v703
      %v705 = vpop.xlane.xlu0 %704
      %v706 = vsel %vm450, %v407, -inf
      %707 = vmax.xlane.f32.xlu0 %v706
      %v708 = vpop.xlane.xlu0 %707
      %v709 = vsel %vm450, %v408, -inf
      %710 = vmax.xlane.f32.xlu0 %v709
      %v711 = vpop.xlane.xlu0 %710
      %v712 = vsel %vm450, %v409, -inf
      %713 = vmax.xlane.f32.xlu0 %v712
      %v714 = vpop.xlane.xlu0 %713
      %v715 = vsel %vm450, %v410, -inf
      %716 = vmax.xlane.f32.xlu0 %v715
      %v717 = vpop.xlane.xlu0 %716
      %v718 = vsel %vm450, %v411, -inf
      %719 = vmax.xlane.f32.xlu0 %v718
      %v720 = vpop.xlane.xlu0 %719
      %v721 = vsel %vm450, %v412, -inf
      %722 = vmax.xlane.f32.xlu0 %v721
      %v723 = vpop.xlane.xlu0 %722
      %v724 = vsel %vm450, %v413, -inf
      %725 = vmax.xlane.f32.xlu0 %v724
      %v726 = vpop.xlane.xlu0 %725
      %v727 = vsel %vm450, %v414, -inf
      %728 = vmax.xlane.f32.xlu0 %v727
      %v729 = vpop.xlane.xlu0 %728
      %v730 = vsel %vm450, %v415, -inf
      %731 = vmax.xlane.f32.xlu0 %v730
      %v732 = vpop.xlane.xlu0 %731
      %v733 = vsel %vm450, %v416, -inf
      %734 = vmax.xlane.f32.xlu0 %v733
      %v735 = vpop.xlane.xlu0 %734
      %v736 = vsel %vm450, %v417, -inf
      %737 = vmax.xlane.f32.xlu0 %v736
      %v738 = vpop.xlane.xlu0 %737
      %v739 = vsel %vm450, %v418, -inf
      %740 = vmax.xlane.f32.xlu0 %v739
      %v741 = vpop.xlane.xlu0 %740
      %v742 = vsel %vm450, %v419, -inf
      %743 = vmax.xlane.f32.xlu0 %v742
      %v744 = vpop.xlane.xlu0 %743
      %v745 = vsel %vm450, %v420, -inf
      %746 = vmax.xlane.f32.xlu0 %v745
      %v747 = vpop.xlane.xlu0 %746
      %v748 = vsel %vm450, %v421, -inf
      %749 = vmax.xlane.f32.xlu0 %v748
      %v750 = vpop.xlane.xlu0 %749
      %v751 = vsel %vm450, %v422, -inf
      %752 = vmax.xlane.f32.xlu0 %v751
      %v753 = vpop.xlane.xlu0 %752
      %v754 = vsel %vm450, %v423, -inf
      %755 = vmax.xlane.f32.xlu0 %v754
      %v756 = vpop.xlane.xlu0 %755
      %v757 = vsel %vm450, %v424, -inf
      %758 = vmax.xlane.f32.xlu0 %v757
      %v759 = vpop.xlane.xlu0 %758
      %v760 = vsel %vm450, %v425, -inf
      %761 = vmax.xlane.f32.xlu0 %v760
      %v762 = vpop.xlane.xlu0 %761
      %v763 = vsel %vm450, %v426, -inf
      %764 = vmax.xlane.f32.xlu0 %v763
      %v765 = vpop.xlane.xlu0 %764
      %v766 = vsel %vm450, %v427, -inf
      %767 = vmax.xlane.f32.xlu0 %v766
      %v768 = vpop.xlane.xlu0 %767
      %v769 = vsel %vm450, %v428, -inf
      %770 = vmax.xlane.f32.xlu0 %v769
      %v771 = vpop.xlane.xlu0 %770
      %v772 = vsel %vm450, %v429, -inf
      %773 = vmax.xlane.f32.xlu0 %v772
      %v774 = vpop.xlane.xlu0 %773
      %v775 = vsel %vm450, %v430, -inf
      %776 = vmax.xlane.f32.xlu0 %v775
      %v777 = vpop.xlane.xlu0 %776
      %v778 = vsel %vm450, %v431, -inf
      %779 = vmax.xlane.f32.xlu0 %v778
      %v780 = vpop.xlane.xlu0 %779
      %v781 = vsel %vm450, %v432, -inf
      %782 = vmax.xlane.f32.xlu0 %v781
      %v783 = vpop.xlane.xlu0 %782
      %v784 = vsel %vm450, %v433, -inf
      %785 = vmax.xlane.f32.xlu0 %v784
      %v786 = vpop.xlane.xlu0 %785
      %v787 = vsel %vm450, %v434, -inf
      %788 = vmax.xlane.f32.xlu0 %v787
      %v789 = vpop.xlane.xlu0 %788
      %v790 = vsel %vm450, %v435, -inf
      %791 = vmax.xlane.f32.xlu0 %v790
      %v792 = vpop.xlane.xlu0 %791
      %v793 = vsel %vm450, %v436, -inf
      %794 = vmax.xlane.f32.xlu0 %v793
      %v795 = vpop.xlane.xlu0 %794
      %v796 = vsel %vm450, %v437, -inf
      %797 = vmax.xlane.f32.xlu0 %v796
      %v798 = vpop.xlane.xlu0 %797
      %v799 = vsel %vm450, %v438, -inf
      %800 = vmax.xlane.f32.xlu0 %v799
      %v801 = vpop.xlane.xlu0 %800
      %v802 = vsel %vm450, %v439, -inf
      %803 = vmax.xlane.f32.xlu0 %v802
      %v804 = vpop.xlane.xlu0 %803
      %v805 = vsel %vm450, %v440, -inf
      %806 = vmax.xlane.f32.xlu0 %v805
      %v807 = vpop.xlane.xlu0 %806
      %v808 = vsel %vm450, %v441, -inf
      %809 = vmax.xlane.f32.xlu0 %v808
      %v810 = vpop.xlane.xlu0 %809
      %v811 = vsel %vm450, %v442, -inf
      %812 = vmax.xlane.f32.xlu0 %v811
      %v813 = vpop.xlane.xlu0 %812
      %v814 = vsel %vm450, %v443, -inf
      %815 = vmax.xlane.f32.xlu0 %v814
      %v816 = vpop.xlane.xlu0 %815
      %v817 = vsel %vm450, %v444, -inf
      %818 = vmax.xlane.f32.xlu0 %v817
      %v819 = vpop.xlane.xlu0 %818
      %v820 = vsel %vm450, %v445, -inf
      %821 = vmax.xlane.f32.xlu0 %v820
      %v822 = vpop.xlane.xlu0 %821
      %v823 = vsel %vm450, %v446, -inf
      %824 = vmax.xlane.f32.xlu0 %v823
      %v825 = vpop.xlane.xlu0 %824
      %v826 = vsel %vm450, %v447, -inf
      %827 = vmax.xlane.f32.xlu0 %v826
      %v828 = vpop.xlane.xlu0 %827
      %v829 = vsel %vm450, %v448, -inf
      %830 = vmax.xlane.f32.xlu0 %v829
      %v831 = vpop.xlane.xlu0 %830
      %v832 = vsel %vm450, %v449, -inf
      %833 = vmax.xlane.f32.xlu0 %v832
      %v834 = vpop.xlane.xlu0 %833
      %v835 = vsub.f32 %v322, %v453
      %v836 = vsub.f32 %v323, %v456
      %v837 = vsub.f32 %v324, %v459
      %v838 = vsub.f32 %v325, %v462
      %v839 = vsub.f32 %v326, %v465
      %v840 = vsub.f32 %v327, %v468
      %v841 = vsub.f32 %v328, %v471
      %v842 = vsub.f32 %v329, %v474
      %v843 = vsub.f32 %v330, %v477
      %v844 = vsub.f32 %v331, %v480
      %v845 = vsub.f32 %v332, %v483
      %v846 = vsub.f32 %v333, %v486
      %v847 = vsub.f32 %v334, %v489
      %v848 = vsub.f32 %v335, %v492
      %v849 = vsub.f32 %v336, %v495
      %v850 = vsub.f32 %v337, %v498
      %v851 = vsub.f32 %v338, %v501
      %v852 = vsub.f32 %v339, %v504
      %v853 = vsub.f32 %v340, %v507
      %v854 = vsub.f32 %v341, %v510
      %v855 = vsub.f32 %v342, %v513
      %v856 = vsub.f32 %v343, %v516
      %v857 = vsub.f32 %v344, %v519
      %v858 = vsub.f32 %v345, %v522
      %v859 = vsub.f32 %v346, %v525
      %v860 = vsub.f32 %v347, %v528
      %v861 = vsub.f32 %v348, %v531
      %v862 = vsub.f32 %v349, %v534
      %v863 = vsub.f32 %v350, %v537
      %v864 = vsub.f32 %v351, %v540
      %v865 = vsub.f32 %v352, %v543
      %v866 = vsub.f32 %v353, %v546
      %v867 = vsub.f32 %v354, %v549
      %v868 = vsub.f32 %v355, %v552
      %v869 = vsub.f32 %v356, %v555
      %v870 = vsub.f32 %v357, %v558
      %v871 = vsub.f32 %v358, %v561
      %v872 = vsub.f32 %v359, %v564
      %v873 = vsub.f32 %v360, %v567
      %v874 = vsub.f32 %v361, %v570
      %v875 = vsub.f32 %v362, %v573
      %v876 = vsub.f32 %v363, %v576
      %v877 = vsub.f32 %v364, %v579
      %v878 = vsub.f32 %v365, %v582
      %v879 = vsub.f32 %v366, %v585
      %v880 = vsub.f32 %v367, %v588
      %v881 = vsub.f32 %v368, %v591
      %v882 = vsub.f32 %v369, %v594
      %v883 = vsub.f32 %v370, %v597
      %v884 = vsub.f32 %v371, %v600
      %v885 = vsub.f32 %v372, %v603
      %v886 = vsub.f32 %v373, %v606
      %v887 = vsub.f32 %v374, %v609
      %v888 = vsub.f32 %v375, %v612
      %v889 = vsub.f32 %v376, %v615
      %v890 = vsub.f32 %v377, %v618
      %v891 = vsub.f32 %v378, %v621
      %v892 = vsub.f32 %v379, %v624
      %v893 = vsub.f32 %v380, %v627
      %v894 = vsub.f32 %v381, %v630
      %v895 = vsub.f32 %v382, %v633
      %v896 = vsub.f32 %v383, %v636
      %v897 = vsub.f32 %v384, %v639
      %v898 = vsub.f32 %v385, %v642
      %v899 = vsub.f32 %v386, %v645
      %v900 = vsub.f32 %v387, %v648
      %v901 = vsub.f32 %v388, %v651
      %v902 = vsub.f32 %v389, %v654
      %v903 = vsub.f32 %v390, %v657
      %v904 = vsub.f32 %v391, %v660
      %v905 = vsub.f32 %v392, %v663
      %v906 = vsub.f32 %v393, %v666
      %v907 = vsub.f32 %v394, %v669
      %v908 = vsub.f32 %v395, %v672
      %v909 = vsub.f32 %v396, %v675
      %v910 = vsub.f32 %v397, %v678
      %v911 = vsub.f32 %v398, %v681
      %v912 = vsub.f32 %v399, %v684
      %v913 = vsub.f32 %v400, %v687
      %v914 = vsub.f32 %v401, %v690
      %v915 = vsub.f32 %v402, %v693
      %v916 = vsub.f32 %v403, %v696
      %v917 = vsub.f32 %v404, %v699
      %v918 = vsub.f32 %v405, %v702
      %v919 = vsub.f32 %v406, %v705
      %v920 = vsub.f32 %v407, %v708
      %v921 = vsub.f32 %v408, %v711
      %v922 = vsub.f32 %v409, %v714
      %v923 = vsub.f32 %v410, %v717
      %v924 = vsub.f32 %v411, %v720
      %v925 = vsub.f32 %v412, %v723
      %v926 = vsub.f32 %v413, %v726
      %v927 = vsub.f32 %v414, %v729
      %v928 = vsub.f32 %v415, %v732
      %v929 = vsub.f32 %v416, %v735
      %v930 = vsub.f32 %v417, %v738
      %v931 = vsub.f32 %v418, %v741
      %v932 = vsub.f32 %v419, %v744
      %v933 = vsub.f32 %v420, %v747
      %v934 = vsub.f32 %v421, %v750
      %v935 = vsub.f32 %v422, %v753
      %v936 = vsub.f32 %v423, %v756
      %v937 = vsub.f32 %v424, %v759
      %v938 = vsub.f32 %v425, %v762
      %v939 = vsub.f32 %v426, %v765
      %v940 = vsub.f32 %v427, %v768
      %v941 = vsub.f32 %v428, %v771
      %v942 = vsub.f32 %v429, %v774
      %v943 = vsub.f32 %v430, %v777
      %v944 = vsub.f32 %v431, %v780
      %v945 = vsub.f32 %v432, %v783
      %v946 = vsub.f32 %v433, %v786
      %v947 = vsub.f32 %v434, %v789
      %v948 = vsub.f32 %v435, %v792
      %v949 = vsub.f32 %v436, %v795
      %v950 = vsub.f32 %v437, %v798
      %v951 = vsub.f32 %v438, %v801
      %v952 = vsub.f32 %v439, %v804
      %v953 = vsub.f32 %v440, %v807
      %v954 = vsub.f32 %v441, %v810
      %v955 = vsub.f32 %v442, %v813
      %v956 = vsub.f32 %v443, %v816
      %v957 = vsub.f32 %v444, %v819
      %v958 = vsub.f32 %v445, %v822
      %v959 = vsub.f32 %v446, %v825
      %v960 = vsub.f32 %v447, %v828
      %v961 = vsub.f32 %v448, %v831
      %v962 = vsub.f32 %v449, %v834
      %v963 = vmul.f32 %v835, 1.442695
      %v964 = vpow.pop %v963
      %v965 = vmul.f32 %v836, 1.442695
      %v966 = vpow.pop %v965
      %v967 = vmul.f32 %v837, 1.442695
      %v968 = vpow.pop %v967
      %v969 = vmul.f32 %v838, 1.442695
      %v970 = vpow.pop %v969
      %v971 = vmul.f32 %v839, 1.442695
      %v972 = vpow.pop %v971
      %v973 = vmul.f32 %v840, 1.442695
      %v974 = vpow.pop %v973
      %v975 = vmul.f32 %v841, 1.442695
      %v976 = vpow.pop %v975
      %v977 = vmul.f32 %v842, 1.442695
      %v978 = vpow.pop %v977
      %v979 = vmul.f32 %v843, 1.442695
      %v980 = vpow.pop %v979
      %v981 = vmul.f32 %v844, 1.442695
      %v982 = vpow.pop %v981
      %v983 = vmul.f32 %v845, 1.442695
      %v984 = vpow.pop %v983
      %v985 = vmul.f32 %v846, 1.442695
      %v986 = vpow.pop %v985
      %v987 = vmul.f32 %v847, 1.442695
      %v988 = vpow.pop %v987
      %v989 = vmul.f32 %v848, 1.442695
      %v990 = vpow.pop %v989
      %v991 = vmul.f32 %v849, 1.442695
      %v992 = vpow.pop %v991
      %v993 = vmul.f32 %v850, 1.442695
      %v994 = vpow.pop %v993
      %v995 = vmul.f32 %v851, 1.442695
      %v996 = vpow.pop %v995
      %v997 = vmul.f32 %v852, 1.442695
      %v998 = vpow.pop %v997
      %v999 = vmul.f32 %v853, 1.442695
      %v1000 = vpow.pop %v999
      %v1001 = vmul.f32 %v854, 1.442695
      %v1002 = vpow.pop %v1001
      %v1003 = vmul.f32 %v855, 1.442695
      %v1004 = vpow.pop %v1003
      %v1005 = vmul.f32 %v856, 1.442695
      %v1006 = vpow.pop %v1005
      %v1007 = vmul.f32 %v857, 1.442695
      %v1008 = vpow.pop %v1007
      %v1009 = vmul.f32 %v858, 1.442695
      %v1010 = vpow.pop %v1009
      %v1011 = vmul.f32 %v859, 1.442695
      %v1012 = vpow.pop %v1011
      %v1013 = vmul.f32 %v860, 1.442695
      %v1014 = vpow.pop %v1013
      %v1015 = vmul.f32 %v861, 1.442695
      %v1016 = vpow.pop %v1015
      %v1017 = vmul.f32 %v862, 1.442695
      %v1018 = vpow.pop %v1017
      %v1019 = vmul.f32 %v863, 1.442695
      %v1020 = vpow.pop %v1019
      %v1021 = vmul.f32 %v864, 1.442695
      %v1022 = vpow.pop %v1021
      %v1023 = vmul.f32 %v865, 1.442695
      %v1024 = vpow.pop %v1023
      %v1025 = vmul.f32 %v866, 1.442695
      %v1026 = vpow.pop %v1025
      %v1027 = vmul.f32 %v867, 1.442695
      %v1028 = vpow.pop %v1027
      %v1029 = vmul.f32 %v868, 1.442695
      %v1030 = vpow.pop %v1029
      %v1031 = vmul.f32 %v869, 1.442695
      %v1032 = vpow.pop %v1031
      %v1033 = vmul.f32 %v870, 1.442695
      %v1034 = vpow.pop %v1033
      %v1035 = vmul.f32 %v871, 1.442695
      %v1036 = vpow.pop %v1035
      %v1037 = vmul.f32 %v872, 1.442695
      %v1038 = vpow.pop %v1037
      %v1039 = vmul.f32 %v873, 1.442695
      %v1040 = vpow.pop %v1039
      %v1041 = vmul.f32 %v874, 1.442695
      %v1042 = vpow.pop %v1041
      %v1043 = vmul.f32 %v875, 1.442695
      %v1044 = vpow.pop %v1043
      %v1045 = vmul.f32 %v876, 1.442695
      %v1046 = vpow.pop %v1045
      %v1047 = vmul.f32 %v877, 1.442695
      %v1048 = vpow.pop %v1047
      %v1049 = vmul.f32 %v878, 1.442695
      %v1050 = vpow.pop %v1049
      %v1051 = vmul.f32 %v879, 1.442695
      %v1052 = vpow.pop %v1051
      %v1053 = vmul.f32 %v880, 1.442695
      %v1054 = vpow.pop %v1053
      %v1055 = vmul.f32 %v881, 1.442695
      %v1056 = vpow.pop %v1055
      %v1057 = vmul.f32 %v882, 1.442695
      %v1058 = vpow.pop %v1057
      %v1059 = vmul.f32 %v883, 1.442695
      %v1060 = vpow.pop %v1059
      %v1061 = vmul.f32 %v884, 1.442695
      %v1062 = vpow.pop %v1061
      %v1063 = vmul.f32 %v885, 1.442695
      %v1064 = vpow.pop %v1063
      %v1065 = vmul.f32 %v886, 1.442695
      %v1066 = vpow.pop %v1065
      %v1067 = vmul.f32 %v887, 1.442695
      %v1068 = vpow.pop %v1067
      %v1069 = vmul.f32 %v888, 1.442695
      %v1070 = vpow.pop %v1069
      %v1071 = vmul.f32 %v889, 1.442695
      %v1072 = vpow.pop %v1071
      %v1073 = vmul.f32 %v890, 1.442695
      %v1074 = vpow.pop %v1073
      %v1075 = vmul.f32 %v891, 1.442695
      %v1076 = vpow.pop %v1075
      %v1077 = vmul.f32 %v892, 1.442695
      %v1078 = vpow.pop %v1077
      %v1079 = vmul.f32 %v893, 1.442695
      %v1080 = vpow.pop %v1079
      %v1081 = vmul.f32 %v894, 1.442695
      %v1082 = vpow.pop %v1081
      %v1083 = vmul.f32 %v895, 1.442695
      %v1084 = vpow.pop %v1083
      %v1085 = vmul.f32 %v896, 1.442695
      %v1086 = vpow.pop %v1085
      %v1087 = vmul.f32 %v897, 1.442695
      %v1088 = vpow.pop %v1087
      %v1089 = vmul.f32 %v898, 1.442695
      %v1090 = vpow.pop %v1089
      %v1091 = vmul.f32 %v899, 1.442695
      %v1092 = vpow.pop %v1091
      %v1093 = vmul.f32 %v900, 1.442695
      %v1094 = vpow.pop %v1093
      %v1095 = vmul.f32 %v901, 1.442695
      %v1096 = vpow.pop %v1095
      %v1097 = vmul.f32 %v902, 1.442695
      %v1098 = vpow.pop %v1097
      %v1099 = vmul.f32 %v903, 1.442695
      %v1100 = vpow.pop %v1099
      %v1101 = vmul.f32 %v904, 1.442695
      %v1102 = vpow.pop %v1101
      %v1103 = vmul.f32 %v905, 1.442695
      %v1104 = vpow.pop %v1103
      %v1105 = vmul.f32 %v906, 1.442695
      %v1106 = vpow.pop %v1105
      %v1107 = vmul.f32 %v907, 1.442695
      %v1108 = vpow.pop %v1107
      %v1109 = vmul.f32 %v908, 1.442695
      %v1110 = vpow.pop %v1109
      %v1111 = vmul.f32 %v909, 1.442695
      %v1112 = vpow.pop %v1111
      %v1113 = vmul.f32 %v910, 1.442695
      %v1114 = vpow.pop %v1113
      %v1115 = vmul.f32 %v911, 1.442695
      %v1116 = vpow.pop %v1115
      %v1117 = vmul.f32 %v912, 1.442695
      %v1118 = vpow.pop %v1117
      %v1119 = vmul.f32 %v913, 1.442695
      %v1120 = vpow.pop %v1119
      %v1121 = vmul.f32 %v914, 1.442695
      %v1122 = vpow.pop %v1121
      %v1123 = vmul.f32 %v915, 1.442695
      %v1124 = vpow.pop %v1123
      %v1125 = vmul.f32 %v916, 1.442695
      %v1126 = vpow.pop %v1125
      %v1127 = vmul.f32 %v917, 1.442695
      %v1128 = vpow.pop %v1127
      %v1129 = vmul.f32 %v918, 1.442695
      %v1130 = vpow.pop %v1129
      %v1131 = vmul.f32 %v919, 1.442695
      %v1132 = vpow.pop %v1131
      %v1133 = vmul.f32 %v920, 1.442695
      %v1134 = vpow.pop %v1133
      %v1135 = vmul.f32 %v921, 1.442695
      %v1136 = vpow.pop %v1135
      %v1137 = vmul.f32 %v922, 1.442695
      %v1138 = vpow.pop %v1137
      %v1139 = vmul.f32 %v923, 1.442695
      %v1140 = vpow.pop %v1139
      %v1141 = vmul.f32 %v924, 1.442695
      %v1142 = vpow.pop %v1141
      %v1143 = vmul.f32 %v925, 1.442695
      %v1144 = vpow.pop %v1143
      %v1145 = vmul.f32 %v926, 1.442695
      %v1146 = vpow.pop %v1145
      %v1147 = vmul.f32 %v927, 1.442695
      %v1148 = vpow.pop %v1147
      %v1149 = vmul.f32 %v928, 1.442695
      %v1150 = vpow.pop %v1149
      %v1151 = vmul.f32 %v929, 1.442695
      %v1152 = vpow.pop %v1151
      %v1153 = vmul.f32 %v930, 1.442695
      %v1154 = vpow.pop %v1153
      %v1155 = vmul.f32 %v931, 1.442695
      %v1156 = vpow.pop %v1155
      %v1157 = vmul.f32 %v932, 1.442695
      %v1158 = vpow.pop %v1157
      %v1159 = vmul.f32 %v933, 1.442695
      %v1160 = vpow.pop %v1159
      %v1161 = vmul.f32 %v934, 1.442695
      %v1162 = vpow.pop %v1161
      %v1163 = vmul.f32 %v935, 1.442695
      %v1164 = vpow.pop %v1163
      %v1165 = vmul.f32 %v936, 1.442695
      %v1166 = vpow.pop %v1165
      %v1167 = vmul.f32 %v937, 1.442695
      %v1168 = vpow.pop %v1167
      %v1169 = vmul.f32 %v938, 1.442695
      %v1170 = vpow.pop %v1169
      %v1171 = vmul.f32 %v939, 1.442695
      %v1172 = vpow.pop %v1171
      %v1173 = vmul.f32 %v940, 1.442695
      %v1174 = vpow.pop %v1173
      %v1175 = vmul.f32 %v941, 1.442695
      %v1176 = vpow.pop %v1175
      %v1177 = vmul.f32 %v942, 1.442695
      %v1178 = vpow.pop %v1177
      %v1179 = vmul.f32 %v943, 1.442695
      %v1180 = vpow.pop %v1179
      %v1181 = vmul.f32 %v944, 1.442695
      %v1182 = vpow.pop %v1181
      %v1183 = vmul.f32 %v945, 1.442695
      %v1184 = vpow.pop %v1183
      %v1185 = vmul.f32 %v946, 1.442695
      %v1186 = vpow.pop %v1185
      %v1187 = vmul.f32 %v947, 1.442695
      %v1188 = vpow.pop %v1187
      %v1189 = vmul.f32 %v948, 1.442695
      %v1190 = vpow.pop %v1189
      %v1191 = vmul.f32 %v949, 1.442695
      %v1192 = vpow.pop %v1191
      %v1193 = vmul.f32 %v950, 1.442695
      %v1194 = vpow.pop %v1193
      %v1195 = vmul.f32 %v951, 1.442695
      %v1196 = vpow.pop %v1195
      %v1197 = vmul.f32 %v952, 1.442695
      %v1198 = vpow.pop %v1197
      %v1199 = vmul.f32 %v953, 1.442695
      %v1200 = vpow.pop %v1199
      %v1201 = vmul.f32 %v954, 1.442695
      %v1202 = vpow.pop %v1201
      %v1203 = vmul.f32 %v955, 1.442695
      %v1204 = vpow.pop %v1203
      %v1205 = vmul.f32 %v956, 1.442695
      %v1206 = vpow.pop %v1205
      %v1207 = vmul.f32 %v957, 1.442695
      %v1208 = vpow.pop %v1207
      %v1209 = vmul.f32 %v958, 1.442695
      %v1210 = vpow.pop %v1209
      %v1211 = vmul.f32 %v959, 1.442695
      %v1212 = vpow.pop %v1211
      %v1213 = vmul.f32 %v960, 1.442695
      %v1214 = vpow.pop %v1213
      %v1215 = vmul.f32 %v961, 1.442695
      %v1216 = vpow.pop %v1215
      %v1217 = vmul.f32 %v962, 1.442695
      %v1218 = vpow.pop %v1217
      %v1219 = vsel %vm450, %v964, 0.0
      %1220 = vadd.xlane.f32.xlu0 %v1219
      %v1221 = vpop.xlane.xlu0 %1220
      %v1222 = vsel %vm450, %v966, 0.0
      %1223 = vadd.xlane.f32.xlu0 %v1222
      %v1224 = vpop.xlane.xlu0 %1223
      %v1225 = vsel %vm450, %v968, 0.0
      %1226 = vadd.xlane.f32.xlu0 %v1225
      %v1227 = vpop.xlane.xlu0 %1226
      %v1228 = vsel %vm450, %v970, 0.0
      %1229 = vadd.xlane.f32.xlu0 %v1228
      %v1230 = vpop.xlane.xlu0 %1229
      %v1231 = vsel %vm450, %v972, 0.0
      %1232 = vadd.xlane.f32.xlu0 %v1231
      %v1233 = vpop.xlane.xlu0 %1232
      %v1234 = vsel %vm450, %v974, 0.0
      %1235 = vadd.xlane.f32.xlu0 %v1234
      %v1236 = vpop.xlane.xlu0 %1235
      %v1237 = vsel %vm450, %v976, 0.0
      %1238 = vadd.xlane.f32.xlu0 %v1237
      %v1239 = vpop.xlane.xlu0 %1238
      %v1240 = vsel %vm450, %v978, 0.0
      %1241 = vadd.xlane.f32.xlu0 %v1240
      %v1242 = vpop.xlane.xlu0 %1241
      %v1243 = vsel %vm450, %v980, 0.0
      %1244 = vadd.xlane.f32.xlu0 %v1243
      %v1245 = vpop.xlane.xlu0 %1244
      %v1246 = vsel %vm450, %v982, 0.0
      %1247 = vadd.xlane.f32.xlu0 %v1246
      %v1248 = vpop.xlane.xlu0 %1247
      %v1249 = vsel %vm450, %v984, 0.0
      %1250 = vadd.xlane.f32.xlu0 %v1249
      %v1251 = vpop.xlane.xlu0 %1250
      %v1252 = vsel %vm450, %v986, 0.0
      %1253 = vadd.xlane.f32.xlu0 %v1252
      %v1254 = vpop.xlane.xlu0 %1253
      %v1255 = vsel %vm450, %v988, 0.0
      %1256 = vadd.xlane.f32.xlu0 %v1255
      %v1257 = vpop.xlane.xlu0 %1256
      %v1258 = vsel %vm450, %v990, 0.0
      %1259 = vadd.xlane.f32.xlu0 %v1258
      %v1260 = vpop.xlane.xlu0 %1259
      %v1261 = vsel %vm450, %v992, 0.0
      %1262 = vadd.xlane.f32.xlu0 %v1261
      %v1263 = vpop.xlane.xlu0 %1262
      %v1264 = vsel %vm450, %v994, 0.0
      %1265 = vadd.xlane.f32.xlu0 %v1264
      %v1266 = vpop.xlane.xlu0 %1265
      %v1267 = vsel %vm450, %v996, 0.0
      %1268 = vadd.xlane.f32.xlu0 %v1267
      %v1269 = vpop.xlane.xlu0 %1268
      %v1270 = vsel %vm450, %v998, 0.0
      %1271 = vadd.xlane.f32.xlu0 %v1270
      %v1272 = vpop.xlane.xlu0 %1271
      %v1273 = vsel %vm450, %v1000, 0.0
      %1274 = vadd.xlane.f32.xlu0 %v1273
      %v1275 = vpop.xlane.xlu0 %1274
      %v1276 = vsel %vm450, %v1002, 0.0
      %1277 = vadd.xlane.f32.xlu0 %v1276
      %v1278 = vpop.xlane.xlu0 %1277
      %v1279 = vsel %vm450, %v1004, 0.0
      %1280 = vadd.xlane.f32.xlu0 %v1279
      %v1281 = vpop.xlane.xlu0 %1280
      %v1282 = vsel %vm450, %v1006, 0.0
      %1283 = vadd.xlane.f32.xlu0 %v1282
      %v1284 = vpop.xlane.xlu0 %1283
      %v1285 = vsel %vm450, %v1008, 0.0
      %1286 = vadd.xlane.f32.xlu0 %v1285
      %v1287 = vpop.xlane.xlu0 %1286
      %v1288 = vsel %vm450, %v1010, 0.0
      %1289 = vadd.xlane.f32.xlu0 %v1288
      %v1290 = vpop.xlane.xlu0 %1289
      %v1291 = vsel %vm450, %v1012, 0.0
      %1292 = vadd.xlane.f32.xlu0 %v1291
      %v1293 = vpop.xlane.xlu0 %1292
      %v1294 = vsel %vm450, %v1014, 0.0
      %1295 = vadd.xlane.f32.xlu0 %v1294
      %v1296 = vpop.xlane.xlu0 %1295
      %v1297 = vsel %vm450, %v1016, 0.0
      %1298 = vadd.xlane.f32.xlu0 %v1297
      %v1299 = vpop.xlane.xlu0 %1298
      %v1300 = vsel %vm450, %v1018, 0.0
      %1301 = vadd.xlane.f32.xlu0 %v1300
      %v1302 = vpop.xlane.xlu0 %1301
      %v1303 = vsel %vm450, %v1020, 0.0
      %1304 = vadd.xlane.f32.xlu0 %v1303
      %v1305 = vpop.xlane.xlu0 %1304
      %v1306 = vsel %vm450, %v1022, 0.0
      %1307 = vadd.xlane.f32.xlu0 %v1306
      %v1308 = vpop.xlane.xlu0 %1307
      %v1309 = vsel %vm450, %v1024, 0.0
      %1310 = vadd.xlane.f32.xlu0 %v1309
      %v1311 = vpop.xlane.xlu0 %1310
      %v1312 = vsel %vm450, %v1026, 0.0
      %1313 = vadd.xlane.f32.xlu0 %v1312
      %v1314 = vpop.xlane.xlu0 %1313
      %v1315 = vsel %vm450, %v1028, 0.0
      %1316 = vadd.xlane.f32.xlu0 %v1315
      %v1317 = vpop.xlane.xlu0 %1316
      %v1318 = vsel %vm450, %v1030, 0.0
      %1319 = vadd.xlane.f32.xlu0 %v1318
      %v1320 = vpop.xlane.xlu0 %1319
      %v1321 = vsel %vm450, %v1032, 0.0
      %1322 = vadd.xlane.f32.xlu0 %v1321
      %v1323 = vpop.xlane.xlu0 %1322
      %v1324 = vsel %vm450, %v1034, 0.0
      %1325 = vadd.xlane.f32.xlu0 %v1324
      %v1326 = vpop.xlane.xlu0 %1325
      %v1327 = vsel %vm450, %v1036, 0.0
      %1328 = vadd.xlane.f32.xlu0 %v1327
      %v1329 = vpop.xlane.xlu0 %1328
      %v1330 = vsel %vm450, %v1038, 0.0
      %1331 = vadd.xlane.f32.xlu0 %v1330
      %v1332 = vpop.xlane.xlu0 %1331
      %v1333 = vsel %vm450, %v1040, 0.0
      %1334 = vadd.xlane.f32.xlu0 %v1333
      %v1335 = vpop.xlane.xlu0 %1334
      %v1336 = vsel %vm450, %v1042, 0.0
      %1337 = vadd.xlane.f32.xlu0 %v1336
      %v1338 = vpop.xlane.xlu0 %1337
      %v1339 = vsel %vm450, %v1044, 0.0
      %1340 = vadd.xlane.f32.xlu0 %v1339
      %v1341 = vpop.xlane.xlu0 %1340
      %v1342 = vsel %vm450, %v1046, 0.0
      %1343 = vadd.xlane.f32.xlu0 %v1342
      %v1344 = vpop.xlane.xlu0 %1343
      %v1345 = vsel %vm450, %v1048, 0.0
      %1346 = vadd.xlane.f32.xlu0 %v1345
      %v1347 = vpop.xlane.xlu0 %1346
      %v1348 = vsel %vm450, %v1050, 0.0
      %1349 = vadd.xlane.f32.xlu0 %v1348
      %v1350 = vpop.xlane.xlu0 %1349
      %v1351 = vsel %vm450, %v1052, 0.0
      %1352 = vadd.xlane.f32.xlu0 %v1351
      %v1353 = vpop.xlane.xlu0 %1352
      %v1354 = vsel %vm450, %v1054, 0.0
      %1355 = vadd.xlane.f32.xlu0 %v1354
      %v1356 = vpop.xlane.xlu0 %1355
      %v1357 = vsel %vm450, %v1056, 0.0
      %1358 = vadd.xlane.f32.xlu0 %v1357
      %v1359 = vpop.xlane.xlu0 %1358
      %v1360 = vsel %vm450, %v1058, 0.0
      %1361 = vadd.xlane.f32.xlu0 %v1360
      %v1362 = vpop.xlane.xlu0 %1361
      %v1363 = vsel %vm450, %v1060, 0.0
      %1364 = vadd.xlane.f32.xlu0 %v1363
      %v1365 = vpop.xlane.xlu0 %1364
      %v1366 = vsel %vm450, %v1062, 0.0
      %1367 = vadd.xlane.f32.xlu0 %v1366
      %v1368 = vpop.xlane.xlu0 %1367
      %v1369 = vsel %vm450, %v1064, 0.0
      %1370 = vadd.xlane.f32.xlu0 %v1369
      %v1371 = vpop.xlane.xlu0 %1370
      %v1372 = vsel %vm450, %v1066, 0.0
      %1373 = vadd.xlane.f32.xlu0 %v1372
      %v1374 = vpop.xlane.xlu0 %1373
      %v1375 = vsel %vm450, %v1068, 0.0
      %1376 = vadd.xlane.f32.xlu0 %v1375
      %v1377 = vpop.xlane.xlu0 %1376
      %v1378 = vsel %vm450, %v1070, 0.0
      %1379 = vadd.xlane.f32.xlu0 %v1378
      %v1380 = vpop.xlane.xlu0 %1379
      %v1381 = vsel %vm450, %v1072, 0.0
      %1382 = vadd.xlane.f32.xlu0 %v1381
      %v1383 = vpop.xlane.xlu0 %1382
      %v1384 = vsel %vm450, %v1074, 0.0
      %1385 = vadd.xlane.f32.xlu0 %v1384
      %v1386 = vpop.xlane.xlu0 %1385
      %v1387 = vsel %vm450, %v1076, 0.0
      %1388 = vadd.xlane.f32.xlu0 %v1387
      %v1389 = vpop.xlane.xlu0 %1388
      %v1390 = vsel %vm450, %v1078, 0.0
      %1391 = vadd.xlane.f32.xlu0 %v1390
      %v1392 = vpop.xlane.xlu0 %1391
      %v1393 = vsel %vm450, %v1080, 0.0
      %1394 = vadd.xlane.f32.xlu0 %v1393
      %v1395 = vpop.xlane.xlu0 %1394
      %v1396 = vsel %vm450, %v1082, 0.0
      %1397 = vadd.xlane.f32.xlu0 %v1396
      %v1398 = vpop.xlane.xlu0 %1397
      %v1399 = vsel %vm450, %v1084, 0.0
      %1400 = vadd.xlane.f32.xlu0 %v1399
      %v1401 = vpop.xlane.xlu0 %1400
      %v1402 = vsel %vm450, %v1086, 0.0
      %1403 = vadd.xlane.f32.xlu0 %v1402
      %v1404 = vpop.xlane.xlu0 %1403
      %v1405 = vsel %vm450, %v1088, 0.0
      %1406 = vadd.xlane.f32.xlu0 %v1405
      %v1407 = vpop.xlane.xlu0 %1406
      %v1408 = vsel %vm450, %v1090, 0.0
      %1409 = vadd.xlane.f32.xlu0 %v1408
      %v1410 = vpop.xlane.xlu0 %1409
      %v1411 = vsel %vm450, %v1092, 0.0
      %1412 = vadd.xlane.f32.xlu0 %v1411
      %v1413 = vpop.xlane.xlu0 %1412
      %v1414 = vsel %vm450, %v1094, 0.0
      %1415 = vadd.xlane.f32.xlu0 %v1414
      %v1416 = vpop.xlane.xlu0 %1415
      %v1417 = vsel %vm450, %v1096, 0.0
      %1418 = vadd.xlane.f32.xlu0 %v1417
      %v1419 = vpop.xlane.xlu0 %1418
      %v1420 = vsel %vm450, %v1098, 0.0
      %1421 = vadd.xlane.f32.xlu0 %v1420
      %v1422 = vpop.xlane.xlu0 %1421
      %v1423 = vsel %vm450, %v1100, 0.0
      %1424 = vadd.xlane.f32.xlu0 %v1423
      %v1425 = vpop.xlane.xlu0 %1424
      %v1426 = vsel %vm450, %v1102, 0.0
      %1427 = vadd.xlane.f32.xlu0 %v1426
      %v1428 = vpop.xlane.xlu0 %1427
      %v1429 = vsel %vm450, %v1104, 0.0
      %1430 = vadd.xlane.f32.xlu0 %v1429
      %v1431 = vpop.xlane.xlu0 %1430
      %v1432 = vsel %vm450, %v1106, 0.0
      %1433 = vadd.xlane.f32.xlu0 %v1432
      %v1434 = vpop.xlane.xlu0 %1433
      %v1435 = vsel %vm450, %v1108, 0.0
      %1436 = vadd.xlane.f32.xlu0 %v1435
      %v1437 = vpop.xlane.xlu0 %1436
      %v1438 = vsel %vm450, %v1110, 0.0
      %1439 = vadd.xlane.f32.xlu0 %v1438
      %v1440 = vpop.xlane.xlu0 %1439
      %v1441 = vsel %vm450, %v1112, 0.0
      %1442 = vadd.xlane.f32.xlu0 %v1441
      %v1443 = vpop.xlane.xlu0 %1442
      %v1444 = vsel %vm450, %v1114, 0.0
      %1445 = vadd.xlane.f32.xlu0 %v1444
      %v1446 = vpop.xlane.xlu0 %1445
      %v1447 = vsel %vm450, %v1116, 0.0
      %1448 = vadd.xlane.f32.xlu0 %v1447
      %v1449 = vpop.xlane.xlu0 %1448
      %v1450 = vsel %vm450, %v1118, 0.0
      %1451 = vadd.xlane.f32.xlu0 %v1450
      %v1452 = vpop.xlane.xlu0 %1451
      %v1453 = vsel %vm450, %v1120, 0.0
      %1454 = vadd.xlane.f32.xlu0 %v1453
      %v1455 = vpop.xlane.xlu0 %1454
      %v1456 = vsel %vm450, %v1122, 0.0
      %1457 = vadd.xlane.f32.xlu0 %v1456
      %v1458 = vpop.xlane.xlu0 %1457
      %v1459 = vsel %vm450, %v1124, 0.0
      %1460 = vadd.xlane.f32.xlu0 %v1459
      %v1461 = vpop.xlane.xlu0 %1460
      %v1462 = vsel %vm450, %v1126, 0.0
      %1463 = vadd.xlane.f32.xlu0 %v1462
      %v1464 = vpop.xlane.xlu0 %1463
      %v1465 = vsel %vm450, %v1128, 0.0
      %1466 = vadd.xlane.f32.xlu0 %v1465
      %v1467 = vpop.xlane.xlu0 %1466
      %v1468 = vsel %vm450, %v1130, 0.0
      %1469 = vadd.xlane.f32.xlu0 %v1468
      %v1470 = vpop.xlane.xlu0 %1469
      %v1471 = vsel %vm450, %v1132, 0.0
      %1472 = vadd.xlane.f32.xlu0 %v1471
      %v1473 = vpop.xlane.xlu0 %1472
      %v1474 = vsel %vm450, %v1134, 0.0
      %1475 = vadd.xlane.f32.xlu0 %v1474
      %v1476 = vpop.xlane.xlu0 %1475
      %v1477 = vsel %vm450, %v1136, 0.0
      %1478 = vadd.xlane.f32.xlu0 %v1477
      %v1479 = vpop.xlane.xlu0 %1478
      %v1480 = vsel %vm450, %v1138, 0.0
      %1481 = vadd.xlane.f32.xlu0 %v1480
      %v1482 = vpop.xlane.xlu0 %1481
      %v1483 = vsel %vm450, %v1140, 0.0
      %1484 = vadd.xlane.f32.xlu0 %v1483
      %v1485 = vpop.xlane.xlu0 %1484
      %v1486 = vsel %vm450, %v1142, 0.0
      %1487 = vadd.xlane.f32.xlu0 %v1486
      %v1488 = vpop.xlane.xlu0 %1487
      %v1489 = vsel %vm450, %v1144, 0.0
      %1490 = vadd.xlane.f32.xlu0 %v1489
      %v1491 = vpop.xlane.xlu0 %1490
      %v1492 = vsel %vm450, %v1146, 0.0
      %1493 = vadd.xlane.f32.xlu0 %v1492
      %v1494 = vpop.xlane.xlu0 %1493
      %v1495 = vsel %vm450, %v1148, 0.0
      %1496 = vadd.xlane.f32.xlu0 %v1495
      %v1497 = vpop.xlane.xlu0 %1496
      %v1498 = vsel %vm450, %v1150, 0.0
      %1499 = vadd.xlane.f32.xlu0 %v1498
      %v1500 = vpop.xlane.xlu0 %1499
      %v1501 = vsel %vm450, %v1152, 0.0
      %1502 = vadd.xlane.f32.xlu0 %v1501
      %v1503 = vpop.xlane.xlu0 %1502
      %v1504 = vsel %vm450, %v1154, 0.0
      %1505 = vadd.xlane.f32.xlu0 %v1504
      %v1506 = vpop.xlane.xlu0 %1505
      %v1507 = vsel %vm450, %v1156, 0.0
      %1508 = vadd.xlane.f32.xlu0 %v1507
      %v1509 = vpop.xlane.xlu0 %1508
      %v1510 = vsel %vm450, %v1158, 0.0
      %1511 = vadd.xlane.f32.xlu0 %v1510
      %v1512 = vpop.xlane.xlu0 %1511
      %v1513 = vsel %vm450, %v1160, 0.0
      %1514 = vadd.xlane.f32.xlu0 %v1513
      %v1515 = vpop.xlane.xlu0 %1514
      %v1516 = vsel %vm450, %v1162, 0.0
      %1517 = vadd.xlane.f32.xlu0 %v1516
      %v1518 = vpop.xlane.xlu0 %1517
      %v1519 = vsel %vm450, %v1164, 0.0
      %1520 = vadd.xlane.f32.xlu0 %v1519
      %v1521 = vpop.xlane.xlu0 %1520
      %v1522 = vsel %vm450, %v1166, 0.0
      %1523 = vadd.xlane.f32.xlu0 %v1522
      %v1524 = vpop.xlane.xlu0 %1523
      %v1525 = vsel %vm450, %v1168, 0.0
      %1526 = vadd.xlane.f32.xlu0 %v1525
      %v1527 = vpop.xlane.xlu0 %1526
      %v1528 = vsel %vm450, %v1170, 0.0
      %1529 = vadd.xlane.f32.xlu0 %v1528
      %v1530 = vpop.xlane.xlu0 %1529
      %v1531 = vsel %vm450, %v1172, 0.0
      %1532 = vadd.xlane.f32.xlu0 %v1531
      %v1533 = vpop.xlane.xlu0 %1532
      %v1534 = vsel %vm450, %v1174, 0.0
      %1535 = vadd.xlane.f32.xlu0 %v1534
      %v1536 = vpop.xlane.xlu0 %1535
      %v1537 = vsel %vm450, %v1176, 0.0
      %1538 = vadd.xlane.f32.xlu0 %v1537
      %v1539 = vpop.xlane.xlu0 %1538
      %v1540 = vsel %vm450, %v1178, 0.0
      %1541 = vadd.xlane.f32.xlu0 %v1540
      %v1542 = vpop.xlane.xlu0 %1541
      %v1543 = vsel %vm450, %v1180, 0.0
      %1544 = vadd.xlane.f32.xlu0 %v1543
      %v1545 = vpop.xlane.xlu0 %1544
      %v1546 = vsel %vm450, %v1182, 0.0
      %1547 = vadd.xlane.f32.xlu0 %v1546
      %v1548 = vpop.xlane.xlu0 %1547
      %v1549 = vsel %vm450, %v1184, 0.0
      %1550 = vadd.xlane.f32.xlu0 %v1549
      %v1551 = vpop.xlane.xlu0 %1550
      %v1552 = vsel %vm450, %v1186, 0.0
      %1553 = vadd.xlane.f32.xlu0 %v1552
      %v1554 = vpop.xlane.xlu0 %1553
      %v1555 = vsel %vm450, %v1188, 0.0
      %1556 = vadd.xlane.f32.xlu0 %v1555
      %v1557 = vpop.xlane.xlu0 %1556
      %v1558 = vsel %vm450, %v1190, 0.0
      %1559 = vadd.xlane.f32.xlu0 %v1558
      %v1560 = vpop.xlane.xlu0 %1559
      %v1561 = vsel %vm450, %v1192, 0.0
      %1562 = vadd.xlane.f32.xlu0 %v1561
      %v1563 = vpop.xlane.xlu0 %1562
      %v1564 = vsel %vm450, %v1194, 0.0
      %1565 = vadd.xlane.f32.xlu0 %v1564
      %v1566 = vpop.xlane.xlu0 %1565
      %v1567 = vsel %vm450, %v1196, 0.0
      %1568 = vadd.xlane.f32.xlu0 %v1567
      %v1569 = vpop.xlane.xlu0 %1568
      %v1570 = vsel %vm450, %v1198, 0.0
      %1571 = vadd.xlane.f32.xlu0 %v1570
      %v1572 = vpop.xlane.xlu0 %1571
      %v1573 = vsel %vm450, %v1200, 0.0
      %1574 = vadd.xlane.f32.xlu0 %v1573
      %v1575 = vpop.xlane.xlu0 %1574
      %v1576 = vsel %vm450, %v1202, 0.0
      %1577 = vadd.xlane.f32.xlu0 %v1576
      %v1578 = vpop.xlane.xlu0 %1577
      %v1579 = vsel %vm450, %v1204, 0.0
      %1580 = vadd.xlane.f32.xlu0 %v1579
      %v1581 = vpop.xlane.xlu0 %1580
      %v1582 = vsel %vm450, %v1206, 0.0
      %1583 = vadd.xlane.f32.xlu0 %v1582
      %v1584 = vpop.xlane.xlu0 %1583
      %v1585 = vsel %vm450, %v1208, 0.0
      %1586 = vadd.xlane.f32.xlu0 %v1585
      %v1587 = vpop.xlane.xlu0 %1586
      %v1588 = vsel %vm450, %v1210, 0.0
      %1589 = vadd.xlane.f32.xlu0 %v1588
      %v1590 = vpop.xlane.xlu0 %1589
      %v1591 = vsel %vm450, %v1212, 0.0
      %1592 = vadd.xlane.f32.xlu0 %v1591
      %v1593 = vpop.xlane.xlu0 %1592
      %v1594 = vsel %vm450, %v1214, 0.0
      %1595 = vadd.xlane.f32.xlu0 %v1594
      %v1596 = vpop.xlane.xlu0 %1595
      %v1597 = vsel %vm450, %v1216, 0.0
      %1598 = vadd.xlane.f32.xlu0 %v1597
      %v1599 = vpop.xlane.xlu0 %1598
      %v1600 = vsel %vm450, %v1218, 0.0
      %1601 = vadd.xlane.f32.xlu0 %v1600
      %v1602 = vpop.xlane.xlu0 %1601
      %v1603 = vlog2.pop %v1221
      %v1604 = vmul.f32 %v1603, 0.6931472
      %v1605 = vlog2.pop %v1224
      %v1606 = vmul.f32 %v1605, 0.6931472
      %v1607 = vlog2.pop %v1227
      %v1608 = vmul.f32 %v1607, 0.6931472
      %v1609 = vlog2.pop %v1230
      %v1610 = vmul.f32 %v1609, 0.6931472
      %v1611 = vlog2.pop %v1233
      %v1612 = vmul.f32 %v1611, 0.6931472
      %v1613 = vlog2.pop %v1236
      %v1614 = vmul.f32 %v1613, 0.6931472
      %v1615 = vlog2.pop %v1239
      %v1616 = vmul.f32 %v1615, 0.6931472
      %v1617 = vlog2.pop %v1242
      %v1618 = vmul.f32 %v1617, 0.6931472
      %v1619 = vlog2.pop %v1245
      %v1620 = vmul.f32 %v1619, 0.6931472
      %v1621 = vlog2.pop %v1248
      %v1622 = vmul.f32 %v1621, 0.6931472
      %v1623 = vlog2.pop %v1251
      %v1624 = vmul.f32 %v1623, 0.6931472
      %v1625 = vlog2.pop %v1254
      %v1626 = vmul.f32 %v1625, 0.6931472
      %v1627 = vlog2.pop %v1257
      %v1628 = vmul.f32 %v1627, 0.6931472
      %v1629 = vlog2.pop %v1260
      %v1630 = vmul.f32 %v1629, 0.6931472
      %v1631 = vlog2.pop %v1263
      %v1632 = vmul.f32 %v1631, 0.6931472
      %v1633 = vlog2.pop %v1266
      %v1634 = vmul.f32 %v1633, 0.6931472
      %v1635 = vlog2.pop %v1269
      %v1636 = vmul.f32 %v1635, 0.6931472
      %v1637 = vlog2.pop %v1272
      %v1638 = vmul.f32 %v1637, 0.6931472
      %v1639 = vlog2.pop %v1275
      %v1640 = vmul.f32 %v1639, 0.6931472
      %v1641 = vlog2.pop %v1278
      %v1642 = vmul.f32 %v1641, 0.6931472
      %v1643 = vlog2.pop %v1281
      %v1644 = vmul.f32 %v1643, 0.6931472
      %v1645 = vlog2.pop %v1284
      %v1646 = vmul.f32 %v1645, 0.6931472
      %v1647 = vlog2.pop %v1287
      %v1648 = vmul.f32 %v1647, 0.6931472
      %v1649 = vlog2.pop %v1290
      %v1650 = vmul.f32 %v1649, 0.6931472
      %v1651 = vlog2.pop %v1293
      %v1652 = vmul.f32 %v1651, 0.6931472
      %v1653 = vlog2.pop %v1296
      %v1654 = vmul.f32 %v1653, 0.6931472
      %v1655 = vlog2.pop %v1299
      %v1656 = vmul.f32 %v1655, 0.6931472
      %v1657 = vlog2.pop %v1302
      %v1658 = vmul.f32 %v1657, 0.6931472
      %v1659 = vlog2.pop %v1305
      %v1660 = vmul.f32 %v1659, 0.6931472
      %v1661 = vlog2.pop %v1308
      %v1662 = vmul.f32 %v1661, 0.6931472
      %v1663 = vlog2.pop %v1311
      %v1664 = vmul.f32 %v1663, 0.6931472
      %v1665 = vlog2.pop %v1314
      %v1666 = vmul.f32 %v1665, 0.6931472
      %v1667 = vlog2.pop %v1317
      %v1668 = vmul.f32 %v1667, 0.6931472
      %v1669 = vlog2.pop %v1320
      %v1670 = vmul.f32 %v1669, 0.6931472
      %v1671 = vlog2.pop %v1323
      %v1672 = vmul.f32 %v1671, 0.6931472
      %v1673 = vlog2.pop %v1326
      %v1674 = vmul.f32 %v1673, 0.6931472
      %v1675 = vlog2.pop %v1329
      %v1676 = vmul.f32 %v1675, 0.6931472
      %v1677 = vlog2.pop %v1332
      %v1678 = vmul.f32 %v1677, 0.6931472
      %v1679 = vlog2.pop %v1335
      %v1680 = vmul.f32 %v1679, 0.6931472
      %v1681 = vlog2.pop %v1338
      %v1682 = vmul.f32 %v1681, 0.6931472
      %v1683 = vlog2.pop %v1341
      %v1684 = vmul.f32 %v1683, 0.6931472
      %v1685 = vlog2.pop %v1344
      %v1686 = vmul.f32 %v1685, 0.6931472
      %v1687 = vlog2.pop %v1347
      %v1688 = vmul.f32 %v1687, 0.6931472
      %v1689 = vlog2.pop %v1350
      %v1690 = vmul.f32 %v1689, 0.6931472
      %v1691 = vlog2.pop %v1353
      %v1692 = vmul.f32 %v1691, 0.6931472
      %v1693 = vlog2.pop %v1356
      %v1694 = vmul.f32 %v1693, 0.6931472
      %v1695 = vlog2.pop %v1359
      %v1696 = vmul.f32 %v1695, 0.6931472
      %v1697 = vlog2.pop %v1362
      %v1698 = vmul.f32 %v1697, 0.6931472
      %v1699 = vlog2.pop %v1365
      %v1700 = vmul.f32 %v1699, 0.6931472
      %v1701 = vlog2.pop %v1368
      %v1702 = vmul.f32 %v1701, 0.6931472
      %v1703 = vlog2.pop %v1371
      %v1704 = vmul.f32 %v1703, 0.6931472
      %v1705 = vlog2.pop %v1374
      %v1706 = vmul.f32 %v1705, 0.6931472
      %v1707 = vlog2.pop %v1377
      %v1708 = vmul.f32 %v1707, 0.6931472
      %v1709 = vlog2.pop %v1380
      %v1710 = vmul.f32 %v1709, 0.6931472
      %v1711 = vlog2.pop %v1383
      %v1712 = vmul.f32 %v1711, 0.6931472
      %v1713 = vlog2.pop %v1386
      %v1714 = vmul.f32 %v1713, 0.6931472
      %v1715 = vlog2.pop %v1389
      %v1716 = vmul.f32 %v1715, 0.6931472
      %v1717 = vlog2.pop %v1392
      %v1718 = vmul.f32 %v1717, 0.6931472
      %v1719 = vlog2.pop %v1395
      %v1720 = vmul.f32 %v1719, 0.6931472
      %v1721 = vlog2.pop %v1398
      %v1722 = vmul.f32 %v1721, 0.6931472
      %v1723 = vlog2.pop %v1401
      %v1724 = vmul.f32 %v1723, 0.6931472
      %v1725 = vlog2.pop %v1404
      %v1726 = vmul.f32 %v1725, 0.6931472
      %v1727 = vlog2.pop %v1407
      %v1728 = vmul.f32 %v1727, 0.6931472
      %v1729 = vlog2.pop %v1410
      %v1730 = vmul.f32 %v1729, 0.6931472
      %v1731 = vlog2.pop %v1413
      %v1732 = vmul.f32 %v1731, 0.6931472
      %v1733 = vlog2.pop %v1416
      %v1734 = vmul.f32 %v1733, 0.6931472
      %v1735 = vlog2.pop %v1419
      %v1736 = vmul.f32 %v1735, 0.6931472
      %v1737 = vlog2.pop %v1422
      %v1738 = vmul.f32 %v1737, 0.6931472
      %v1739 = vlog2.pop %v1425
      %v1740 = vmul.f32 %v1739, 0.6931472
      %v1741 = vlog2.pop %v1428
      %v1742 = vmul.f32 %v1741, 0.6931472
      %v1743 = vlog2.pop %v1431
      %v1744 = vmul.f32 %v1743, 0.6931472
      %v1745 = vlog2.pop %v1434
      %v1746 = vmul.f32 %v1745, 0.6931472
      %v1747 = vlog2.pop %v1437
      %v1748 = vmul.f32 %v1747, 0.6931472
      %v1749 = vlog2.pop %v1440
      %v1750 = vmul.f32 %v1749, 0.6931472
      %v1751 = vlog2.pop %v1443
      %v1752 = vmul.f32 %v1751, 0.6931472
      %v1753 = vlog2.pop %v1446
      %v1754 = vmul.f32 %v1753, 0.6931472
      %v1755 = vlog2.pop %v1449
      %v1756 = vmul.f32 %v1755, 0.6931472
      %v1757 = vlog2.pop %v1452
      %v1758 = vmul.f32 %v1757, 0.6931472
      %v1759 = vlog2.pop %v1455
      %v1760 = vmul.f32 %v1759, 0.6931472
      %v1761 = vlog2.pop %v1458
      %v1762 = vmul.f32 %v1761, 0.6931472
      %v1763 = vlog2.pop %v1461
      %v1764 = vmul.f32 %v1763, 0.6931472
      %v1765 = vlog2.pop %v1464
      %v1766 = vmul.f32 %v1765, 0.6931472
      %v1767 = vlog2.pop %v1467
      %v1768 = vmul.f32 %v1767, 0.6931472
      %v1769 = vlog2.pop %v1470
      %v1770 = vmul.f32 %v1769, 0.6931472
      %v1771 = vlog2.pop %v1473
      %v1772 = vmul.f32 %v1771, 0.6931472
      %v1773 = vlog2.pop %v1476
      %v1774 = vmul.f32 %v1773, 0.6931472
      %v1775 = vlog2.pop %v1479
      %v1776 = vmul.f32 %v1775, 0.6931472
      %v1777 = vlog2.pop %v1482
      %v1778 = vmul.f32 %v1777, 0.6931472
      %v1779 = vlog2.pop %v1485
      %v1780 = vmul.f32 %v1779, 0.6931472
      %v1781 = vlog2.pop %v1488
      %v1782 = vmul.f32 %v1781, 0.6931472
      %v1783 = vlog2.pop %v1491
      %v1784 = vmul.f32 %v1783, 0.6931472
      %v1785 = vlog2.pop %v1494
      %v1786 = vmul.f32 %v1785, 0.6931472
      %v1787 = vlog2.pop %v1497
      %v1788 = vmul.f32 %v1787, 0.6931472
      %v1789 = vlog2.pop %v1500
      %v1790 = vmul.f32 %v1789, 0.6931472
      %v1791 = vlog2.pop %v1503
      %v1792 = vmul.f32 %v1791, 0.6931472
      %v1793 = vlog2.pop %v1506
      %v1794 = vmul.f32 %v1793, 0.6931472
      %v1795 = vlog2.pop %v1509
      %v1796 = vmul.f32 %v1795, 0.6931472
      %v1797 = vlog2.pop %v1512
      %v1798 = vmul.f32 %v1797, 0.6931472
      %v1799 = vlog2.pop %v1515
      %v1800 = vmul.f32 %v1799, 0.6931472
      %v1801 = vlog2.pop %v1518
      %v1802 = vmul.f32 %v1801, 0.6931472
      %v1803 = vlog2.pop %v1521
      %v1804 = vmul.f32 %v1803, 0.6931472
      %v1805 = vlog2.pop %v1524
      %v1806 = vmul.f32 %v1805, 0.6931472
      %v1807 = vlog2.pop %v1527
      %v1808 = vmul.f32 %v1807, 0.6931472
      %v1809 = vlog2.pop %v1530
      %v1810 = vmul.f32 %v1809, 0.6931472
      %v1811 = vlog2.pop %v1533
      %v1812 = vmul.f32 %v1811, 0.6931472
      %v1813 = vlog2.pop %v1536
      %v1814 = vmul.f32 %v1813, 0.6931472
      %v1815 = vlog2.pop %v1539
      %v1816 = vmul.f32 %v1815, 0.6931472
      %v1817 = vlog2.pop %v1542
      %v1818 = vmul.f32 %v1817, 0.6931472
      %v1819 = vlog2.pop %v1545
      %v1820 = vmul.f32 %v1819, 0.6931472
      %v1821 = vlog2.pop %v1548
      %v1822 = vmul.f32 %v1821, 0.6931472
      %v1823 = vlog2.pop %v1551
      %v1824 = vmul.f32 %v1823, 0.6931472
      %v1825 = vlog2.pop %v1554
      %v1826 = vmul.f32 %v1825, 0.6931472
      %v1827 = vlog2.pop %v1557
      %v1828 = vmul.f32 %v1827, 0.6931472
      %v1829 = vlog2.pop %v1560
      %v1830 = vmul.f32 %v1829, 0.6931472
      %v1831 = vlog2.pop %v1563
      %v1832 = vmul.f32 %v1831, 0.6931472
      %v1833 = vlog2.pop %v1566
      %v1834 = vmul.f32 %v1833, 0.6931472
      %v1835 = vlog2.pop %v1569
      %v1836 = vmul.f32 %v1835, 0.6931472
      %v1837 = vlog2.pop %v1572
      %v1838 = vmul.f32 %v1837, 0.6931472
      %v1839 = vlog2.pop %v1575
      %v1840 = vmul.f32 %v1839, 0.6931472
      %v1841 = vlog2.pop %v1578
      %v1842 = vmul.f32 %v1841, 0.6931472
      %v1843 = vlog2.pop %v1581
      %v1844 = vmul.f32 %v1843, 0.6931472
      %v1845 = vlog2.pop %v1584
      %v1846 = vmul.f32 %v1845, 0.6931472
      %v1847 = vlog2.pop %v1587
      %v1848 = vmul.f32 %v1847, 0.6931472
      %v1849 = vlog2.pop %v1590
      %v1850 = vmul.f32 %v1849, 0.6931472
      %v1851 = vlog2.pop %v1593
      %v1852 = vmul.f32 %v1851, 0.6931472
      %v1853 = vlog2.pop %v1596
      %v1854 = vmul.f32 %v1853, 0.6931472
      %v1855 = vlog2.pop %v1599
      %v1856 = vmul.f32 %v1855, 0.6931472
      %v1857 = vlog2.pop %v1602
      %v1858 = vmul.f32 %v1857, 0.6931472
      %v1859 = vsub.f32 %v835, %v1604
      %v1860 = vsub.f32 %v836, %v1606
      %v1861 = vsub.f32 %v837, %v1608
      %v1862 = vsub.f32 %v838, %v1610
      %v1863 = vsub.f32 %v839, %v1612
      %v1864 = vsub.f32 %v840, %v1614
      %v1865 = vsub.f32 %v841, %v1616
      %v1866 = vsub.f32 %v842, %v1618
      %v1867 = vsub.f32 %v843, %v1620
      %v1868 = vsub.f32 %v844, %v1622
      %v1869 = vsub.f32 %v845, %v1624
      %v1870 = vsub.f32 %v846, %v1626
      %v1871 = vsub.f32 %v847, %v1628
      %v1872 = vsub.f32 %v848, %v1630
      %v1873 = vsub.f32 %v849, %v1632
      %v1874 = vsub.f32 %v850, %v1634
      %v1875 = vsub.f32 %v851, %v1636
      %v1876 = vsub.f32 %v852, %v1638
      %v1877 = vsub.f32 %v853, %v1640
      %v1878 = vsub.f32 %v854, %v1642
      %v1879 = vsub.f32 %v855, %v1644
      %v1880 = vsub.f32 %v856, %v1646
      %v1881 = vsub.f32 %v857, %v1648
      %v1882 = vsub.f32 %v858, %v1650
      %v1883 = vsub.f32 %v859, %v1652
      %v1884 = vsub.f32 %v860, %v1654
      %v1885 = vsub.f32 %v861, %v1656
      %v1886 = vsub.f32 %v862, %v1658
      %v1887 = vsub.f32 %v863, %v1660
      %v1888 = vsub.f32 %v864, %v1662
      %v1889 = vsub.f32 %v865, %v1664
      %v1890 = vsub.f32 %v866, %v1666
      %v1891 = vsub.f32 %v867, %v1668
      %v1892 = vsub.f32 %v868, %v1670
      %v1893 = vsub.f32 %v869, %v1672
      %v1894 = vsub.f32 %v870, %v1674
      %v1895 = vsub.f32 %v871, %v1676
      %v1896 = vsub.f32 %v872, %v1678
      %v1897 = vsub.f32 %v873, %v1680
      %v1898 = vsub.f32 %v874, %v1682
      %v1899 = vsub.f32 %v875, %v1684
      %v1900 = vsub.f32 %v876, %v1686
      %v1901 = vsub.f32 %v877, %v1688
      %v1902 = vsub.f32 %v878, %v1690
      %v1903 = vsub.f32 %v879, %v1692
      %v1904 = vsub.f32 %v880, %v1694
      %v1905 = vsub.f32 %v881, %v1696
      %v1906 = vsub.f32 %v882, %v1698
      %v1907 = vsub.f32 %v883, %v1700
      %v1908 = vsub.f32 %v884, %v1702
      %v1909 = vsub.f32 %v885, %v1704
      %v1910 = vsub.f32 %v886, %v1706
      %v1911 = vsub.f32 %v887, %v1708
      %v1912 = vsub.f32 %v888, %v1710
      %v1913 = vsub.f32 %v889, %v1712
      %v1914 = vsub.f32 %v890, %v1714
      %v1915 = vsub.f32 %v891, %v1716
      %v1916 = vsub.f32 %v892, %v1718
      %v1917 = vsub.f32 %v893, %v1720
      %v1918 = vsub.f32 %v894, %v1722
      %v1919 = vsub.f32 %v895, %v1724
      %v1920 = vsub.f32 %v896, %v1726
      %v1921 = vsub.f32 %v897, %v1728
      %v1922 = vsub.f32 %v898, %v1730
      %v1923 = vsub.f32 %v899, %v1732
      %v1924 = vsub.f32 %v900, %v1734
      %v1925 = vsub.f32 %v901, %v1736
      %v1926 = vsub.f32 %v902, %v1738
      %v1927 = vsub.f32 %v903, %v1740
      %v1928 = vsub.f32 %v904, %v1742
      %v1929 = vsub.f32 %v905, %v1744
      %v1930 = vsub.f32 %v906, %v1746
      %v1931 = vsub.f32 %v907, %v1748
      %v1932 = vsub.f32 %v908, %v1750
      %v1933 = vsub.f32 %v909, %v1752
      %v1934 = vsub.f32 %v910, %v1754
      %v1935 = vsub.f32 %v911, %v1756
      %v1936 = vsub.f32 %v912, %v1758
      %v1937 = vsub.f32 %v913, %v1760
      %v1938 = vsub.f32 %v914, %v1762
      %v1939 = vsub.f32 %v915, %v1764
      %v1940 = vsub.f32 %v916, %v1766
      %v1941 = vsub.f32 %v917, %v1768
      %v1942 = vsub.f32 %v918, %v1770
      %v1943 = vsub.f32 %v919, %v1772
      %v1944 = vsub.f32 %v920, %v1774
      %v1945 = vsub.f32 %v921, %v1776
      %v1946 = vsub.f32 %v922, %v1778
      %v1947 = vsub.f32 %v923, %v1780
      %v1948 = vsub.f32 %v924, %v1782
      %v1949 = vsub.f32 %v925, %v1784
      %v1950 = vsub.f32 %v926, %v1786
      %v1951 = vsub.f32 %v927, %v1788
      %v1952 = vsub.f32 %v928, %v1790
      %v1953 = vsub.f32 %v929, %v1792
      %v1954 = vsub.f32 %v930, %v1794
      %v1955 = vsub.f32 %v931, %v1796
      %v1956 = vsub.f32 %v932, %v1798
      %v1957 = vsub.f32 %v933, %v1800
      %v1958 = vsub.f32 %v934, %v1802
      %v1959 = vsub.f32 %v935, %v1804
      %v1960 = vsub.f32 %v936, %v1806
      %v1961 = vsub.f32 %v937, %v1808
      %v1962 = vsub.f32 %v938, %v1810
      %v1963 = vsub.f32 %v939, %v1812
      %v1964 = vsub.f32 %v940, %v1814
      %v1965 = vsub.f32 %v941, %v1816
      %v1966 = vsub.f32 %v942, %v1818
      %v1967 = vsub.f32 %v943, %v1820
      %v1968 = vsub.f32 %v944, %v1822
      %v1969 = vsub.f32 %v945, %v1824
      %v1970 = vsub.f32 %v946, %v1826
      %v1971 = vsub.f32 %v947, %v1828
      %v1972 = vsub.f32 %v948, %v1830
      %v1973 = vsub.f32 %v949, %v1832
      %v1974 = vsub.f32 %v950, %v1834
      %v1975 = vsub.f32 %v951, %v1836
      %v1976 = vsub.f32 %v952, %v1838
      %v1977 = vsub.f32 %v953, %v1840
      %v1978 = vsub.f32 %v954, %v1842
      %v1979 = vsub.f32 %v955, %v1844
      %v1980 = vsub.f32 %v956, %v1846
      %v1981 = vsub.f32 %v957, %v1848
      %v1982 = vsub.f32 %v958, %v1850
      %v1983 = vsub.f32 %v959, %v1852
      %v1984 = vsub.f32 %v960, %v1854
      %v1985 = vsub.f32 %v961, %v1856
      %v1986 = vsub.f32 %v962, %v1858
      %v1987 = vld [vmem:[%s304] sm:$0xff]
      %v1988 = vld [vmem:[%s304 + $0x8] sm:$0xff]
      %v1989 = vld [vmem:[%s304 + $0x10] sm:$0xff]
      %v1990 = vld [vmem:[%s304 + $0x18] sm:$0xff]
      %v1991 = vld [vmem:[%s304 + $0x20] sm:$0xff]
      %v1992 = vld [vmem:[%s304 + $0x28] sm:$0xff]
      %v1993 = vld [vmem:[%s304 + $0x30] sm:$0xff]
      %v1994 = vld [vmem:[%s304 + $0x38] sm:$0xff]
      %v1995 = vld [vmem:[%s304 + $0x40] sm:$0xff]
      %v1997 = vsel %vm450, %v1987, 0
      %v2000 = vsel %vm450, %v1988, 0
      %v2003 = vsel %vm450, %v1989, 0
      %v2006 = vsel %vm450, %v1990, 0
      %v2009 = vsel %vm450, %v1991, 0
      %v2012 = vsel %vm450, %v1992, 0
      %v2015 = vsel %vm450, %v1993, 0
      %v2018 = vsel %vm450, %v1994, 0
      %v2021 = vsel %vm450, %v1995, 0
      %v2024 = vsel %vm450, %v1859, 0
      %v2027 = vsel %vm450, %v1860, 0
      %v2030 = vsel %vm450, %v1861, 0
      %v2033 = vsel %vm450, %v1862, 0
      %v2036 = vsel %vm450, %v1863, 0
      %v2039 = vsel %vm450, %v1864, 0
      %v2042 = vsel %vm450, %v1865, 0
      %v2045 = vsel %vm450, %v1866, 0
      %v2048 = vsel %vm450, %v1867, 0
      %v2051 = vsel %vm450, %v1868, 0
      %v2054 = vsel %vm450, %v1869, 0
      %v2057 = vsel %vm450, %v1870, 0
      %v2060 = vsel %vm450, %v1871, 0
      %v2063 = vsel %vm450, %v1872, 0
      %v2066 = vsel %vm450, %v1873, 0
      %v2069 = vsel %vm450, %v1874, 0
      %v2072 = vsel %vm450, %v1875, 0
      %v2075 = vsel %vm450, %v1876, 0
      %v2078 = vsel %vm450, %v1877, 0
      %v2081 = vsel %vm450, %v1878, 0
      %v2084 = vsel %vm450, %v1879, 0
      %v2087 = vsel %vm450, %v1880, 0
      %v2090 = vsel %vm450, %v1881, 0
      %v2093 = vsel %vm450, %v1882, 0
      %v2096 = vsel %vm450, %v1883, 0
      %v2099 = vsel %vm450, %v1884, 0
      %v2102 = vsel %vm450, %v1885, 0
      %v2105 = vsel %vm450, %v1886, 0
      %v2108 = vsel %vm450, %v1887, 0
      %v2111 = vsel %vm450, %v1888, 0
      %v2114 = vsel %vm450, %v1889, 0
      %v2117 = vsel %vm450, %v1890, 0
      %v2120 = vsel %vm450, %v1891, 0
      %v2123 = vsel %vm450, %v1892, 0
      %v2126 = vsel %vm450, %v1893, 0
      %v2129 = vsel %vm450, %v1894, 0
      %v2132 = vsel %vm450, %v1895, 0
      %v2135 = vsel %vm450, %v1896, 0
      %v2138 = vsel %vm450, %v1897, 0
      %v2141 = vsel %vm450, %v1898, 0
      %v2144 = vsel %vm450, %v1899, 0
      %v2147 = vsel %vm450, %v1900, 0
      %v2150 = vsel %vm450, %v1901, 0
      %v2153 = vsel %vm450, %v1902, 0
      %v2156 = vsel %vm450, %v1903, 0
      %v2159 = vsel %vm450, %v1904, 0
      %v2162 = vsel %vm450, %v1905, 0
      %v2165 = vsel %vm450, %v1906, 0
      %v2168 = vsel %vm450, %v1907, 0
      %v2171 = vsel %vm450, %v1908, 0
      %v2174 = vsel %vm450, %v1909, 0
      %v2177 = vsel %vm450, %v1910, 0
      %v2180 = vsel %vm450, %v1911, 0
      %v2183 = vsel %vm450, %v1912, 0
      %v2186 = vsel %vm450, %v1913, 0
      %v2189 = vsel %vm450, %v1914, 0
      %v2192 = vsel %vm450, %v1915, 0
      %v2195 = vsel %vm450, %v1916, 0
      %v2198 = vsel %vm450, %v1917, 0
      %v2201 = vsel %vm450, %v1918, 0
      %v2204 = vsel %vm450, %v1919, 0
      %v2207 = vsel %vm450, %v1920, 0
      %v2210 = vsel %vm450, %v1921, 0
      %v2213 = vsel %vm450, %v1922, 0
      %v2216 = vsel %vm450, %v1923, 0
      %v2219 = vsel %vm450, %v1924, 0
      %v2222 = vsel %vm450, %v1925, 0
      %v2225 = vsel %vm450, %v1926, 0
      %v2228 = vsel %vm450, %v1927, 0
      %v2231 = vsel %vm450, %v1928, 0
      %v2234 = vsel %vm450, %v1929, 0
      %v2237 = vsel %vm450, %v1930, 0
      %v2240 = vsel %vm450, %v1931, 0
      %v2243 = vsel %vm450, %v1932, 0
      %v2246 = vsel %vm450, %v1933, 0
      %v2249 = vsel %vm450, %v1934, 0
      %v2252 = vsel %vm450, %v1935, 0
      %v2255 = vsel %vm450, %v1936, 0
      %v2258 = vsel %vm450, %v1937, 0
      %v2261 = vsel %vm450, %v1938, 0
      %v2264 = vsel %vm450, %v1939, 0
      %v2267 = vsel %vm450, %v1940, 0
      %v2270 = vsel %vm450, %v1941, 0
      %v2273 = vsel %vm450, %v1942, 0
      %v2276 = vsel %vm450, %v1943, 0
      %v2279 = vsel %vm450, %v1944, 0
      %v2282 = vsel %vm450, %v1945, 0
      %v2285 = vsel %vm450, %v1946, 0
      %v2288 = vsel %vm450, %v1947, 0
      %v2291 = vsel %vm450, %v1948, 0
      %v2294 = vsel %vm450, %v1949, 0
      %v2297 = vsel %vm450, %v1950, 0
      %v2300 = vsel %vm450, %v1951, 0
      %v2303 = vsel %vm450, %v1952, 0
      %v2306 = vsel %vm450, %v1953, 0
      %v2309 = vsel %vm450, %v1954, 0
      %v2312 = vsel %vm450, %v1955, 0
      %v2315 = vsel %vm450, %v1956, 0
      %v2318 = vsel %vm450, %v1957, 0
      %v2321 = vsel %vm450, %v1958, 0
      %v2324 = vsel %vm450, %v1959, 0
      %v2327 = vsel %vm450, %v1960, 0
      %v2330 = vsel %vm450, %v1961, 0
      %v2333 = vsel %vm450, %v1962, 0
      %v2336 = vsel %vm450, %v1963, 0
      %v2339 = vsel %vm450, %v1964, 0
      %v2342 = vsel %vm450, %v1965, 0
      %v2345 = vsel %vm450, %v1966, 0
      %v2348 = vsel %vm450, %v1967, 0
      %v2351 = vsel %vm450, %v1968, 0
      %v2354 = vsel %vm450, %v1969, 0
      %v2357 = vsel %vm450, %v1970, 0
      %v2360 = vsel %vm450, %v1971, 0
      %v2363 = vsel %vm450, %v1972, 0
      %v2366 = vsel %vm450, %v1973, 0
      %v2369 = vsel %vm450, %v1974, 0
      %v2372 = vsel %vm450, %v1975, 0
      %v2375 = vsel %vm450, %v1976, 0
      %v2378 = vsel %vm450, %v1977, 0
      %v2381 = vsel %vm450, %v1978, 0
      %v2384 = vsel %vm450, %v1979, 0
      %v2387 = vsel %vm450, %v1980, 0
      %v2390 = vsel %vm450, %v1981, 0
      %v2393 = vsel %vm450, %v1982, 0
      %v2396 = vsel %vm450, %v1983, 0
      %v2399 = vsel %vm450, %v1984, 0
      %v2402 = vsel %vm450, %v1985, 0
      %v2405 = vsel %vm450, %v1986, 0
      %2407 = vmatprep.subr.mxu0 0.0
      %2408 = vmatpush1.xpose.msra.mxu0 %v2024
      %2409 = vmatprep.subr.mxu0 0.0
      %2410 = vmatpush1.xpose.msra.mxu0 %v2027
      %2411 = vmatprep.subr.mxu0 0.0
      %2412 = vmatpush1.xpose.msra.mxu0 %v2030
      %2413 = vmatprep.subr.mxu0 0.0
      %2414 = vmatpush1.xpose.msra.mxu0 %v2033
      %2415 = vmatprep.subr.mxu0 0.0
      %2416 = vmatpush1.xpose.msra.mxu0 %v2036
      %2417 = vmatprep.subr.mxu0 0.0
      %2418 = vmatpush1.xpose.msra.mxu0 %v2039
      %2419 = vmatprep.subr.mxu0 0.0
      %2420 = vmatpush1.xpose.msra.mxu0 %v2042
      %2421 = vmatprep.subr.mxu0 0.0
      %2422 = vmatpush1.xpose.msra.mxu0 %v2045
      %2423 = vmatprep.subr.mxu0 0.0
      %2424 = vmatpush1.xpose.msra.mxu0 %v2048
      %2425 = vmatprep.subr.mxu0 0.0
      %2426 = vmatpush1.xpose.msra.mxu0 %v2051
      %2427 = vmatprep.subr.mxu0 0.0
      %2428 = vmatpush1.xpose.msra.mxu0 %v2054
      %2429 = vmatprep.subr.mxu0 0.0
      %2430 = vmatpush1.xpose.msra.mxu0 %v2057
      %2431 = vmatprep.subr.mxu0 0.0
      %2432 = vmatpush1.xpose.msra.mxu0 %v2060
      %2433 = vmatprep.subr.mxu0 0.0
      %2434 = vmatpush1.xpose.msra.mxu0 %v2063
      %2435 = vmatprep.subr.mxu0 0.0
      %2436 = vmatpush1.xpose.msra.mxu0 %v2066
      %2437 = vmatprep.subr.mxu0 0.0
      %2438 = vmatpush1.xpose.msra.mxu0 %v2069
      %2439 = vmatprep.subr.mxu0 0.0
      %2440 = vmatpush1.xpose.msra.mxu0 %v2072
      %2441 = vmatprep.subr.mxu0 0.0
      %2442 = vmatpush1.xpose.msra.mxu0 %v2075
      %2443 = vmatprep.subr.mxu0 0.0
      %2444 = vmatpush1.xpose.msra.mxu0 %v2078
      %2445 = vmatprep.subr.mxu0 0.0
      %2446 = vmatpush1.xpose.msra.mxu0 %v2081
      %2447 = vmatprep.subr.mxu0 0.0
      %2448 = vmatpush1.xpose.msra.mxu0 %v2084
      %2449 = vmatprep.subr.mxu0 0.0
      %2450 = vmatpush1.xpose.msra.mxu0 %v2087
      %2451 = vmatprep.subr.mxu0 0.0
      %2452 = vmatpush1.xpose.msra.mxu0 %v2090
      %2453 = vmatprep.subr.mxu0 0.0
      %2454 = vmatpush1.xpose.msra.mxu0 %v2093
      %2455 = vmatprep.subr.mxu0 0.0
      %2456 = vmatpush1.xpose.msra.mxu0 %v2096
      %2457 = vmatprep.subr.mxu0 0.0
      %2458 = vmatpush1.xpose.msra.mxu0 %v2099
      %2459 = vmatprep.subr.mxu0 0.0
      %2460 = vmatpush1.xpose.msra.mxu0 %v2102
      %2461 = vmatprep.subr.mxu0 0.0
      %2462 = vmatpush1.xpose.msra.mxu0 %v2105
      %2463 = vmatprep.subr.mxu0 0.0
      %2464 = vmatpush1.xpose.msra.mxu0 %v2108
      %2465 = vmatprep.subr.mxu0 0.0
      %2466 = vmatpush1.xpose.msra.mxu0 %v2111
      %2467 = vmatprep.subr.mxu0 0.0
      %2468 = vmatpush1.xpose.msra.mxu0 %v2114
      %2469 = vmatprep.subr.mxu0 0.0
      %2470 = vmatpush1.xpose.msra.mxu0 %v2117
      %2471 = vmatprep.mubr.f32.mxu0 0.0
      %2472 = vmatmul.mubr.f32.gmra.mrb[0].mxu0 %v1997
      %v2473 = vpop.f32.mrb[0].mxu0
      %v2474 = vadd.f32 0.0, %v2473
      %v2475 = vpop.f32.mrb[0].mxu0
      %v2476 = vadd.f32 0.0, %v2475
      %2477 = vmatprep.mubr.f32.mxu0 0.0
      %2478 = vmatmul.mubr.f32.gmra.mrb[0].mxu0 %v2000
      %v2479 = vpop.f32.mrb[0].mxu0
      %v2480 = vadd.f32 0.0, %v2479
      %v2481 = vpop.f32.mrb[0].mxu0
      %v2482 = vadd.f32 0.0, %v2481
      %2483 = vmatprep.mubr.f32.mxu0 0.0
      %2484 = vmatmul.mubr.f32.gmra.mrb[0].mxu0 %v2003
      %v2485 = vpop.f32.mrb[0].mxu0
      %v2486 = vadd.f32 0.0, %v2485
      %v2487 = vpop.f32.mrb[0].mxu0
      %v2488 = vadd.f32 0.0, %v2487
      %2489 = vmatprep.mubr.f32.mxu0 0.0
      %2490 = vmatmul.mubr.f32.gmra.mrb[0].mxu0 %v2006
      %v2491 = vpop.f32.mrb[0].mxu0
      %v2492 = vadd.f32 0.0, %v2491
      %v2493 = vpop.f32.mrb[0].mxu0
      %v2494 = vadd.f32 0.0, %v2493
      %2495 = vmatprep.mubr.f32.mxu0 0.0
      %2496 = vmatmul.mubr.f32.gmra.mrb[0].mxu0 %v2009
      %v2497 = vpop.f32.mrb[0].mxu0
      %v2498 = vadd.f32 0.0, %v2497
      %v2499 = vpop.f32.mrb[0].mxu0
      %v2500 = vadd.f32 0.0, %v2499
      %2501 = vmatprep.mubr.f32.mxu0 0.0
      %2502 = vmatmul.mubr.f32.gmra.mrb[0].mxu0 %v2012
      %v2503 = vpop.f32.mrb[0].mxu0
      %v2504 = vadd.f32 0.0, %v2503
      %v2505 = vpop.f32.mrb[0].mxu0
      %v2506 = vadd.f32 0.0, %v2505
      %2507 = vmatprep.mubr.f32.mxu0 0.0
      %2508 = vmatmul.mubr.f32.gmra.mrb[0].mxu0 %v2015
      %v2509 = vpop.f32.mrb[0].mxu0
      %v2510 = vadd.f32 0.0, %v2509
      %v2511 = vpop.f32.mrb[0].mxu0
      %v2512 = vadd.f32 0.0, %v2511
      %2513 = vmatprep.mubr.f32.mxu0 0.0
      %2514 = vmatmul.mubr.f32.gmra.mrb[0].mxu0 %v2018
      %v2515 = vpop.f32.mrb[0].mxu0
      %v2516 = vadd.f32 0.0, %v2515
      %v2517 = vpop.f32.mrb[0].mxu0
      %v2518 = vadd.f32 0.0, %v2517
      %2519 = vmatprep.mubr.f32.mxu0 0.0
      %2520 = vmatmul.mubr.f32.gmra.mrb[0].mxu0 %v2021
      %v2521 = vpop.f32.mrb[0].mxu0
      %v2522 = vadd.f32 0.0, %v2521
      %v2523 = vpop.f32.mrb[0].mxu0
      %v2524 = vadd.f32 0.0, %v2523
      %2525 = vdwg.mxu0
      %2526 = vmatprep.subr.mxu0 0.0
      %2527 = vmatpush1.xpose.msra.mxu0 %v2120
      %2528 = vmatprep.subr.mxu0 0.0
      %2529 = vmatpush1.xpose.msra.mxu0 %v2123
      %2530 = vmatprep.subr.mxu0 0.0
      %2531 = vmatpush1.xpose.msra.mxu0 %v2126
      %2532 = vmatprep.subr.mxu0 0.0
      %2533 = vmatpush1.xpose.msra.mxu0 %v2129
      %2534 = vmatprep.subr.mxu0 0.0
      %2535 = vmatpush1.xpose.msra.mxu0 %v2132
      %2536 = vmatprep.subr.mxu0 0.0
      %2537 = vmatpush1.xpose.msra.mxu0 %v2135
      %2538 = vmatprep.subr.mxu0 0.0
      %2539 = vmatpush1.xpose.msra.mxu0 %v2138
      %2540 = vmatprep.subr.mxu0 0.0
      %2541 = vmatpush1.xpose.msra.mxu0 %v2141
      %2542 = vmatprep.subr.mxu0 0.0
      %2543 = vmatpush1.xpose.msra.mxu0 %v2144
      %2544 = vmatprep.subr.mxu0 0.0
      %2545 = vmatpush1.xpose.msra.mxu0 %v2147
      %2546 = vmatprep.subr.mxu0 0.0
      %2547 = vmatpush1.xpose.msra.mxu0 %v2150
      %2548 = vmatprep.subr.mxu0 0.0
      %2549 = vmatpush1.xpose.msra.mxu0 %v2153
      %2550 = vmatprep.subr.mxu0 0.0
      %2551 = vmatpush1.xpose.msra.mxu0 %v2156
      %2552 = vmatprep.subr.mxu0 0.0
      %2553 = vmatpush1.xpose.msra.mxu0 %v2159
      %2554 = vmatprep.subr.mxu0 0.0
      %2555 = vmatpush1.xpose.msra.mxu0 %v2162
      %2556 = vmatprep.subr.mxu0 0.0
      %2557 = vmatpush1.xpose.msra.mxu0 %v2165
      %2558 = vmatprep.subr.mxu0 0.0
      %2559 = vmatpush1.xpose.msra.mxu0 %v2168
      %2560 = vmatprep.subr.mxu0 0.0
      %2561 = vmatpush1.xpose.msra.mxu0 %v2171
      %2562 = vmatprep.subr.mxu0 0.0
      %2563 = vmatpush1.xpose.msra.mxu0 %v2174
      %2564 = vmatprep.subr.mxu0 0.0
      %2565 = vmatpush1.xpose.msra.mxu0 %v2177
      %2566 = vmatprep.subr.mxu0 0.0
      %2567 = vmatpush1.xpose.msra.mxu0 %v2180
      %2568 = vmatprep.subr.mxu0 0.0
      %2569 = vmatpush1.xpose.msra.mxu0 %v2183
      %2570 = vmatprep.subr.mxu0 0.0
      %2571 = vmatpush1.xpose.msra.mxu0 %v2186
      %2572 = vmatprep.subr.mxu0 0.0
      %2573 = vmatpush1.xpose.msra.mxu0 %v2189
      %2574 = vmatprep.subr.mxu0 0.0
      %2575 = vmatpush1.xpose.msra.mxu0 %v2192
      %2576 = vmatprep.subr.mxu0 0.0
      %2577 = vmatpush1.xpose.msra.mxu0 %v2195
      %2578 = vmatprep.subr.mxu0 0.0
      %2579 = vmatpush1.xpose.msra.mxu0 %v2198
      %2580 = vmatprep.subr.mxu0 0.0
      %2581 = vmatpush1.xpose.msra.mxu0 %v2201
      %2582 = vmatprep.subr.mxu0 0.0
      %2583 = vmatpush1.xpose.msra.mxu0 %v2204
      %2584 = vmatprep.subr.mxu0 0.0
      %2585 = vmatpush1.xpose.msra.mxu0 %v2207
      %2586 = vmatprep.subr.mxu0 0.0
      %2587 = vmatpush1.xpose.msra.mxu0 %v2210
      %2588 = vmatprep.subr.mxu0 0.0
      %2589 = vmatpush1.xpose.msra.mxu0 %v2213
      %2590 = vmatprep.mubr.f32.mxu0 0.0
      %2591 = vmatmul.mubr.f32.gmra.mrb[0].mxu0 %v1997
      %v2592 = vpop.f32.mrb[0].mxu0
      %v2593 = vadd.f32 0.0, %v2592
      %v2594 = vpop.f32.mrb[0].mxu0
      %v2595 = vadd.f32 0.0, %v2594
      %2596 = vmatprep.mubr.f32.mxu0 0.0
      %2597 = vmatmul.mubr.f32.gmra.mrb[0].mxu0 %v2000
      %v2598 = vpop.f32.mrb[0].mxu0
      %v2599 = vadd.f32 0.0, %v2598
      %v2600 = vpop.f32.mrb[0].mxu0
      %v2601 = vadd.f32 0.0, %v2600
      %2602 = vmatprep.mubr.f32.mxu0 0.0
      %2603 = vmatmul.mubr.f32.gmra.mrb[0].mxu0 %v2003
      %v2604 = vpop.f32.mrb[0].mxu0
      %v2605 = vadd.f32 0.0, %v2604
      %v2606 = vpop.f32.mrb[0].mxu0
      %v2607 = vadd.f32 0.0, %v2606
      %2608 = vmatprep.mubr.f32.mxu0 0.0
      %2609 = vmatmul.mubr.f32.gmra.mrb[0].mxu0 %v2006
      %v2610 = vpop.f32.mrb[0].mxu0
      %v2611 = vadd.f32 0.0, %v2610
      %v2612 = vpop.f32.mrb[0].mxu0
      %v2613 = vadd.f32 0.0, %v2612
      %2614 = vmatprep.mubr.f32.mxu0 0.0
      %2615 = vmatmul.mubr.f32.gmra.mrb[0].mxu0 %v2009
      %v2616 = vpop.f32.mrb[0].mxu0
      %v2617 = vadd.f32 0.0, %v2616
      %v2618 = vpop.f32.mrb[0].mxu0
      %v2619 = vadd.f32 0.0, %v2618
      %2620 = vmatprep.mubr.f32.mxu0 0.0
      %2621 = vmatmul.mubr.f32.gmra.mrb[0].mxu0 %v2012
      %v2622 = vpop.f32.mrb[0].mxu0
      %v2623 = vadd.f32 0.0, %v2622
      %v2624 = vpop.f32.mrb[0].mxu0
      %v2625 = vadd.f32 0.0, %v2624
      %2626 = vmatprep.mubr.f32.mxu0 0.0
      %2627 = vmatmul.mubr.f32.gmra.mrb[0].mxu0 %v2015
      %v2628 = vpop.f32.mrb[0].mxu0
      %v2629 = vadd.f32 0.0, %v2628
      %v2630 = vpop.f32.mrb[0].mxu0
      %v2631 = vadd.f32 0.0, %v2630
      %2632 = vmatprep.mubr.f32.mxu0 0.0
      %2633 = vmatmul.mubr.f32.gmra.mrb[0].mxu0 %v2018
      %v2634 = vpop.f32.mrb[0].mxu0
      %v2635 = vadd.f32 0.0, %v2634
      %v2636 = vpop.f32.mrb[0].mxu0
      %v2637 = vadd.f32 0.0, %v2636
      %2638 = vmatprep.mubr.f32.mxu0 0.0
      %2639 = vmatmul.mubr.f32.gmra.mrb[0].mxu0 %v2021
      %v2640 = vpop.f32.mrb[0].mxu0
      %v2641 = vadd.f32 0.0, %v2640
      %v2642 = vpop.f32.mrb[0].mxu0
      %v2643 = vadd.f32 0.0, %v2642
      %2644 = vdwg.mxu0
      %2645 = vmatprep.subr.mxu0 0.0
      %2646 = vmatpush1.xpose.msra.mxu0 %v2216
      %2647 = vmatprep.subr.mxu0 0.0
      %2648 = vmatpush1.xpose.msra.mxu0 %v2219
      %2649 = vmatprep.subr.mxu0 0.0
      %2650 = vmatpush1.xpose.msra.mxu0 %v2222
      %2651 = vmatprep.subr.mxu0 0.0
      %2652 = vmatpush1.xpose.msra.mxu0 %v2225
      %2653 = vmatprep.subr.mxu0 0.0
      %2654 = vmatpush1.xpose.msra.mxu0 %v2228
      %2655 = vmatprep.subr.mxu0 0.0
      %2656 = vmatpush1.xpose.msra.mxu0 %v2231
      %2657 = vmatprep.subr.mxu0 0.0
      %2658 = vmatpush1.xpose.msra.mxu0 %v2234
      %2659 = vmatprep.subr.mxu0 0.0
      %2660 = vmatpush1.xpose.msra.mxu0 %v2237
      %2661 = vmatprep.subr.mxu0 0.0
      %2662 = vmatpush1.xpose.msra.mxu0 %v2240
      %2663 = vmatprep.subr.mxu0 0.0
      %2664 = vmatpush1.xpose.msra.mxu0 %v2243
      %2665 = vmatprep.subr.mxu0 0.0
      %2666 = vmatpush1.xpose.msra.mxu0 %v2246
      %2667 = vmatprep.subr.mxu0 0.0
      %2668 = vmatpush1.xpose.msra.mxu0 %v2249
      %2669 = vmatprep.subr.mxu0 0.0
      %2670 = vmatpush1.xpose.msra.mxu0 %v2252
      %2671 = vmatprep.subr.mxu0 0.0
      %2672 = vmatpush1.xpose.msra.mxu0 %v2255
      %2673 = vmatprep.subr.mxu0 0.0
      %2674 = vmatpush1.xpose.msra.mxu0 %v2258
      %2675 = vmatprep.subr.mxu0 0.0
      %2676 = vmatpush1.xpose.msra.mxu0 %v2261
      %2677 = vmatprep.subr.mxu0 0.0
      %2678 = vmatpush1.xpose.msra.mxu0 %v2264
      %2679 = vmatprep.subr.mxu0 0.0
      %2680 = vmatpush1.xpose.msra.mxu0 %v2267
      %2681 = vmatprep.subr.mxu0 0.0
      %2682 = vmatpush1.xpose.msra.mxu0 %v2270
      %2683 = vmatprep.subr.mxu0 0.0
      %2684 = vmatpush1.xpose.msra.mxu0 %v2273
      %2685 = vmatprep.subr.mxu0 0.0
      %2686 = vmatpush1.xpose.msra.mxu0 %v2276
      %2687 = vmatprep.subr.mxu0 0.0
      %2688 = vmatpush1.xpose.msra.mxu0 %v2279
      %2689 = vmatprep.subr.mxu0 0.0
      %2690 = vmatpush1.xpose.msra.mxu0 %v2282
      %2691 = vmatprep.subr.mxu0 0.0
      %2692 = vmatpush1.xpose.msra.mxu0 %v2285
      %2693 = vmatprep.subr.mxu0 0.0
      %2694 = vmatpush1.xpose.msra.mxu0 %v2288
      %2695 = vmatprep.subr.mxu0 0.0
      %2696 = vmatpush1.xpose.msra.mxu0 %v2291
      %2697 = vmatprep.subr.mxu0 0.0
      %2698 = vmatpush1.xpose.msra.mxu0 %v2294
      %2699 = vmatprep.subr.mxu0 0.0
      %2700 = vmatpush1.xpose.msra.mxu0 %v2297
      %2701 = vmatprep.subr.mxu0 0.0
      %2702 = vmatpush1.xpose.msra.mxu0 %v2300
      %2703 = vmatprep.subr.mxu0 0.0
      %2704 = vmatpush1.xpose.msra.mxu0 %v2303
      %2705 = vmatprep.subr.mxu0 0.0
      %2706 = vmatpush1.xpose.msra.mxu0 %v2306
      %2707 = vmatprep.subr.mxu0 0.0
      %2708 = vmatpush1.xpose.msra.mxu0 %v2309
      %2709 = vmatprep.mubr.f32.mxu0 0.0
      %2710 = vmatmul.mubr.f32.gmra.mrb[0].mxu0 %v1997
      %v2711 = vpop.f32.mrb[0].mxu0
      %v2712 = vadd.f32 0.0, %v2711
      %v2713 = vpop.f32.mrb[0].mxu0
      %v2714 = vadd.f32 0.0, %v2713
      %2715 = vmatprep.mubr.f32.mxu0 0.0
      %2716 = vmatmul.mubr.f32.gmra.mrb[0].mxu0 %v2000
      %v2717 = vpop.f32.mrb[0].mxu0
      %v2718 = vadd.f32 0.0, %v2717
      %v2719 = vpop.f32.mrb[0].mxu0
      %v2720 = vadd.f32 0.0, %v2719
      %2721 = vmatprep.mubr.f32.mxu0 0.0
      %2722 = vmatmul.mubr.f32.gmra.mrb[0].mxu0 %v2003
      %v2723 = vpop.f32.mrb[0].mxu0
      %v2724 = vadd.f32 0.0, %v2723
      %v2725 = vpop.f32.mrb[0].mxu0
      %v2726 = vadd.f32 0.0, %v2725
      %2727 = vmatprep.mubr.f32.mxu0 0.0
      %2728 = vmatmul.mubr.f32.gmra.mrb[0].mxu0 %v2006
      %v2729 = vpop.f32.mrb[0].mxu0
      %v2730 = vadd.f32 0.0, %v2729
      %v2731 = vpop.f32.mrb[0].mxu0
      %v2732 = vadd.f32 0.0, %v2731
      %2733 = vmatprep.mubr.f32.mxu0 0.0
      %2734 = vmatmul.mubr.f32.gmra.mrb[0].mxu0 %v2009
      %v2735 = vpop.f32.mrb[0].mxu0
      %v2736 = vadd.f32 0.0, %v2735
      %v2737 = vpop.f32.mrb[0].mxu0
      %v2738 = vadd.f32 0.0, %v2737
      %2739 = vmatprep.mubr.f32.mxu0 0.0
      %2740 = vmatmul.mubr.f32.gmra.mrb[0].mxu0 %v2012
      %v2741 = vpop.f32.mrb[0].mxu0
      %v2742 = vadd.f32 0.0, %v2741
      %v2743 = vpop.f32.mrb[0].mxu0
      %v2744 = vadd.f32 0.0, %v2743
      %2745 = vmatprep.mubr.f32.mxu0 0.0
      %2746 = vmatmul.mubr.f32.gmra.mrb[0].mxu0 %v2015
      %v2747 = vpop.f32.mrb[0].mxu0
      %v2748 = vadd.f32 0.0, %v2747
      %v2749 = vpop.f32.mrb[0].mxu0
      %v2750 = vadd.f32 0.0, %v2749
      %2751 = vmatprep.mubr.f32.mxu0 0.0
      %2752 = vmatmul.mubr.f32.gmra.mrb[0].mxu0 %v2018
      %v2753 = vpop.f32.mrb[0].mxu0
      %v2754 = vadd.f32 0.0, %v2753
      %v2755 = vpop.f32.mrb[0].mxu0
      %v2756 = vadd.f32 0.0, %v2755
      %2757 = vmatprep.mubr.f32.mxu0 0.0
      %2758 = vmatmul.mubr.f32.gmra.mrb[0].mxu0 %v2021
      %v2759 = vpop.f32.mrb[0].mxu0
      %v2760 = vadd.f32 0.0, %v2759
      %v2761 = vpop.f32.mrb[0].mxu0
      %v2762 = vadd.f32 0.0, %v2761
      %2763 = vdwg.mxu0
      %2764 = vmatprep.subr.mxu0 0.0
      %2765 = vmatpush1.xpose.msra.mxu0 %v2312
      %2766 = vmatprep.subr.mxu0 0.0
      %2767 = vmatpush1.xpose.msra.mxu0 %v2315
      %2768 = vmatprep.subr.mxu0 0.0
      %2769 = vmatpush1.xpose.msra.mxu0 %v2318
      %2770 = vmatprep.subr.mxu0 0.0
      %2771 = vmatpush1.xpose.msra.mxu0 %v2321
      %2772 = vmatprep.subr.mxu0 0.0
      %2773 = vmatpush1.xpose.msra.mxu0 %v2324
      %2774 = vmatprep.subr.mxu0 0.0
      %2775 = vmatpush1.xpose.msra.mxu0 %v2327
      %2776 = vmatprep.subr.mxu0 0.0
      %2777 = vmatpush1.xpose.msra.mxu0 %v2330
      %2778 = vmatprep.subr.mxu0 0.0
      %2779 = vmatpush1.xpose.msra.mxu0 %v2333
      %2780 = vmatprep.subr.mxu0 0.0
      %2781 = vmatpush1.xpose.msra.mxu0 %v2336
      %2782 = vmatprep.subr.mxu0 0.0
      %2783 = vmatpush1.xpose.msra.mxu0 %v2339
      %2784 = vmatprep.subr.mxu0 0.0
      %2785 = vmatpush1.xpose.msra.mxu0 %v2342
      %2786 = vmatprep.subr.mxu0 0.0
      %2787 = vmatpush1.xpose.msra.mxu0 %v2345
      %2788 = vmatprep.subr.mxu0 0.0
      %2789 = vmatpush1.xpose.msra.mxu0 %v2348
      %2790 = vmatprep.subr.mxu0 0.0
      %2791 = vmatpush1.xpose.msra.mxu0 %v2351
      %2792 = vmatprep.subr.mxu0 0.0
      %2793 = vmatpush1.xpose.msra.mxu0 %v2354
      %2794 = vmatprep.subr.mxu0 0.0
      %2795 = vmatpush1.xpose.msra.mxu0 %v2357
      %2796 = vmatprep.subr.mxu0 0.0
      %2797 = vmatpush1.xpose.msra.mxu0 %v2360
      %2798 = vmatprep.subr.mxu0 0.0
      %2799 = vmatpush1.xpose.msra.mxu0 %v2363
      %2800 = vmatprep.subr.mxu0 0.0
      %2801 = vmatpush1.xpose.msra.mxu0 %v2366
      %2802 = vmatprep.subr.mxu0 0.0
      %2803 = vmatpush1.xpose.msra.mxu0 %v2369
      %2804 = vmatprep.subr.mxu0 0.0
      %2805 = vmatpush1.xpose.msra.mxu0 %v2372
      %2806 = vmatprep.subr.mxu0 0.0
      %2807 = vmatpush1.xpose.msra.mxu0 %v2375
      %2808 = vmatprep.subr.mxu0 0.0
      %2809 = vmatpush1.xpose.msra.mxu0 %v2378
      %2810 = vmatprep.subr.mxu0 0.0
      %2811 = vmatpush1.xpose.msra.mxu0 %v2381
      %2812 = vmatprep.subr.mxu0 0.0
      %2813 = vmatpush1.xpose.msra.mxu0 %v2384
      %2814 = vmatprep.subr.mxu0 0.0
      %2815 = vmatpush1.xpose.msra.mxu0 %v2387
      %2816 = vmatprep.subr.mxu0 0.0
      %2817 = vmatpush1.xpose.msra.mxu0 %v2390
      %2818 = vmatprep.subr.mxu0 0.0
      %2819 = vmatpush1.xpose.msra.mxu0 %v2393
      %2820 = vmatprep.subr.mxu0 0.0
      %2821 = vmatpush1.xpose.msra.mxu0 %v2396
      %2822 = vmatprep.subr.mxu0 0.0
      %2823 = vmatpush1.xpose.msra.mxu0 %v2399
      %2824 = vmatprep.subr.mxu0 0.0
      %2825 = vmatpush1.xpose.msra.mxu0 %v2402
      %2826 = vmatprep.subr.mxu0 0.0
      %2827 = vmatpush1.xpose.msra.mxu0 %v2405
      %2828 = vmatprep.mubr.f32.mxu0 0.0
      %2829 = vmatmul.mubr.f32.gmra.mrb[0].mxu0 %v1997
      %v2830 = vpop.f32.mrb[0].mxu0
      %v2831 = vadd.f32 0.0, %v2830
      %v2832 = vpop.f32.mrb[0].mxu0
      %v2833 = vadd.f32 0.0, %v2832
      %2834 = vmatprep.mubr.f32.mxu0 0.0
      %2835 = vmatmul.mubr.f32.gmra.mrb[0].mxu0 %v2000
      %v2836 = vpop.f32.mrb[0].mxu0
      %v2837 = vadd.f32 0.0, %v2836
      %v2838 = vpop.f32.mrb[0].mxu0
      %v2839 = vadd.f32 0.0, %v2838
      %2840 = vmatprep.mubr.f32.mxu0 0.0
      %2841 = vmatmul.mubr.f32.gmra.mrb[0].mxu0 %v2003
      %v2842 = vpop.f32.mrb[0].mxu0
      %v2843 = vadd.f32 0.0, %v2842
      %v2844 = vpop.f32.mrb[0].mxu0
      %v2845 = vadd.f32 0.0, %v2844
      %2846 = vmatprep.mubr.f32.mxu0 0.0
      %2847 = vmatmul.mubr.f32.gmra.mrb[0].mxu0 %v2006
      %v2848 = vpop.f32.mrb[0].mxu0
      %v2849 = vadd.f32 0.0, %v2848
      %v2850 = vpop.f32.mrb[0].mxu0
      %v2851 = vadd.f32 0.0, %v2850
      %2852 = vmatprep.mubr.f32.mxu0 0.0
      %2853 = vmatmul.mubr.f32.gmra.mrb[0].mxu0 %v2009
      %v2854 = vpop.f32.mrb[0].mxu0
      %v2855 = vadd.f32 0.0, %v2854
      %v2856 = vpop.f32.mrb[0].mxu0
      %v2857 = vadd.f32 0.0, %v2856
      %2858 = vmatprep.mubr.f32.mxu0 0.0
      %2859 = vmatmul.mubr.f32.gmra.mrb[0].mxu0 %v2012
      %v2860 = vpop.f32.mrb[0].mxu0
      %v2861 = vadd.f32 0.0, %v2860
      %v2862 = vpop.f32.mrb[0].mxu0
      %v2863 = vadd.f32 0.0, %v2862
      %2864 = vmatprep.mubr.f32.mxu0 0.0
      %2865 = vmatmul.mubr.f32.gmra.mrb[0].mxu0 %v2015
      %v2866 = vpop.f32.mrb[0].mxu0
      %v2867 = vadd.f32 0.0, %v2866
      %v2868 = vpop.f32.mrb[0].mxu0
      %v2869 = vadd.f32 0.0, %v2868
      %2870 = vmatprep.mubr.f32.mxu0 0.0
      %2871 = vmatmul.mubr.f32.gmra.mrb[0].mxu0 %v2018
      %v2872 = vpop.f32.mrb[0].mxu0
      %v2873 = vadd.f32 0.0, %v2872
      %v2874 = vpop.f32.mrb[0].mxu0
      %v2875 = vadd.f32 0.0, %v2874
      %2876 = vmatprep.mubr.f32.mxu0 0.0
      %2877 = vmatmul.mubr.f32.gmra.mrb[0].mxu0 %v2021
      %v2878 = vpop.f32.mrb[0].mxu0
      %v2879 = vadd.f32 0.0, %v2878
      %v2880 = vpop.f32.mrb[0].mxu0
      %v2881 = vadd.f32 0.0, %v2880
      %2882 = vdwg.mxu0
      %2883 = vst [vmem:[#allocation3] sm:$0xff] %v2474
      %2884 = vst [vmem:[#allocation3 + $0x8] sm:$0xff] %v2476
      %2885 = vst [vmem:[#allocation3 + $0x10] sm:$0xff] %v2593
      %2886 = vst [vmem:[#allocation3 + $0x18] sm:$0xff] %v2595
      %2887 = vst [vmem:[#allocation3 + $0x20] sm:$0xff] %v2712
      %2888 = vst [vmem:[#allocation3 + $0x28] sm:$0xff] %v2714
      %2889 = vst [vmem:[#allocation3 + $0x30] sm:$0xff] %v2831
      %2890 = vst [vmem:[#allocation3 + $0x38] sm:$0xff] %v2833
      %2891 = vst [vmem:[#allocation3 + $0x40] sm:$0xff] %v2480
      %2892 = vst [vmem:[#allocation3 + $0x48] sm:$0xff] %v2482
      %2893 = vst [vmem:[#allocation3 + $0x50] sm:$0xff] %v2599
      %2894 = vst [vmem:[#allocation3 + $0x58] sm:$0xff] %v2601
      %2895 = vst [vmem:[#allocation3 + $0x60] sm:$0xff] %v2718
      %2896 = vst [vmem:[#allocation3 + $0x68] sm:$0xff] %v2720
      %2897 = vst [vmem:[#allocation3 + $0x70] sm:$0xff] %v2837
      %2898 = vst [vmem:[#allocation3 + $0x78] sm:$0xff] %v2839
      %2899 = vst [vmem:[#allocation3 + $0x80] sm:$0xff] %v2486
      %2900 = vst [vmem:[#allocation3 + $0x88] sm:$0xff] %v2488
      %2901 = vst [vmem:[#allocation3 + $0x90] sm:$0xff] %v2605
      %2902 = vst [vmem:[#allocation3 + $0x98] sm:$0xff] %v2607
      %2903 = vst [vmem:[#allocation3 + $0xa0] sm:$0xff] %v2724
      %2904 = vst [vmem:[#allocation3 + $0xa8] sm:$0xff] %v2726
      %2905 = vst [vmem:[#allocation3 + $0xb0] sm:$0xff] %v2843
      %2906 = vst [vmem:[#allocation3 + $0xb8] sm:$0xff] %v2845
      %2907 = vst [vmem:[#allocation3 + $0xc0] sm:$0xff] %v2492
      %2908 = vst [vmem:[#allocation3 + $0xc8] sm:$0xff] %v2494
      %2909 = vst [vmem:[#allocation3 + $0xd0] sm:$0xff] %v2611
      %2910 = vst [vmem:[#allocation3 + $0xd8] sm:$0xff] %v2613
      %2911 = vst [vmem:[#allocation3 + $0xe0] sm:$0xff] %v2730
      %2912 = vst [vmem:[#allocation3 + $0xe8] sm:$0xff] %v2732
      %2913 = vst [vmem:[#allocation3 + $0xf0] sm:$0xff] %v2849
      %2914 = vst [vmem:[#allocation3 + $0xf8] sm:$0xff] %v2851
      %2915 = vst [vmem:[#allocation3 + $0x100] sm:$0xff] %v2498
      %2916 = vst [vmem:[#allocation3 + $0x108] sm:$0xff] %v2500
      %2917 = vst [vmem:[#allocation3 + $0x110] sm:$0xff] %v2617
      %2918 = vst [vmem:[#allocation3 + $0x118] sm:$0xff] %v2619
      %2919 = vst [vmem:[#allocation3 + $0x120] sm:$0xff] %v2736
      %2920 = vst [vmem:[#allocation3 + $0x128] sm:$0xff] %v2738
      %2921 = vst [vmem:[#allocation3 + $0x130] sm:$0xff] %v2855
      %2922 = vst [vmem:[#allocation3 + $0x138] sm:$0xff] %v2857
      %2923 = vst [vmem:[#allocation3 + $0x140] sm:$0xff] %v2504
      %2924 = vst [vmem:[#allocation3 + $0x148] sm:$0xff] %v2506
      %2925 = vst [vmem:[#allocation3 + $0x150] sm:$0xff] %v2623
      %2926 = vst [vmem:[#allocation3 + $0x158] sm:$0xff] %v2625
      %2927 = vst [vmem:[#allocation3 + $0x160] sm:$0xff] %v2742
      %2928 = vst [vmem:[#allocation3 + $0x168] sm:$0xff] %v2744
      %2929 = vst [vmem:[#allocation3 + $0x170] sm:$0xff] %v2861
      %2930 = vst [vmem:[#allocation3 + $0x178] sm:$0xff] %v2863
      %2931 = vst [vmem:[#allocation3 + $0x180] sm:$0xff] %v2510
      %2932 = vst [vmem:[#allocation3 + $0x188] sm:$0xff] %v2512
      %2933 = vst [vmem:[#allocation3 + $0x190] sm:$0xff] %v2629
      %2934 = vst [vmem:[#allocation3 + $0x198] sm:$0xff] %v2631
      %2935 = vst [vmem:[#allocation3 + $0x1a0] sm:$0xff] %v2748
      %2936 = vst [vmem:[#allocation3 + $0x1a8] sm:$0xff] %v2750
      %2937 = vst [vmem:[#allocation3 + $0x1b0] sm:$0xff] %v2867
      %2938 = vst [vmem:[#allocation3 + $0x1b8] sm:$0xff] %v2869
      %2939 = vst [vmem:[#allocation3 + $0x1c0] sm:$0xff] %v2516
      %2940 = vst [vmem:[#allocation3 + $0x1c8] sm:$0xff] %v2518
      %2941 = vst [vmem:[#allocation3 + $0x1d0] sm:$0xff] %v2635
      %2942 = vst [vmem:[#allocation3 + $0x1d8] sm:$0xff] %v2637
      %2943 = vst [vmem:[#allocation3 + $0x1e0] sm:$0xff] %v2754
      %2944 = vst [vmem:[#allocation3 + $0x1e8] sm:$0xff] %v2756
      %2945 = vst [vmem:[#allocation3 + $0x1f0] sm:$0xff] %v2873
      %2946 = vst [vmem:[#allocation3 + $0x1f8] sm:$0xff] %v2875
      %2947 = vst [vmem:[#allocation3 + $0x200] sm:$0xff] %v2522
      %2948 = vst [vmem:[#allocation3 + $0x208] sm:$0xff] %v2524
      %2949 = vst [vmem:[#allocation3 + $0x210] sm:$0xff] %v2641
      %2950 = vst [vmem:[#allocation3 + $0x218] sm:$0xff] %v2643
      %2951 = vst [vmem:[#allocation3 + $0x220] sm:$0xff] %v2760
      %2952 = vst [vmem:[#allocation3 + $0x228] sm:$0xff] %v2762
      %2953 = vst [vmem:[#allocation3 + $0x230] sm:$0xff] %v2879
      %2954 = vst [vmem:[#allocation3 + $0x238] sm:$0xff] %v2881
      %v2955 = vld [vmem:[%s304] sm:$0xff]
      %v2956 = vld [vmem:[%s304 + $0x8] sm:$0xff]
      %v2957 = vld [vmem:[%s304 + $0x10] sm:$0xff]
      %v2958 = vld [vmem:[%s304 + $0x18] sm:$0xff]
      %v2959 = vld [vmem:[%s304 + $0x20] sm:$0xff]
      %v2960 = vld [vmem:[%s304 + $0x28] sm:$0xff]
      %v2961 = vld [vmem:[%s304 + $0x30] sm:$0xff]
      %v2962 = vld [vmem:[%s304 + $0x38] sm:$0xff]
      %v2963 = vld [vmem:[%s304 + $0x40] sm:$0xff]
      %p2964 = scmp.eq.s32.totalorder %s22, 0
      // Predicated region
      $region37: #{_device_costs.1} parent=35 // pred_check
        %p2965 = pneg %p2964
      $region38: #{_device_costs.1} parent=35 // pred_check_branch
        %2967 = sbr.rel (%p2965) target = $region40
      $region39: #{_device_costs.1} parent=35 // pred_region
        %2968 = vst [vmem:[#allocation2] sm:$0xff] -1e+30
        %2969 = vst [vmem:[#allocation2 + $0x8] sm:$0xff] -1e+30
        %2970 = vst [vmem:[#allocation2 + $0x10] sm:$0xff] -1e+30
        %2971 = vst [vmem:[#allocation2 + $0x18] sm:$0xff] -1e+30
        %2972 = vst [vmem:[#allocation2 + $0x20] sm:$0xff] -1e+30
        %2973 = vst [vmem:[#allocation2 + $0x28] sm:$0xff] -1e+30
        %2974 = vst [vmem:[#allocation2 + $0x30] sm:$0xff] -1e+30
        %2975 = vst [vmem:[#allocation2 + $0x38] sm:$0xff] -1e+30
        %2976 = vst [vmem:[#allocation2 + $0x40] sm:$0xff] -1e+30
        %2977 = vst [vmem:[#allocation2 + $0x48] sm:$0xff] -1e+30
        %2978 = vst [vmem:[#allocation2 + $0x50] sm:$0xff] -1e+30
      $region40: #{_device_costs.1} parent=35 // pred_fallthru
        _
      %s2979 = smul.u32 %s22, 8
      %v2980 = vld [vmem:[#allocation3] sm:$0xff]
      %v2981 = vld [vmem:[#allocation3 + $0x40] sm:$0xff]
      %v2982 = vld [vmem:[#allocation3 + $0x80] sm:$0xff]
      %v2983 = vld [vmem:[#allocation3 + $0xc0] sm:$0xff]
      %v2984 = vld [vmem:[#allocation3 + $0x100] sm:$0xff]
      %v2985 = vld [vmem:[#allocation3 + $0x140] sm:$0xff]
      %v2986 = vld [vmem:[#allocation3 + $0x180] sm:$0xff]
      %v2987 = vld [vmem:[#allocation3 + $0x1c0] sm:$0xff]
      %v2988 = vld [vmem:[#allocation3 + $0x200] sm:$0xff]
      %v2989 = vld [vmem:[#allocation2 + $0x10] sm:$0xff]
      %v2990 = vld [vmem:[#allocation2 + $0x18] sm:$0xff]
      %v2991 = vld [vmem:[#allocation2 + $0x20] sm:$0xff]
      %v2992 = vld [vmem:[#allocation2 + $0x28] sm:$0xff]
      %v2993 = vld [vmem:[#allocation2 + $0x30] sm:$0xff]
      %v2994 = vld [vmem:[#allocation2 + $0x38] sm:$0xff]
      %v2995 = vld [vmem:[#allocation2 + $0x40] sm:$0xff]
      %v2996 = vld [vmem:[#allocation2 + $0x48] sm:$0xff]
      %v2997 = vld [vmem:[#allocation2 + $0x50] sm:$0xff]
      %v2998 = vld [vmem:[#allocation2 + $0x8] sm:$0xff]
      %v2999 = vld [vmem:[#allocation2 + $0x10] sm:$0xff]
      %v3000 = vld [vmem:[#allocation2 + $0x18] sm:$0xff]
      %v3001 = vld [vmem:[#allocation2 + $0x20] sm:$0xff]
      %v3002 = vld [vmem:[#allocation2 + $0x28] sm:$0xff]
      %v3003 = vld [vmem:[#allocation2 + $0x30] sm:$0xff]
      %v3004 = vld [vmem:[#allocation2 + $0x38] sm:$0xff]
      %v3005 = vld [vmem:[#allocation2 + $0x40] sm:$0xff]
      %v3006 = vld [vmem:[#allocation2 + $0x48] sm:$0xff]
      %v3007 = vld [vmem:[#allocation2] sm:$0xff]
      %3009 = vset.pattern.permute.xlu0 32
      %3010 = vperm.xlu0 %3009, %v2955
      %v3011 = vpop.permute.xlu0 %3010
      %3014 = vset.pattern.permute.xlu0 32
      %3015 = vperm.xlu0 %3014, %v2956
      %v3016 = vpop.permute.xlu0 %3015
      %3019 = vset.pattern.permute.xlu0 32
      %3020 = vperm.xlu0 %3019, %v2957
      %v3021 = vpop.permute.xlu0 %3020
      %3024 = vset.pattern.permute.xlu0 32
      %3025 = vperm.xlu0 %3024, %v2958
      %v3026 = vpop.permute.xlu0 %3025
      %3029 = vset.pattern.permute.xlu0 32
      %3030 = vperm.xlu0 %3029, %v2959
      %v3031 = vpop.permute.xlu0 %3030
      %3034 = vset.pattern.permute.xlu0 32
      %3035 = vperm.xlu0 %3034, %v2960
      %v3036 = vpop.permute.xlu0 %3035
      %3039 = vset.pattern.permute.xlu0 32
      %3040 = vperm.xlu0 %3039, %v2961
      %v3041 = vpop.permute.xlu0 %3040
      %3044 = vset.pattern.permute.xlu0 32
      %3045 = vperm.xlu0 %3044, %v2962
      %v3046 = vpop.permute.xlu0 %3045
      %3049 = vset.pattern.permute.xlu0 32
      %3050 = vperm.xlu0 %3049, %v2963
      %v3051 = vpop.permute.xlu0 %3050
      %v3053 = vadd.f32 %v3007, %v3011
      %v3054 = vadd.f32 %v2998, %v3016
      %v3055 = vadd.f32 %v2999, %v3021
      %v3056 = vadd.f32 %v3000, %v3026
      %v3057 = vadd.f32 %v3001, %v3031
      %v3058 = vadd.f32 %v3002, %v3036
      %v3059 = vadd.f32 %v3003, %v3041
      %v3060 = vadd.f32 %v3004, %v3046
      %v3061 = vadd.f32 %v3005, %v3051
      %v3062 = vmax.f32 %v2989, %v2998
      %v3063 = vmax.f32 %v2990, %v2999
      %v3064 = vmax.f32 %v2991, %v3000
      %v3065 = vmax.f32 %v2992, %v3001
      %v3066 = vmax.f32 %v2993, %v3002
      %v3067 = vmax.f32 %v2994, %v3003
      %v3068 = vmax.f32 %v2995, %v3004
      %v3069 = vmax.f32 %v2996, %v3005
      %v3070 = vmax.f32 %v2997, %v3006
      %v3071 = vmax.f32 %v3062, %v3053
      %v3072 = vmax.f32 %v3063, %v3054
      %v3073 = vmax.f32 %v3064, %v3055
      %v3074 = vmax.f32 %v3065, %v3056
      %v3075 = vmax.f32 %v3066, %v3057
      %v3076 = vmax.f32 %v3067, %v3058
      %v3077 = vmax.f32 %v3068, %v3059
      %v3078 = vmax.f32 %v3069, %v3060
      %v3079 = vmax.f32 %v3070, %v3061
      %v3080 = vsub.f32 %v2989, %v3071
      %v3081 = vsub.f32 %v2990, %v3072
      %v3082 = vsub.f32 %v2991, %v3073
      %v3083 = vsub.f32 %v2992, %v3074
      %v3084 = vsub.f32 %v2993, %v3075
      %v3085 = vsub.f32 %v2994, %v3076
      %v3086 = vsub.f32 %v2995, %v3077
      %v3087 = vsub.f32 %v2996, %v3078
      %v3088 = vsub.f32 %v2997, %v3079
      %v3089 = vmul.f32 %v3080, 1.442695
      %v3090 = vpow.pop %v3089
      %v3091 = vmul.f32 %v3081, 1.442695
      %v3092 = vpow.pop %v3091
      %v3093 = vmul.f32 %v3082, 1.442695
      %v3094 = vpow.pop %v3093
      %v3095 = vmul.f32 %v3083, 1.442695
      %v3096 = vpow.pop %v3095
      %v3097 = vmul.f32 %v3084, 1.442695
      %v3098 = vpow.pop %v3097
      %v3099 = vmul.f32 %v3085, 1.442695
      %v3100 = vpow.pop %v3099
      %v3101 = vmul.f32 %v3086, 1.442695
      %v3102 = vpow.pop %v3101
      %v3103 = vmul.f32 %v3087, 1.442695
      %v3104 = vpow.pop %v3103
      %v3105 = vmul.f32 %v3088, 1.442695
      %v3106 = vpow.pop %v3105
      %v3107 = vsub.f32 %v2998, %v3071
      %v3108 = vsub.f32 %v2999, %v3072
      %v3109 = vsub.f32 %v3000, %v3073
      %v3110 = vsub.f32 %v3001, %v3074
      %v3111 = vsub.f32 %v3002, %v3075
      %v3112 = vsub.f32 %v3003, %v3076
      %v3113 = vsub.f32 %v3004, %v3077
      %v3114 = vsub.f32 %v3005, %v3078
      %v3115 = vsub.f32 %v3006, %v3079
      %v3116 = vmul.f32 %v3107, 1.442695
      %v3117 = vpow.pop %v3116
      %v3118 = vmul.f32 %v3108, 1.442695
      %v3119 = vpow.pop %v3118
      %v3120 = vmul.f32 %v3109, 1.442695
      %v3121 = vpow.pop %v3120
      %v3122 = vmul.f32 %v3110, 1.442695
      %v3123 = vpow.pop %v3122
      %v3124 = vmul.f32 %v3111, 1.442695
      %v3125 = vpow.pop %v3124
      %v3126 = vmul.f32 %v3112, 1.442695
      %v3127 = vpow.pop %v3126
      %v3128 = vmul.f32 %v3113, 1.442695
      %v3129 = vpow.pop %v3128
      %v3130 = vmul.f32 %v3114, 1.442695
      %v3131 = vpow.pop %v3130
      %v3132 = vmul.f32 %v3115, 1.442695
      %v3133 = vpow.pop %v3132
      %v3134 = vadd.f32 %v3090, %v3117
      %v3135 = vadd.f32 %v3092, %v3119
      %v3136 = vadd.f32 %v3094, %v3121
      %v3137 = vadd.f32 %v3096, %v3123
      %v3138 = vadd.f32 %v3098, %v3125
      %v3139 = vadd.f32 %v3100, %v3127
      %v3140 = vadd.f32 %v3102, %v3129
      %v3141 = vadd.f32 %v3104, %v3131
      %v3142 = vadd.f32 %v3106, %v3133
      %v3143 = vsub.f32 %v3053, %v3071
      %v3144 = vsub.f32 %v3054, %v3072
      %v3145 = vsub.f32 %v3055, %v3073
      %v3146 = vsub.f32 %v3056, %v3074
      %v3147 = vsub.f32 %v3057, %v3075
      %v3148 = vsub.f32 %v3058, %v3076
      %v3149 = vsub.f32 %v3059, %v3077
      %v3150 = vsub.f32 %v3060, %v3078
      %v3151 = vsub.f32 %v3061, %v3079
      %v3152 = vmul.f32 %v3143, 1.442695
      %v3153 = vpow.pop %v3152
      %v3154 = vmul.f32 %v3144, 1.442695
      %v3155 = vpow.pop %v3154
      %v3156 = vmul.f32 %v3145, 1.442695
      %v3157 = vpow.pop %v3156
      %v3158 = vmul.f32 %v3146, 1.442695
      %v3159 = vpow.pop %v3158
      %v3160 = vmul.f32 %v3147, 1.442695
      %v3161 = vpow.pop %v3160
      %v3162 = vmul.f32 %v3148, 1.442695
      %v3163 = vpow.pop %v3162
      %v3164 = vmul.f32 %v3149, 1.442695
      %v3165 = vpow.pop %v3164
      %v3166 = vmul.f32 %v3150, 1.442695
      %v3167 = vpow.pop %v3166
      %v3168 = vmul.f32 %v3151, 1.442695
      %v3169 = vpow.pop %v3168
      %v3170 = vadd.f32 %v3134, %v3153
      %v3171 = vadd.f32 %v3135, %v3155
      %v3172 = vadd.f32 %v3136, %v3157
      %v3173 = vadd.f32 %v3137, %v3159
      %v3174 = vadd.f32 %v3138, %v3161
      %v3175 = vadd.f32 %v3139, %v3163
      %v3176 = vadd.f32 %v3140, %v3165
      %v3177 = vadd.f32 %v3141, %v3167
      %v3178 = vadd.f32 %v3142, %v3169
      %v3179 = vlog2.pop %v3170
      %v3180 = vmul.f32 %v3179, 0.6931472
      %v3181 = vlog2.pop %v3171
      %v3182 = vmul.f32 %v3181, 0.6931472
      %v3183 = vlog2.pop %v3172
      %v3184 = vmul.f32 %v3183, 0.6931472
      %v3185 = vlog2.pop %v3173
      %v3186 = vmul.f32 %v3185, 0.6931472
      %v3187 = vlog2.pop %v3174
      %v3188 = vmul.f32 %v3187, 0.6931472
      %v3189 = vlog2.pop %v3175
      %v3190 = vmul.f32 %v3189, 0.6931472
      %v3191 = vlog2.pop %v3176
      %v3192 = vmul.f32 %v3191, 0.6931472
      %v3193 = vlog2.pop %v3177
      %v3194 = vmul.f32 %v3193, 0.6931472
      %v3195 = vlog2.pop %v3178
      %v3196 = vmul.f32 %v3195, 0.6931472
      %v3197 = vadd.f32 %v3071, %v3180
      %v3198 = vadd.f32 %v3072, %v3182
      %v3199 = vadd.f32 %v3073, %v3184
      %v3200 = vadd.f32 %v3074, %v3186
      %v3201 = vadd.f32 %v3075, %v3188
      %v3202 = vadd.f32 %v3076, %v3190
      %v3203 = vadd.f32 %v3077, %v3192
      %v3204 = vadd.f32 %v3078, %v3194
      %v3205 = vadd.f32 %v3079, %v3196
      %v3206 = vadd.f32 %v2980, %v3197
      %v3207 = vadd.f32 %v2981, %v3198
      %v3208 = vadd.f32 %v2982, %v3199
      %v3209 = vadd.f32 %v2983, %v3200
      %v3210 = vadd.f32 %v2984, %v3201
      %v3211 = vadd.f32 %v2985, %v3202
      %v3212 = vadd.f32 %v2986, %v3203
      %v3213 = vadd.f32 %v2987, %v3204
      %v3214 = vadd.f32 %v2988, %v3205
      %v3215 = vmax.f32 %v3206, -1e+30
      %v3216 = vmax.f32 %v3207, -1e+30
      %v3217 = vmax.f32 %v3208, -1e+30
      %v3218 = vmax.f32 %v3209, -1e+30
      %v3219 = vmax.f32 %v3210, -1e+30
      %v3220 = vmax.f32 %v3211, -1e+30
      %v3221 = vmax.f32 %v3212, -1e+30
      %v3222 = vmax.f32 %v3213, -1e+30
      %v3223 = vmax.f32 %v3214, -1e+30
      %3224 = vset.pattern.permute.xlu0 36
      %3225 = vperm.xlu0 %3224, %v2955
      %v3226 = vpop.permute.xlu0 %3225
      %3228 = vset.pattern.permute.xlu0 36
      %3229 = vperm.xlu0 %3228, %v2956
      %v3230 = vpop.permute.xlu0 %3229
      %3232 = vset.pattern.permute.xlu0 36
      %3233 = vperm.xlu0 %3232, %v2957
      %v3234 = vpop.permute.xlu0 %3233
      %3236 = vset.pattern.permute.xlu0 36
      %3237 = vperm.xlu0 %3236, %v2958
      %v3238 = vpop.permute.xlu0 %3237
      %3240 = vset.pattern.permute.xlu0 36
      %3241 = vperm.xlu0 %3240, %v2959
      %v3242 = vpop.permute.xlu0 %3241
      %3244 = vset.pattern.permute.xlu0 36
      %3245 = vperm.xlu0 %3244, %v2960
      %v3246 = vpop.permute.xlu0 %3245
      %3248 = vset.pattern.permute.xlu0 36
      %3249 = vperm.xlu0 %3248, %v2961
      %v3250 = vpop.permute.xlu0 %3249
      %3252 = vset.pattern.permute.xlu0 36
      %3253 = vperm.xlu0 %3252, %v2962
      %v3254 = vpop.permute.xlu0 %3253
      %3256 = vset.pattern.permute.xlu0 36
      %3257 = vperm.xlu0 %3256, %v2963
      %v3258 = vpop.permute.xlu0 %3257
      %v3260 = vadd.f32 %v2980, %v3226
      %v3261 = vadd.f32 %v2981, %v3230
      %v3262 = vadd.f32 %v2982, %v3234
      %v3263 = vadd.f32 %v2983, %v3238
      %v3264 = vadd.f32 %v2984, %v3242
      %v3265 = vadd.f32 %v2985, %v3246
      %v3266 = vadd.f32 %v2986, %v3250
      %v3267 = vadd.f32 %v2987, %v3254
      %v3268 = vadd.f32 %v2988, %v3258
      %v3269 = vmax.f32 %v3260, -1e+30
      %v3270 = vmax.f32 %v3261, -1e+30
      %v3271 = vmax.f32 %v3262, -1e+30
      %v3272 = vmax.f32 %v3263, -1e+30
      %v3273 = vmax.f32 %v3264, -1e+30
      %v3274 = vmax.f32 %v3265, -1e+30
      %v3275 = vmax.f32 %v3266, -1e+30
      %v3276 = vmax.f32 %v3267, -1e+30
      %v3277 = vmax.f32 %v3268, -1e+30
      %p3278 = scmp.eq.s32.totalorder %s2979, 0
      %s3279 = scalar_select %p3278, 1, 0
      %v3280 = vstv %s3279
      %vm3281 = vcmp.eq.s32.totalorder %v3280, 1
      %v3282 = vsel %vm3281, %v3269, %v3215
      %v3283 = vsel %vm3281, %v3270, %v3216
      %v3284 = vsel %vm3281, %v3271, %v3217
      %v3285 = vsel %vm3281, %v3272, %v3218
      %v3286 = vsel %vm3281, %v3273, %v3219
      %v3287 = vsel %vm3281, %v3274, %v3220
      %v3288 = vsel %vm3281, %v3275, %v3221
      %v3289 = vsel %vm3281, %v3276, %v3222
      %v3290 = vsel %vm3281, %v3277, %v3223
      %3291 = vst [vmem:[#allocation2 + $0x10] sm:$0xff] %v3282
      %3292 = vst [vmem:[#allocation2 + $0x18] sm:$0xff] %v3283
      %3293 = vst [vmem:[#allocation2 + $0x20] sm:$0xff] %v3284
      %3294 = vst [vmem:[#allocation2 + $0x28] sm:$0xff] %v3285
      %3295 = vst [vmem:[#allocation2 + $0x30] sm:$0xff] %v3286
      %3296 = vst [vmem:[#allocation2 + $0x38] sm:$0xff] %v3287
      %3297 = vst [vmem:[#allocation2 + $0x40] sm:$0xff] %v3288
      %3298 = vst [vmem:[#allocation2 + $0x48] sm:$0xff] %v3289
      %3299 = vst [vmem:[#allocation2 + $0x50] sm:$0xff] %v3290
      %v3300 = vld [vmem:[#allocation3 + $0x8] sm:$0xff]
      %v3301 = vld [vmem:[#allocation3 + $0x48] sm:$0xff]
      %v3302 = vld [vmem:[#allocation3 + $0x88] sm:$0xff]
      %v3303 = vld [vmem:[#allocation3 + $0xc8] sm:$0xff]
      %v3304 = vld [vmem:[#allocation3 + $0x108] sm:$0xff]
      %v3305 = vld [vmem:[#allocation3 + $0x148] sm:$0xff]
      %v3306 = vld [vmem:[#allocation3 + $0x188] sm:$0xff]
      %v3307 = vld [vmem:[#allocation3 + $0x1c8] sm:$0xff]
      %v3308 = vld [vmem:[#allocation3 + $0x208] sm:$0xff]
      %v3309 = vld [vmem:[#allocation2 + $0x10] sm:$0xff]
      %v3310 = vld [vmem:[#allocation2 + $0x18] sm:$0xff]
      %v3311 = vld [vmem:[#allocation2 + $0x20] sm:$0xff]
      %v3312 = vld [vmem:[#allocation2 + $0x28] sm:$0xff]
      %v3313 = vld [vmem:[#allocation2 + $0x30] sm:$0xff]
      %v3314 = vld [vmem:[#allocation2 + $0x38] sm:$0xff]
      %v3315 = vld [vmem:[#allocation2 + $0x40] sm:$0xff]
      %v3316 = vld [vmem:[#allocation2 + $0x48] sm:$0xff]
      %v3317 = vld [vmem:[#allocation2 + $0x50] sm:$0xff]
      %v3318 = vld [vmem:[#allocation2 + $0x8] sm:$0xff]
      %v3319 = vld [vmem:[#allocation2 + $0x10] sm:$0xff]
      %v3320 = vld [vmem:[#allocation2 + $0x18] sm:$0xff]
      %v3321 = vld [vmem:[#allocation2 + $0x20] sm:$0xff]
      %v3322 = vld [vmem:[#allocation2 + $0x28] sm:$0xff]
      %v3323 = vld [vmem:[#allocation2 + $0x30] sm:$0xff]
      %v3324 = vld [vmem:[#allocation2 + $0x38] sm:$0xff]
      %v3325 = vld [vmem:[#allocation2 + $0x40] sm:$0xff]
      %v3326 = vld [vmem:[#allocation2 + $0x48] sm:$0xff]
      %v3327 = vld [vmem:[#allocation2] sm:$0xff]
      %v3328 = vadd.f32 %v3327, %v3011
      %v3329 = vadd.f32 %v3318, %v3016
      %v3330 = vadd.f32 %v3319, %v3021
      %v3331 = vadd.f32 %v3320, %v3026
      %v3332 = vadd.f32 %v3321, %v3031
      %v3333 = vadd.f32 %v3322, %v3036
      %v3334 = vadd.f32 %v3323, %v3041
      %v3335 = vadd.f32 %v3324, %v3046
      %v3336 = vadd.f32 %v3325, %v3051
      %v3337 = vmax.f32 %v3309, %v3318
      %v3338 = vmax.f32 %v3310, %v3319
      %v3339 = vmax.f32 %v3311, %v3320
      %v3340 = vmax.f32 %v3312, %v3321
      %v3341 = vmax.f32 %v3313, %v3322
      %v3342 = vmax.f32 %v3314, %v3323
      %v3343 = vmax.f32 %v3315, %v3324
      %v3344 = vmax.f32 %v3316, %v3325
      %v3345 = vmax.f32 %v3317, %v3326
      %v3346 = vmax.f32 %v3337, %v3328
      %v3347 = vmax.f32 %v3338, %v3329
      %v3348 = vmax.f32 %v3339, %v3330
      %v3349 = vmax.f32 %v3340, %v3331
      %v3350 = vmax.f32 %v3341, %v3332
      %v3351 = vmax.f32 %v3342, %v3333
      %v3352 = vmax.f32 %v3343, %v3334
      %v3353 = vmax.f32 %v3344, %v3335
      %v3354 = vmax.f32 %v3345, %v3336
      %v3355 = vsub.f32 %v3309, %v3346
      %v3356 = vsub.f32 %v3310, %v3347
      %v3357 = vsub.f32 %v3311, %v3348
      %v3358 = vsub.f32 %v3312, %v3349
      %v3359 = vsub.f32 %v3313, %v3350
      %v3360 = vsub.f32 %v3314, %v3351
      %v3361 = vsub.f32 %v3315, %v3352
      %v3362 = vsub.f32 %v3316, %v3353
      %v3363 = vsub.f32 %v3317, %v3354
      %v3364 = vmul.f32 %v3355, 1.442695
      %v3365 = vpow.pop %v3364
      %v3366 = vmul.f32 %v3356, 1.442695
      %v3367 = vpow.pop %v3366
      %v3368 = vmul.f32 %v3357, 1.442695
      %v3369 = vpow.pop %v3368
      %v3370 = vmul.f32 %v3358, 1.442695
      %v3371 = vpow.pop %v3370
      %v3372 = vmul.f32 %v3359, 1.442695
      %v3373 = vpow.pop %v3372
      %v3374 = vmul.f32 %v3360, 1.442695
      %v3375 = vpow.pop %v3374
      %v3376 = vmul.f32 %v3361, 1.442695
      %v3377 = vpow.pop %v3376
      %v3378 = vmul.f32 %v3362, 1.442695
      %v3379 = vpow.pop %v3378
      %v3380 = vmul.f32 %v3363, 1.442695
      %v3381 = vpow.pop %v3380
      %v3382 = vsub.f32 %v3318, %v3346
      %v3383 = vsub.f32 %v3319, %v3347
      %v3384 = vsub.f32 %v3320, %v3348
      %v3385 = vsub.f32 %v3321, %v3349
      %v3386 = vsub.f32 %v3322, %v3350
      %v3387 = vsub.f32 %v3323, %v3351
      %v3388 = vsub.f32 %v3324, %v3352
      %v3389 = vsub.f32 %v3325, %v3353
      %v3390 = vsub.f32 %v3326, %v3354
      %v3391 = vmul.f32 %v3382, 1.442695
      %v3392 = vpow.pop %v3391
      %v3393 = vmul.f32 %v3383, 1.442695
      %v3394 = vpow.pop %v3393
      %v3395 = vmul.f32 %v3384, 1.442695
      %v3396 = vpow.pop %v3395
      %v3397 = vmul.f32 %v3385, 1.442695
      %v3398 = vpow.pop %v3397
      %v3399 = vmul.f32 %v3386, 1.442695
      %v3400 = vpow.pop %v3399
      %v3401 = vmul.f32 %v3387, 1.442695
      %v3402 = vpow.pop %v3401
      %v3403 = vmul.f32 %v3388, 1.442695
      %v3404 = vpow.pop %v3403
      %v3405 = vmul.f32 %v3389, 1.442695
      %v3406 = vpow.pop %v3405
      %v3407 = vmul.f32 %v3390, 1.442695
      %v3408 = vpow.pop %v3407
      %v3409 = vadd.f32 %v3365, %v3392
      %v3410 = vadd.f32 %v3367, %v3394
      %v3411 = vadd.f32 %v3369, %v3396
      %v3412 = vadd.f32 %v3371, %v3398
      %v3413 = vadd.f32 %v3373, %v3400
      %v3414 = vadd.f32 %v3375, %v3402
      %v3415 = vadd.f32 %v3377, %v3404
      %v3416 = vadd.f32 %v3379, %v3406
      %v3417 = vadd.f32 %v3381, %v3408
      %v3418 = vsub.f32 %v3328, %v3346
      %v3419 = vsub.f32 %v3329, %v3347
      %v3420 = vsub.f32 %v3330, %v3348
      %v3421 = vsub.f32 %v3331, %v3349
      %v3422 = vsub.f32 %v3332, %v3350
      %v3423 = vsub.f32 %v3333, %v3351
      %v3424 = vsub.f32 %v3334, %v3352
      %v3425 = vsub.f32 %v3335, %v3353
      %v3426 = vsub.f32 %v3336, %v3354
      %v3427 = vmul.f32 %v3418, 1.442695
      %v3428 = vpow.pop %v3427
      %v3429 = vmul.f32 %v3419, 1.442695
      %v3430 = vpow.pop %v3429
      %v3431 = vmul.f32 %v3420, 1.442695
      %v3432 = vpow.pop %v3431
      %v3433 = vmul.f32 %v3421, 1.442695
      %v3434 = vpow.pop %v3433
      %v3435 = vmul.f32 %v3422, 1.442695
      %v3436 = vpow.pop %v3435
      %v3437 = vmul.f32 %v3423, 1.442695
      %v3438 = vpow.pop %v3437
      %v3439 = vmul.f32 %v3424, 1.442695
      %v3440 = vpow.pop %v3439
      %v3441 = vmul.f32 %v3425, 1.442695
      %v3442 = vpow.pop %v3441
      %v3443 = vmul.f32 %v3426, 1.442695
      %v3444 = vpow.pop %v3443
      %v3445 = vadd.f32 %v3409, %v3428
      %v3446 = vadd.f32 %v3410, %v3430
      %v3447 = vadd.f32 %v3411, %v3432
      %v3448 = vadd.f32 %v3412, %v3434
      %v3449 = vadd.f32 %v3413, %v3436
      %v3450 = vadd.f32 %v3414, %v3438
      %v3451 = vadd.f32 %v3415, %v3440
      %v3452 = vadd.f32 %v3416, %v3442
      %v3453 = vadd.f32 %v3417, %v3444
      %v3454 = vlog2.pop %v3445
      %v3455 = vmul.f32 %v3454, 0.6931472
      %v3456 = vlog2.pop %v3446
      %v3457 = vmul.f32 %v3456, 0.6931472
      %v3458 = vlog2.pop %v3447
      %v3459 = vmul.f32 %v3458, 0.6931472
      %v3460 = vlog2.pop %v3448
      %v3461 = vmul.f32 %v3460, 0.6931472
      %v3462 = vlog2.pop %v3449
      %v3463 = vmul.f32 %v3462, 0.6931472
      %v3464 = vlog2.pop %v3450
      %v3465 = vmul.f32 %v3464, 0.6931472
      %v3466 = vlog2.pop %v3451
      %v3467 = vmul.f32 %v3466, 0.6931472
      %v3468 = vlog2.pop %v3452
      %v3469 = vmul.f32 %v3468, 0.6931472
      %v3470 = vlog2.pop %v3453
      %v3471 = vmul.f32 %v3470, 0.6931472
      %v3472 = vadd.f32 %v3346, %v3455
      %v3473 = vadd.f32 %v3347, %v3457
      %v3474 = vadd.f32 %v3348, %v3459
      %v3475 = vadd.f32 %v3349, %v3461
      %v3476 = vadd.f32 %v3350, %v3463
      %v3477 = vadd.f32 %v3351, %v3465
      %v3478 = vadd.f32 %v3352, %v3467
      %v3479 = vadd.f32 %v3353, %v3469
      %v3480 = vadd.f32 %v3354, %v3471
      %v3481 = vadd.f32 %v3300, %v3472
      %v3482 = vadd.f32 %v3301, %v3473
      %v3483 = vadd.f32 %v3302, %v3474
      %v3484 = vadd.f32 %v3303, %v3475
      %v3485 = vadd.f32 %v3304, %v3476
      %v3486 = vadd.f32 %v3305, %v3477
      %v3487 = vadd.f32 %v3306, %v3478
      %v3488 = vadd.f32 %v3307, %v3479
      %v3489 = vadd.f32 %v3308, %v3480
      %v3490 = vmax.f32 %v3481, -1e+30
      %v3491 = vmax.f32 %v3482, -1e+30
      %v3492 = vmax.f32 %v3483, -1e+30
      %v3493 = vmax.f32 %v3484, -1e+30
      %v3494 = vmax.f32 %v3485, -1e+30
      %v3495 = vmax.f32 %v3486, -1e+30
      %v3496 = vmax.f32 %v3487, -1e+30
      %v3497 = vmax.f32 %v3488, -1e+30
      %v3498 = vmax.f32 %v3489, -1e+30
      %3499 = vst [vmem:[#allocation2 + $0x10] sm:$0xff] %v3490
      %3500 = vst [vmem:[#allocation2 + $0x18] sm:$0xff] %v3491
      %3501 = vst [vmem:[#allocation2 + $0x20] sm:$0xff] %v3492
      %3502 = vst [vmem:[#allocation2 + $0x28] sm:$0xff] %v3493
      %3503 = vst [vmem:[#allocation2 + $0x30] sm:$0xff] %v3494
      %3504 = vst [vmem:[#allocation2 + $0x38] sm:$0xff] %v3495
      %3505 = vst [vmem:[#allocation2 + $0x40] sm:$0xff] %v3496
      %3506 = vst [vmem:[#allocation2 + $0x48] sm:$0xff] %v3497
      %3507 = vst [vmem:[#allocation2 + $0x50] sm:$0xff] %v3498
      %v3508 = vld [vmem:[#allocation3 + $0x10] sm:$0xff]
      %v3509 = vld [vmem:[#allocation3 + $0x50] sm:$0xff]
      %v3510 = vld [vmem:[#allocation3 + $0x90] sm:$0xff]
      %v3511 = vld [vmem:[#allocation3 + $0xd0] sm:$0xff]
      %v3512 = vld [vmem:[#allocation3 + $0x110] sm:$0xff]
      %v3513 = vld [vmem:[#allocation3 + $0x150] sm:$0xff]
      %v3514 = vld [vmem:[#allocation3 + $0x190] sm:$0xff]
      %v3515 = vld [vmem:[#allocation3 + $0x1d0] sm:$0xff]
      %v3516 = vld [vmem:[#allocation3 + $0x210] sm:$0xff]
      %v3517 = vld [vmem:[#allocation2 + $0x10] sm:$0xff]
      %v3518 = vld [vmem:[#allocation2 + $0x18] sm:$0xff]
      %v3519 = vld [vmem:[#allocation2 + $0x20] sm:$0xff]
      %v3520 = vld [vmem:[#allocation2 + $0x28] sm:$0xff]
      %v3521 = vld [vmem:[#allocation2 + $0x30] sm:$0xff]
      %v3522 = vld [vmem:[#allocation2 + $0x38] sm:$0xff]
      %v3523 = vld [vmem:[#allocation2 + $0x40] sm:$0xff]
      %v3524 = vld [vmem:[#allocation2 + $0x48] sm:$0xff]
      %v3525 = vld [vmem:[#allocation2 + $0x50] sm:$0xff]
      %v3526 = vld [vmem:[#allocation2 + $0x8] sm:$0xff]
      %v3527 = vld [vmem:[#allocation2 + $0x10] sm:$0xff]
      %v3528 = vld [vmem:[#allocation2 + $0x18] sm:$0xff]
      %v3529 = vld [vmem:[#allocation2 + $0x20] sm:$0xff]
      %v3530 = vld [vmem:[#allocation2 + $0x28] sm:$0xff]
      %v3531 = vld [vmem:[#allocation2 + $0x30] sm:$0xff]
      %v3532 = vld [vmem:[#allocation2 + $0x38] sm:$0xff]
      %v3533 = vld [vmem:[#allocation2 + $0x40] sm:$0xff]
      %v3534 = vld [vmem:[#allocation2 + $0x48] sm:$0xff]
      %v3535 = vld [vmem:[#allocation2] sm:$0xff]
      %v3536 = vadd.f32 %v3535, %v3011
      %v3537 = vadd.f32 %v3526, %v3016
      %v3538 = vadd.f32 %v3527, %v3021
      %v3539 = vadd.f32 %v3528, %v3026
      %v3540 = vadd.f32 %v3529, %v3031
      %v3541 = vadd.f32 %v3530, %v3036
      %v3542 = vadd.f32 %v3531, %v3041
      %v3543 = vadd.f32 %v3532, %v3046
      %v3544 = vadd.f32 %v3533, %v3051
      %v3545 = vmax.f32 %v3517, %v3526
      %v3546 = vmax.f32 %v3518, %v3527
      %v3547 = vmax.f32 %v3519, %v3528
      %v3548 = vmax.f32 %v3520, %v3529
      %v3549 = vmax.f32 %v3521, %v3530
      %v3550 = vmax.f32 %v3522, %v3531
      %v3551 = vmax.f32 %v3523, %v3532
      %v3552 = vmax.f32 %v3524, %v3533
      %v3553 = vmax.f32 %v3525, %v3534
      %v3554 = vmax.f32 %v3545, %v3536
      %v3555 = vmax.f32 %v3546, %v3537
      %v3556 = vmax.f32 %v3547, %v3538
      %v3557 = vmax.f32 %v3548, %v3539
      %v3558 = vmax.f32 %v3549, %v3540
      %v3559 = vmax.f32 %v3550, %v3541
      %v3560 = vmax.f32 %v3551, %v3542
      %v3561 = vmax.f32 %v3552, %v3543
      %v3562 = vmax.f32 %v3553, %v3544
      %v3563 = vsub.f32 %v3517, %v3554
      %v3564 = vsub.f32 %v3518, %v3555
      %v3565 = vsub.f32 %v3519, %v3556
      %v3566 = vsub.f32 %v3520, %v3557
      %v3567 = vsub.f32 %v3521, %v3558
      %v3568 = vsub.f32 %v3522, %v3559
      %v3569 = vsub.f32 %v3523, %v3560
      %v3570 = vsub.f32 %v3524, %v3561
      %v3571 = vsub.f32 %v3525, %v3562
      %v3572 = vmul.f32 %v3563, 1.442695
      %v3573 = vpow.pop %v3572
      %v3574 = vmul.f32 %v3564, 1.442695
      %v3575 = vpow.pop %v3574
      %v3576 = vmul.f32 %v3565, 1.442695
      %v3577 = vpow.pop %v3576
      %v3578 = vmul.f32 %v3566, 1.442695
      %v3579 = vpow.pop %v3578
      %v3580 = vmul.f32 %v3567, 1.442695
      %v3581 = vpow.pop %v3580
      %v3582 = vmul.f32 %v3568, 1.442695
      %v3583 = vpow.pop %v3582
      %v3584 = vmul.f32 %v3569, 1.442695
      %v3585 = vpow.pop %v3584
      %v3586 = vmul.f32 %v3570, 1.442695
      %v3587 = vpow.pop %v3586
      %v3588 = vmul.f32 %v3571, 1.442695
      %v3589 = vpow.pop %v3588
      %v3590 = vsub.f32 %v3526, %v3554
      %v3591 = vsub.f32 %v3527, %v3555
      %v3592 = vsub.f32 %v3528, %v3556
      %v3593 = vsub.f32 %v3529, %v3557
      %v3594 = vsub.f32 %v3530, %v3558
      %v3595 = vsub.f32 %v3531, %v3559
      %v3596 = vsub.f32 %v3532, %v3560
      %v3597 = vsub.f32 %v3533, %v3561
      %v3598 = vsub.f32 %v3534, %v3562
      %v3599 = vmul.f32 %v3590, 1.442695
      %v3600 = vpow.pop %v3599
      %v3601 = vmul.f32 %v3591, 1.442695
      %v3602 = vpow.pop %v3601
      %v3603 = vmul.f32 %v3592, 1.442695
      %v3604 = vpow.pop %v3603
      %v3605 = vmul.f32 %v3593, 1.442695
      %v3606 = vpow.pop %v3605
      %v3607 = vmul.f32 %v3594, 1.442695
      %v3608 = vpow.pop %v3607
      %v3609 = vmul.f32 %v3595, 1.442695
      %v3610 = vpow.pop %v3609
      %v3611 = vmul.f32 %v3596, 1.442695
      %v3612 = vpow.pop %v3611
      %v3613 = vmul.f32 %v3597, 1.442695
      %v3614 = vpow.pop %v3613
      %v3615 = vmul.f32 %v3598, 1.442695
      %v3616 = vpow.pop %v3615
      %v3617 = vadd.f32 %v3573, %v3600
      %v3618 = vadd.f32 %v3575, %v3602
      %v3619 = vadd.f32 %v3577, %v3604
      %v3620 = vadd.f32 %v3579, %v3606
      %v3621 = vadd.f32 %v3581, %v3608
      %v3622 = vadd.f32 %v3583, %v3610
      %v3623 = vadd.f32 %v3585, %v3612
      %v3624 = vadd.f32 %v3587, %v3614
      %v3625 = vadd.f32 %v3589, %v3616
      %v3626 = vsub.f32 %v3536, %v3554
      %v3627 = vsub.f32 %v3537, %v3555
      %v3628 = vsub.f32 %v3538, %v3556
      %v3629 = vsub.f32 %v3539, %v3557
      %v3630 = vsub.f32 %v3540, %v3558
      %v3631 = vsub.f32 %v3541, %v3559
      %v3632 = vsub.f32 %v3542, %v3560
      %v3633 = vsub.f32 %v3543, %v3561
      %v3634 = vsub.f32 %v3544, %v3562
      %v3635 = vmul.f32 %v3626, 1.442695
      %v3636 = vpow.pop %v3635
      %v3637 = vmul.f32 %v3627, 1.442695
      %v3638 = vpow.pop %v3637
      %v3639 = vmul.f32 %v3628, 1.442695
      %v3640 = vpow.pop %v3639
      %v3641 = vmul.f32 %v3629, 1.442695
      %v3642 = vpow.pop %v3641
      %v3643 = vmul.f32 %v3630, 1.442695
      %v3644 = vpow.pop %v3643
      %v3645 = vmul.f32 %v3631, 1.442695
      %v3646 = vpow.pop %v3645
      %v3647 = vmul.f32 %v3632, 1.442695
      %v3648 = vpow.pop %v3647
      %v3649 = vmul.f32 %v3633, 1.442695
      %v3650 = vpow.pop %v3649
      %v3651 = vmul.f32 %v3634, 1.442695
      %v3652 = vpow.pop %v3651
      %v3653 = vadd.f32 %v3617, %v3636
      %v3654 = vadd.f32 %v3618, %v3638
      %v3655 = vadd.f32 %v3619, %v3640
      %v3656 = vadd.f32 %v3620, %v3642
      %v3657 = vadd.f32 %v3621, %v3644
      %v3658 = vadd.f32 %v3622, %v3646
      %v3659 = vadd.f32 %v3623, %v3648
      %v3660 = vadd.f32 %v3624, %v3650
      %v3661 = vadd.f32 %v3625, %v3652
      %v3662 = vlog2.pop %v3653
      %v3663 = vmul.f32 %v3662, 0.6931472
      %v3664 = vlog2.pop %v3654
      %v3665 = vmul.f32 %v3664, 0.6931472
      %v3666 = vlog2.pop %v3655
      %v3667 = vmul.f32 %v3666, 0.6931472
      %v3668 = vlog2.pop %v3656
      %v3669 = vmul.f32 %v3668, 0.6931472
      %v3670 = vlog2.pop %v3657
      %v3671 = vmul.f32 %v3670, 0.6931472
      %v3672 = vlog2.pop %v3658
      %v3673 = vmul.f32 %v3672, 0.6931472
      %v3674 = vlog2.pop %v3659
      %v3675 = vmul.f32 %v3674, 0.6931472
      %v3676 = vlog2.pop %v3660
      %v3677 = vmul.f32 %v3676, 0.6931472
      %v3678 = vlog2.pop %v3661
      %v3679 = vmul.f32 %v3678, 0.6931472
      %v3680 = vadd.f32 %v3554, %v3663
      %v3681 = vadd.f32 %v3555, %v3665
      %v3682 = vadd.f32 %v3556, %v3667
      %v3683 = vadd.f32 %v3557, %v3669
      %v3684 = vadd.f32 %v3558, %v3671
      %v3685 = vadd.f32 %v3559, %v3673
      %v3686 = vadd.f32 %v3560, %v3675
      %v3687 = vadd.f32 %v3561, %v3677
      %v3688 = vadd.f32 %v3562, %v3679
      %v3689 = vadd.f32 %v3508, %v3680
      %v3690 = vadd.f32 %v3509, %v3681
      %v3691 = vadd.f32 %v3510, %v3682
      %v3692 = vadd.f32 %v3511, %v3683
      %v3693 = vadd.f32 %v3512, %v3684
      %v3694 = vadd.f32 %v3513, %v3685
      %v3695 = vadd.f32 %v3514, %v3686
      %v3696 = vadd.f32 %v3515, %v3687
      %v3697 = vadd.f32 %v3516, %v3688
      %v3698 = vmax.f32 %v3689, -1e+30
      %v3699 = vmax.f32 %v3690, -1e+30
      %v3700 = vmax.f32 %v3691, -1e+30
      %v3701 = vmax.f32 %v3692, -1e+30
      %v3702 = vmax.f32 %v3693, -1e+30
      %v3703 = vmax.f32 %v3694, -1e+30
      %v3704 = vmax.f32 %v3695, -1e+30
      %v3705 = vmax.f32 %v3696, -1e+30
      %v3706 = vmax.f32 %v3697, -1e+30
      %3707 = vst [vmem:[#allocation2 + $0x10] sm:$0xff] %v3698
      %3708 = vst [vmem:[#allocation2 + $0x18] sm:$0xff] %v3699
      %3709 = vst [vmem:[#allocation2 + $0x20] sm:$0xff] %v3700
      %3710 = vst [vmem:[#allocation2 + $0x28] sm:$0xff] %v3701
      %3711 = vst [vmem:[#allocation2 + $0x30] sm:$0xff] %v3702
      %3712 = vst [vmem:[#allocation2 + $0x38] sm:$0xff] %v3703
      %3713 = vst [vmem:[#allocation2 + $0x40] sm:$0xff] %v3704
      %3714 = vst [vmem:[#allocation2 + $0x48] sm:$0xff] %v3705
      %3715 = vst [vmem:[#allocation2 + $0x50] sm:$0xff] %v3706
      %v3716 = vld [vmem:[#allocation3 + $0x18] sm:$0xff]
      %v3717 = vld [vmem:[#allocation3 + $0x58] sm:$0xff]
      %v3718 = vld [vmem:[#allocation3 + $0x98] sm:$0xff]
      %v3719 = vld [vmem:[#allocation3 + $0xd8] sm:$0xff]
      %v3720 = vld [vmem:[#allocation3 + $0x118] sm:$0xff]
      %v3721 = vld [vmem:[#allocation3 + $0x158] sm:$0xff]
      %v3722 = vld [vmem:[#allocation3 + $0x198] sm:$0xff]
      %v3723 = vld [vmem:[#allocation3 + $0x1d8] sm:$0xff]
      %v3724 = vld [vmem:[#allocation3 + $0x218] sm:$0xff]
      %v3725 = vld [vmem:[#allocation2 + $0x10] sm:$0xff]
      %v3726 = vld [vmem:[#allocation2 + $0x18] sm:$0xff]
      %v3727 = vld [vmem:[#allocation2 + $0x20] sm:$0xff]
      %v3728 = vld [vmem:[#allocation2 + $0x28] sm:$0xff]
      %v3729 = vld [vmem:[#allocation2 + $0x30] sm:$0xff]
      %v3730 = vld [vmem:[#allocation2 + $0x38] sm:$0xff]
      %v3731 = vld [vmem:[#allocation2 + $0x40] sm:$0xff]
      %v3732 = vld [vmem:[#allocation2 + $0x48] sm:$0xff]
      %v3733 = vld [vmem:[#allocation2 + $0x50] sm:$0xff]
      %v3734 = vld [vmem:[#allocation2 + $0x8] sm:$0xff]
      %v3735 = vld [vmem:[#allocation2 + $0x10] sm:$0xff]
      %v3736 = vld [vmem:[#allocation2 + $0x18] sm:$0xff]
      %v3737 = vld [vmem:[#allocation2 + $0x20] sm:$0xff]
      %v3738 = vld [vmem:[#allocation2 + $0x28] sm:$0xff]
      %v3739 = vld [vmem:[#allocation2 + $0x30] sm:$0xff]
      %v3740 = vld [vmem:[#allocation2 + $0x38] sm:$0xff]
      %v3741 = vld [vmem:[#allocation2 + $0x40] sm:$0xff]
      %v3742 = vld [vmem:[#allocation2 + $0x48] sm:$0xff]
      %v3743 = vld [vmem:[#allocation2] sm:$0xff]
      %v3744 = vadd.f32 %v3743, %v3011
      %v3745 = vadd.f32 %v3734, %v3016
      %v3746 = vadd.f32 %v3735, %v3021
      %v3747 = vadd.f32 %v3736, %v3026
      %v3748 = vadd.f32 %v3737, %v3031
      %v3749 = vadd.f32 %v3738, %v3036
      %v3750 = vadd.f32 %v3739, %v3041
      %v3751 = vadd.f32 %v3740, %v3046
      %v3752 = vadd.f32 %v3741, %v3051
      %v3753 = vmax.f32 %v3725, %v3734
      %v3754 = vmax.f32 %v3726, %v3735
      %v3755 = vmax.f32 %v3727, %v3736
      %v3756 = vmax.f32 %v3728, %v3737
      %v3757 = vmax.f32 %v3729, %v3738
      %v3758 = vmax.f32 %v3730, %v3739
      %v3759 = vmax.f32 %v3731, %v3740
      %v3760 = vmax.f32 %v3732, %v3741
      %v3761 = vmax.f32 %v3733, %v3742
      %v3762 = vmax.f32 %v3753, %v3744
      %v3763 = vmax.f32 %v3754, %v3745
      %v3764 = vmax.f32 %v3755, %v3746
      %v3765 = vmax.f32 %v3756, %v3747
      %v3766 = vmax.f32 %v3757, %v3748
      %v3767 = vmax.f32 %v3758, %v3749
      %v3768 = vmax.f32 %v3759, %v3750
      %v3769 = vmax.f32 %v3760, %v3751
      %v3770 = vmax.f32 %v3761, %v3752
      %v3771 = vsub.f32 %v3725, %v3762
      %v3772 = vsub.f32 %v3726, %v3763
      %v3773 = vsub.f32 %v3727, %v3764
      %v3774 = vsub.f32 %v3728, %v3765
      %v3775 = vsub.f32 %v3729, %v3766
      %v3776 = vsub.f32 %v3730, %v3767
      %v3777 = vsub.f32 %v3731, %v3768
      %v3778 = vsub.f32 %v3732, %v3769
      %v3779 = vsub.f32 %v3733, %v3770
      %v3780 = vmul.f32 %v3771, 1.442695
      %v3781 = vpow.pop %v3780
      %v3782 = vmul.f32 %v3772, 1.442695
      %v3783 = vpow.pop %v3782
      %v3784 = vmul.f32 %v3773, 1.442695
      %v3785 = vpow.pop %v3784
      %v3786 = vmul.f32 %v3774, 1.442695
      %v3787 = vpow.pop %v3786
      %v3788 = vmul.f32 %v3775, 1.442695
      %v3789 = vpow.pop %v3788
      %v3790 = vmul.f32 %v3776, 1.442695
      %v3791 = vpow.pop %v3790
      %v3792 = vmul.f32 %v3777, 1.442695
      %v3793 = vpow.pop %v3792
      %v3794 = vmul.f32 %v3778, 1.442695
      %v3795 = vpow.pop %v3794
      %v3796 = vmul.f32 %v3779, 1.442695
      %v3797 = vpow.pop %v3796
      %v3798 = vsub.f32 %v3734, %v3762
      %v3799 = vsub.f32 %v3735, %v3763
      %v3800 = vsub.f32 %v3736, %v3764
      %v3801 = vsub.f32 %v3737, %v3765
      %v3802 = vsub.f32 %v3738, %v3766
      %v3803 = vsub.f32 %v3739, %v3767
      %v3804 = vsub.f32 %v3740, %v3768
      %v3805 = vsub.f32 %v3741, %v3769
      %v3806 = vsub.f32 %v3742, %v3770
      %v3807 = vmul.f32 %v3798, 1.442695
      %v3808 = vpow.pop %v3807
      %v3809 = vmul.f32 %v3799, 1.442695
      %v3810 = vpow.pop %v3809
      %v3811 = vmul.f32 %v3800, 1.442695
      %v3812 = vpow.pop %v3811
      %v3813 = vmul.f32 %v3801, 1.442695
      %v3814 = vpow.pop %v3813
      %v3815 = vmul.f32 %v3802, 1.442695
      %v3816 = vpow.pop %v3815
      %v3817 = vmul.f32 %v3803, 1.442695
      %v3818 = vpow.pop %v3817
      %v3819 = vmul.f32 %v3804, 1.442695
      %v3820 = vpow.pop %v3819
      %v3821 = vmul.f32 %v3805, 1.442695
      %v3822 = vpow.pop %v3821
      %v3823 = vmul.f32 %v3806, 1.442695
      %v3824 = vpow.pop %v3823
      %v3825 = vadd.f32 %v3781, %v3808
      %v3826 = vadd.f32 %v3783, %v3810
      %v3827 = vadd.f32 %v3785, %v3812
      %v3828 = vadd.f32 %v3787, %v3814
      %v3829 = vadd.f32 %v3789, %v3816
      %v3830 = vadd.f32 %v3791, %v3818
      %v3831 = vadd.f32 %v3793, %v3820
      %v3832 = vadd.f32 %v3795, %v3822
      %v3833 = vadd.f32 %v3797, %v3824
      %v3834 = vsub.f32 %v3744, %v3762
      %v3835 = vsub.f32 %v3745, %v3763
      %v3836 = vsub.f32 %v3746, %v3764
      %v3837 = vsub.f32 %v3747, %v3765
      %v3838 = vsub.f32 %v3748, %v3766
      %v3839 = vsub.f32 %v3749, %v3767
      %v3840 = vsub.f32 %v3750, %v3768
      %v3841 = vsub.f32 %v3751, %v3769
      %v3842 = vsub.f32 %v3752, %v3770
      %v3843 = vmul.f32 %v3834, 1.442695
      %v3844 = vpow.pop %v3843
      %v3845 = vmul.f32 %v3835, 1.442695
      %v3846 = vpow.pop %v3845
      %v3847 = vmul.f32 %v3836, 1.442695
      %v3848 = vpow.pop %v3847
      %v3849 = vmul.f32 %v3837, 1.442695
      %v3850 = vpow.pop %v3849
      %v3851 = vmul.f32 %v3838, 1.442695
      %v3852 = vpow.pop %v3851
      %v3853 = vmul.f32 %v3839, 1.442695
      %v3854 = vpow.pop %v3853
      %v3855 = vmul.f32 %v3840, 1.442695
      %v3856 = vpow.pop %v3855
      %v3857 = vmul.f32 %v3841, 1.442695
      %v3858 = vpow.pop %v3857
      %v3859 = vmul.f32 %v3842, 1.442695
      %v3860 = vpow.pop %v3859
      %v3861 = vadd.f32 %v3825, %v3844
      %v3862 = vadd.f32 %v3826, %v3846
      %v3863 = vadd.f32 %v3827, %v3848
      %v3864 = vadd.f32 %v3828, %v3850
      %v3865 = vadd.f32 %v3829, %v3852
      %v3866 = vadd.f32 %v3830, %v3854
      %v3867 = vadd.f32 %v3831, %v3856
      %v3868 = vadd.f32 %v3832, %v3858
      %v3869 = vadd.f32 %v3833, %v3860
      %v3870 = vlog2.pop %v3861
      %v3871 = vmul.f32 %v3870, 0.6931472
      %v3872 = vlog2.pop %v3862
      %v3873 = vmul.f32 %v3872, 0.6931472
      %v3874 = vlog2.pop %v3863
      %v3875 = vmul.f32 %v3874, 0.6931472
      %v3876 = vlog2.pop %v3864
      %v3877 = vmul.f32 %v3876, 0.6931472
      %v3878 = vlog2.pop %v3865
      %v3879 = vmul.f32 %v3878, 0.6931472
      %v3880 = vlog2.pop %v3866
      %v3881 = vmul.f32 %v3880, 0.6931472
      %v3882 = vlog2.pop %v3867
      %v3883 = vmul.f32 %v3882, 0.6931472
      %v3884 = vlog2.pop %v3868
      %v3885 = vmul.f32 %v3884, 0.6931472
      %v3886 = vlog2.pop %v3869
      %v3887 = vmul.f32 %v3886, 0.6931472
      %v3888 = vadd.f32 %v3762, %v3871
      %v3889 = vadd.f32 %v3763, %v3873
      %v3890 = vadd.f32 %v3764, %v3875
      %v3891 = vadd.f32 %v3765, %v3877
      %v3892 = vadd.f32 %v3766, %v3879
      %v3893 = vadd.f32 %v3767, %v3881
      %v3894 = vadd.f32 %v3768, %v3883
      %v3895 = vadd.f32 %v3769, %v3885
      %v3896 = vadd.f32 %v3770, %v3887
      %v3897 = vadd.f32 %v3716, %v3888
      %v3898 = vadd.f32 %v3717, %v3889
      %v3899 = vadd.f32 %v3718, %v3890
      %v3900 = vadd.f32 %v3719, %v3891
      %v3901 = vadd.f32 %v3720, %v3892
      %v3902 = vadd.f32 %v3721, %v3893
      %v3903 = vadd.f32 %v3722, %v3894
      %v3904 = vadd.f32 %v3723, %v3895
      %v3905 = vadd.f32 %v3724, %v3896
      %v3906 = vmax.f32 %v3897, -1e+30
      %v3907 = vmax.f32 %v3898, -1e+30
      %v3908 = vmax.f32 %v3899, -1e+30
      %v3909 = vmax.f32 %v3900, -1e+30
      %v3910 = vmax.f32 %v3901, -1e+30
      %v3911 = vmax.f32 %v3902, -1e+30
      %v3912 = vmax.f32 %v3903, -1e+30
      %v3913 = vmax.f32 %v3904, -1e+30
      %v3914 = vmax.f32 %v3905, -1e+30
      %3915 = vst [vmem:[#allocation2 + $0x10] sm:$0xff] %v3906
      %3916 = vst [vmem:[#allocation2 + $0x18] sm:$0xff] %v3907
      %3917 = vst [vmem:[#allocation2 + $0x20] sm:$0xff] %v3908
      %3918 = vst [vmem:[#allocation2 + $0x28] sm:$0xff] %v3909
      %3919 = vst [vmem:[#allocation2 + $0x30] sm:$0xff] %v3910
      %3920 = vst [vmem:[#allocation2 + $0x38] sm:$0xff] %v3911
      %3921 = vst [vmem:[#allocation2 + $0x40] sm:$0xff] %v3912
      %3922 = vst [vmem:[#allocation2 + $0x48] sm:$0xff] %v3913
      %3923 = vst [vmem:[#allocation2 + $0x50] sm:$0xff] %v3914
      %s3924 = sadd.s32 %s2979, 4
      %v3925 = vld [vmem:[#allocation3 + $0x20] sm:$0xff]
      %v3926 = vld [vmem:[#allocation3 + $0x60] sm:$0xff]
      %v3927 = vld [vmem:[#allocation3 + $0xa0] sm:$0xff]
      %v3928 = vld [vmem:[#allocation3 + $0xe0] sm:$0xff]
      %v3929 = vld [vmem:[#allocation3 + $0x120] sm:$0xff]
      %v3930 = vld [vmem:[#allocation3 + $0x160] sm:$0xff]
      %v3931 = vld [vmem:[#allocation3 + $0x1a0] sm:$0xff]
      %v3932 = vld [vmem:[#allocation3 + $0x1e0] sm:$0xff]
      %v3933 = vld [vmem:[#allocation3 + $0x220] sm:$0xff]
      %v3934 = vld [vmem:[#allocation2 + $0x10] sm:$0xff]
      %v3935 = vld [vmem:[#allocation2 + $0x18] sm:$0xff]
      %v3936 = vld [vmem:[#allocation2 + $0x20] sm:$0xff]
      %v3937 = vld [vmem:[#allocation2 + $0x28] sm:$0xff]
      %v3938 = vld [vmem:[#allocation2 + $0x30] sm:$0xff]
      %v3939 = vld [vmem:[#allocation2 + $0x38] sm:$0xff]
      %v3940 = vld [vmem:[#allocation2 + $0x40] sm:$0xff]
      %v3941 = vld [vmem:[#allocation2 + $0x48] sm:$0xff]
      %v3942 = vld [vmem:[#allocation2 + $0x50] sm:$0xff]
      %v3943 = vld [vmem:[#allocation2 + $0x8] sm:$0xff]
      %v3944 = vld [vmem:[#allocation2 + $0x10] sm:$0xff]
      %v3945 = vld [vmem:[#allocation2 + $0x18] sm:$0xff]
      %v3946 = vld [vmem:[#allocation2 + $0x20] sm:$0xff]
      %v3947 = vld [vmem:[#allocation2 + $0x28] sm:$0xff]
      %v3948 = vld [vmem:[#allocation2 + $0x30] sm:$0xff]
      %v3949 = vld [vmem:[#allocation2 + $0x38] sm:$0xff]
      %v3950 = vld [vmem:[#allocation2 + $0x40] sm:$0xff]
      %v3951 = vld [vmem:[#allocation2 + $0x48] sm:$0xff]
      %v3952 = vld [vmem:[#allocation2] sm:$0xff]
      %v3953 = vadd.f32 %v3952, %v3011
      %v3954 = vadd.f32 %v3943, %v3016
      %v3955 = vadd.f32 %v3944, %v3021
      %v3956 = vadd.f32 %v3945, %v3026
      %v3957 = vadd.f32 %v3946, %v3031
      %v3958 = vadd.f32 %v3947, %v3036
      %v3959 = vadd.f32 %v3948, %v3041
      %v3960 = vadd.f32 %v3949, %v3046
      %v3961 = vadd.f32 %v3950, %v3051
      %v3962 = vmax.f32 %v3934, %v3943
      %v3963 = vmax.f32 %v3935, %v3944
      %v3964 = vmax.f32 %v3936, %v3945
      %v3965 = vmax.f32 %v3937, %v3946
      %v3966 = vmax.f32 %v3938, %v3947
      %v3967 = vmax.f32 %v3939, %v3948
      %v3968 = vmax.f32 %v3940, %v3949
      %v3969 = vmax.f32 %v3941, %v3950
      %v3970 = vmax.f32 %v3942, %v3951
      %v3971 = vmax.f32 %v3962, %v3953
      %v3972 = vmax.f32 %v3963, %v3954
      %v3973 = vmax.f32 %v3964, %v3955
      %v3974 = vmax.f32 %v3965, %v3956
      %v3975 = vmax.f32 %v3966, %v3957
      %v3976 = vmax.f32 %v3967, %v3958
      %v3977 = vmax.f32 %v3968, %v3959
      %v3978 = vmax.f32 %v3969, %v3960
      %v3979 = vmax.f32 %v3970, %v3961
      %v3980 = vsub.f32 %v3934, %v3971
      %v3981 = vsub.f32 %v3935, %v3972
      %v3982 = vsub.f32 %v3936, %v3973
      %v3983 = vsub.f32 %v3937, %v3974
      %v3984 = vsub.f32 %v3938, %v3975
      %v3985 = vsub.f32 %v3939, %v3976
      %v3986 = vsub.f32 %v3940, %v3977
      %v3987 = vsub.f32 %v3941, %v3978
      %v3988 = vsub.f32 %v3942, %v3979
      %v3989 = vmul.f32 %v3980, 1.442695
      %v3990 = vpow.pop %v3989
      %v3991 = vmul.f32 %v3981, 1.442695
      %v3992 = vpow.pop %v3991
      %v3993 = vmul.f32 %v3982, 1.442695
      %v3994 = vpow.pop %v3993
      %v3995 = vmul.f32 %v3983, 1.442695
      %v3996 = vpow.pop %v3995
      %v3997 = vmul.f32 %v3984, 1.442695
      %v3998 = vpow.pop %v3997
      %v3999 = vmul.f32 %v3985, 1.442695
      %v4000 = vpow.pop %v3999
      %v4001 = vmul.f32 %v3986, 1.442695
      %v4002 = vpow.pop %v4001
      %v4003 = vmul.f32 %v3987, 1.442695
      %v4004 = vpow.pop %v4003
      %v4005 = vmul.f32 %v3988, 1.442695
      %v4006 = vpow.pop %v4005
      %v4007 = vsub.f32 %v3943, %v3971
      %v4008 = vsub.f32 %v3944, %v3972
      %v4009 = vsub.f32 %v3945, %v3973
      %v4010 = vsub.f32 %v3946, %v3974
      %v4011 = vsub.f32 %v3947, %v3975
      %v4012 = vsub.f32 %v3948, %v3976
      %v4013 = vsub.f32 %v3949, %v3977
      %v4014 = vsub.f32 %v3950, %v3978
      %v4015 = vsub.f32 %v3951, %v3979
      %v4016 = vmul.f32 %v4007, 1.442695
      %v4017 = vpow.pop %v4016
      %v4018 = vmul.f32 %v4008, 1.442695
      %v4019 = vpow.pop %v4018
      %v4020 = vmul.f32 %v4009, 1.442695
      %v4021 = vpow.pop %v4020
      %v4022 = vmul.f32 %v4010, 1.442695
      %v4023 = vpow.pop %v4022
      %v4024 = vmul.f32 %v4011, 1.442695
      %v4025 = vpow.pop %v4024
      %v4026 = vmul.f32 %v4012, 1.442695
      %v4027 = vpow.pop %v4026
      %v4028 = vmul.f32 %v4013, 1.442695
      %v4029 = vpow.pop %v4028
      %v4030 = vmul.f32 %v4014, 1.442695
      %v4031 = vpow.pop %v4030
      %v4032 = vmul.f32 %v4015, 1.442695
      %v4033 = vpow.pop %v4032
      %v4034 = vadd.f32 %v3990, %v4017
      %v4035 = vadd.f32 %v3992, %v4019
      %v4036 = vadd.f32 %v3994, %v4021
      %v4037 = vadd.f32 %v3996, %v4023
      %v4038 = vadd.f32 %v3998, %v4025
      %v4039 = vadd.f32 %v4000, %v4027
      %v4040 = vadd.f32 %v4002, %v4029
      %v4041 = vadd.f32 %v4004, %v4031
      %v4042 = vadd.f32 %v4006, %v4033
      %v4043 = vsub.f32 %v3953, %v3971
      %v4044 = vsub.f32 %v3954, %v3972
      %v4045 = vsub.f32 %v3955, %v3973
      %v4046 = vsub.f32 %v3956, %v3974
      %v4047 = vsub.f32 %v3957, %v3975
      %v4048 = vsub.f32 %v3958, %v3976
      %v4049 = vsub.f32 %v3959, %v3977
      %v4050 = vsub.f32 %v3960, %v3978
      %v4051 = vsub.f32 %v3961, %v3979
      %v4052 = vmul.f32 %v4043, 1.442695
      %v4053 = vpow.pop %v4052
      %v4054 = vmul.f32 %v4044, 1.442695
      %v4055 = vpow.pop %v4054
      %v4056 = vmul.f32 %v4045, 1.442695
      %v4057 = vpow.pop %v4056
      %v4058 = vmul.f32 %v4046, 1.442695
      %v4059 = vpow.pop %v4058
      %v4060 = vmul.f32 %v4047, 1.442695
      %v4061 = vpow.pop %v4060
      %v4062 = vmul.f32 %v4048, 1.442695
      %v4063 = vpow.pop %v4062
      %v4064 = vmul.f32 %v4049, 1.442695
      %v4065 = vpow.pop %v4064
      %v4066 = vmul.f32 %v4050, 1.442695
      %v4067 = vpow.pop %v4066
      %v4068 = vmul.f32 %v4051, 1.442695
      %v4069 = vpow.pop %v4068
      %v4070 = vadd.f32 %v4034, %v4053
      %v4071 = vadd.f32 %v4035, %v4055
      %v4072 = vadd.f32 %v4036, %v4057
      %v4073 = vadd.f32 %v4037, %v4059
      %v4074 = vadd.f32 %v4038, %v4061
      %v4075 = vadd.f32 %v4039, %v4063
      %v4076 = vadd.f32 %v4040, %v4065
      %v4077 = vadd.f32 %v4041, %v4067
      %v4078 = vadd.f32 %v4042, %v4069
      %v4079 = vlog2.pop %v4070
      %v4080 = vmul.f32 %v4079, 0.6931472
      %v4081 = vlog2.pop %v4071
      %v4082 = vmul.f32 %v4081, 0.6931472
      %v4083 = vlog2.pop %v4072
      %v4084 = vmul.f32 %v4083, 0.6931472
      %v4085 = vlog2.pop %v4073
      %v4086 = vmul.f32 %v4085, 0.6931472
      %v4087 = vlog2.pop %v4074
      %v4088 = vmul.f32 %v4087, 0.6931472
      %v4089 = vlog2.pop %v4075
      %v4090 = vmul.f32 %v4089, 0.6931472
      %v4091 = vlog2.pop %v4076
      %v4092 = vmul.f32 %v4091, 0.6931472
      %v4093 = vlog2.pop %v4077
      %v4094 = vmul.f32 %v4093, 0.6931472
      %v4095 = vlog2.pop %v4078
      %v4096 = vmul.f32 %v4095, 0.6931472
      %v4097 = vadd.f32 %v3971, %v4080
      %v4098 = vadd.f32 %v3972, %v4082
      %v4099 = vadd.f32 %v3973, %v4084
      %v4100 = vadd.f32 %v3974, %v4086
      %v4101 = vadd.f32 %v3975, %v4088
      %v4102 = vadd.f32 %v3976, %v4090
      %v4103 = vadd.f32 %v3977, %v4092
      %v4104 = vadd.f32 %v3978, %v4094
      %v4105 = vadd.f32 %v3979, %v4096
      %v4106 = vadd.f32 %v3925, %v4097
      %v4107 = vadd.f32 %v3926, %v4098
      %v4108 = vadd.f32 %v3927, %v4099
      %v4109 = vadd.f32 %v3928, %v4100
      %v4110 = vadd.f32 %v3929, %v4101
      %v4111 = vadd.f32 %v3930, %v4102
      %v4112 = vadd.f32 %v3931, %v4103
      %v4113 = vadd.f32 %v3932, %v4104
      %v4114 = vadd.f32 %v3933, %v4105
      %v4115 = vmax.f32 %v4106, -1e+30
      %v4116 = vmax.f32 %v4107, -1e+30
      %v4117 = vmax.f32 %v4108, -1e+30
      %v4118 = vmax.f32 %v4109, -1e+30
      %v4119 = vmax.f32 %v4110, -1e+30
      %v4120 = vmax.f32 %v4111, -1e+30
      %v4121 = vmax.f32 %v4112, -1e+30
      %v4122 = vmax.f32 %v4113, -1e+30
      %v4123 = vmax.f32 %v4114, -1e+30
      %p4124 = scmp.lt.s32.totalorder %s3924, 12
      %s4125 = scalar_select %p4124, 1, 0
      %v4126 = vstv %s4125
      %vm4127 = vcmp.eq.s32.totalorder %v4126, 1
      %v4128 = vsel %vm4127, %v4115, %v3934
      %v4129 = vsel %vm4127, %v4116, %v3935
      %v4130 = vsel %vm4127, %v4117, %v3936
      %v4131 = vsel %vm4127, %v4118, %v3937
      %v4132 = vsel %vm4127, %v4119, %v3938
      %v4133 = vsel %vm4127, %v4120, %v3939
      %v4134 = vsel %vm4127, %v4121, %v3940
      %v4135 = vsel %vm4127, %v4122, %v3941
      %v4136 = vsel %vm4127, %v4123, %v3942
      %4137 = vst [vmem:[#allocation2 + $0x10] sm:$0xff] %v4128
      %4138 = vst [vmem:[#allocation2 + $0x18] sm:$0xff] %v4129
      %4139 = vst [vmem:[#allocation2 + $0x20] sm:$0xff] %v4130
      %4140 = vst [vmem:[#allocation2 + $0x28] sm:$0xff] %v4131
      %4141 = vst [vmem:[#allocation2 + $0x30] sm:$0xff] %v4132
      %4142 = vst [vmem:[#allocation2 + $0x38] sm:$0xff] %v4133
      %4143 = vst [vmem:[#allocation2 + $0x40] sm:$0xff] %v4134
      %4144 = vst [vmem:[#allocation2 + $0x48] sm:$0xff] %v4135
      %4145 = vst [vmem:[#allocation2 + $0x50] sm:$0xff] %v4136
      %s4146 = sadd.s32 %s2979, 5
      %v4147 = vld [vmem:[#allocation3 + $0x28] sm:$0xff]
      %v4148 = vld [vmem:[#allocation3 + $0x68] sm:$0xff]
      %v4149 = vld [vmem:[#allocation3 + $0xa8] sm:$0xff]
      %v4150 = vld [vmem:[#allocation3 + $0xe8] sm:$0xff]
      %v4151 = vld [vmem:[#allocation3 + $0x128] sm:$0xff]
      %v4152 = vld [vmem:[#allocation3 + $0x168] sm:$0xff]
      %v4153 = vld [vmem:[#allocation3 + $0x1a8] sm:$0xff]
      %v4154 = vld [vmem:[#allocation3 + $0x1e8] sm:$0xff]
      %v4155 = vld [vmem:[#allocation3 + $0x228] sm:$0xff]
      %v4156 = vld [vmem:[#allocation2 + $0x10] sm:$0xff]
      %v4157 = vld [vmem:[#allocation2 + $0x18] sm:$0xff]
      %v4158 = vld [vmem:[#allocation2 + $0x20] sm:$0xff]
      %v4159 = vld [vmem:[#allocation2 + $0x28] sm:$0xff]
      %v4160 = vld [vmem:[#allocation2 + $0x30] sm:$0xff]
      %v4161 = vld [vmem:[#allocation2 + $0x38] sm:$0xff]
      %v4162 = vld [vmem:[#allocation2 + $0x40] sm:$0xff]
      %v4163 = vld [vmem:[#allocation2 + $0x48] sm:$0xff]
      %v4164 = vld [vmem:[#allocation2 + $0x50] sm:$0xff]
      %v4165 = vld [vmem:[#allocation2 + $0x8] sm:$0xff]
      %v4166 = vld [vmem:[#allocation2 + $0x10] sm:$0xff]
      %v4167 = vld [vmem:[#allocation2 + $0x18] sm:$0xff]
      %v4168 = vld [vmem:[#allocation2 + $0x20] sm:$0xff]
      %v4169 = vld [vmem:[#allocation2 + $0x28] sm:$0xff]
      %v4170 = vld [vmem:[#allocation2 + $0x30] sm:$0xff]
      %v4171 = vld [vmem:[#allocation2 + $0x38] sm:$0xff]
      %v4172 = vld [vmem:[#allocation2 + $0x40] sm:$0xff]
      %v4173 = vld [vmem:[#allocation2 + $0x48] sm:$0xff]
      %v4174 = vld [vmem:[#allocation2] sm:$0xff]
      %v4175 = vadd.f32 %v4174, %v3011
      %v4176 = vadd.f32 %v4165, %v3016
      %v4177 = vadd.f32 %v4166, %v3021
      %v4178 = vadd.f32 %v4167, %v3026
      %v4179 = vadd.f32 %v4168, %v3031
      %v4180 = vadd.f32 %v4169, %v3036
      %v4181 = vadd.f32 %v4170, %v3041
      %v4182 = vadd.f32 %v4171, %v3046
      %v4183 = vadd.f32 %v4172, %v3051
      %v4184 = vmax.f32 %v4156, %v4165
      %v4185 = vmax.f32 %v4157, %v4166
      %v4186 = vmax.f32 %v4158, %v4167
      %v4187 = vmax.f32 %v4159, %v4168
      %v4188 = vmax.f32 %v4160, %v4169
      %v4189 = vmax.f32 %v4161, %v4170
      %v4190 = vmax.f32 %v4162, %v4171
      %v4191 = vmax.f32 %v4163, %v4172
      %v4192 = vmax.f32 %v4164, %v4173
      %v4193 = vmax.f32 %v4184, %v4175
      %v4194 = vmax.f32 %v4185, %v4176
      %v4195 = vmax.f32 %v4186, %v4177
      %v4196 = vmax.f32 %v4187, %v4178
      %v4197 = vmax.f32 %v4188, %v4179
      %v4198 = vmax.f32 %v4189, %v4180
      %v4199 = vmax.f32 %v4190, %v4181
      %v4200 = vmax.f32 %v4191, %v4182
      %v4201 = vmax.f32 %v4192, %v4183
      %v4202 = vsub.f32 %v4156, %v4193
      %v4203 = vsub.f32 %v4157, %v4194
      %v4204 = vsub.f32 %v4158, %v4195
      %v4205 = vsub.f32 %v4159, %v4196
      %v4206 = vsub.f32 %v4160, %v4197
      %v4207 = vsub.f32 %v4161, %v4198
      %v4208 = vsub.f32 %v4162, %v4199
      %v4209 = vsub.f32 %v4163, %v4200
      %v4210 = vsub.f32 %v4164, %v4201
      %v4211 = vmul.f32 %v4202, 1.442695
      %v4212 = vpow.pop %v4211
      %v4213 = vmul.f32 %v4203, 1.442695
      %v4214 = vpow.pop %v4213
      %v4215 = vmul.f32 %v4204, 1.442695
      %v4216 = vpow.pop %v4215
      %v4217 = vmul.f32 %v4205, 1.442695
      %v4218 = vpow.pop %v4217
      %v4219 = vmul.f32 %v4206, 1.442695
      %v4220 = vpow.pop %v4219
      %v4221 = vmul.f32 %v4207, 1.442695
      %v4222 = vpow.pop %v4221
      %v4223 = vmul.f32 %v4208, 1.442695
      %v4224 = vpow.pop %v4223
      %v4225 = vmul.f32 %v4209, 1.442695
      %v4226 = vpow.pop %v4225
      %v4227 = vmul.f32 %v4210, 1.442695
      %v4228 = vpow.pop %v4227
      %v4229 = vsub.f32 %v4165, %v4193
      %v4230 = vsub.f32 %v4166, %v4194
      %v4231 = vsub.f32 %v4167, %v4195
      %v4232 = vsub.f32 %v4168, %v4196
      %v4233 = vsub.f32 %v4169, %v4197
      %v4234 = vsub.f32 %v4170, %v4198
      %v4235 = vsub.f32 %v4171, %v4199
      %v4236 = vsub.f32 %v4172, %v4200
      %v4237 = vsub.f32 %v4173, %v4201
      %v4238 = vmul.f32 %v4229, 1.442695
      %v4239 = vpow.pop %v4238
      %v4240 = vmul.f32 %v4230, 1.442695
      %v4241 = vpow.pop %v4240
      %v4242 = vmul.f32 %v4231, 1.442695
      %v4243 = vpow.pop %v4242
      %v4244 = vmul.f32 %v4232, 1.442695
      %v4245 = vpow.pop %v4244
      %v4246 = vmul.f32 %v4233, 1.442695
      %v4247 = vpow.pop %v4246
      %v4248 = vmul.f32 %v4234, 1.442695
      %v4249 = vpow.pop %v4248
      %v4250 = vmul.f32 %v4235, 1.442695
      %v4251 = vpow.pop %v4250
      %v4252 = vmul.f32 %v4236, 1.442695
      %v4253 = vpow.pop %v4252
      %v4254 = vmul.f32 %v4237, 1.442695
      %v4255 = vpow.pop %v4254
      %v4256 = vadd.f32 %v4212, %v4239
      %v4257 = vadd.f32 %v4214, %v4241
      %v4258 = vadd.f32 %v4216, %v4243
      %v4259 = vadd.f32 %v4218, %v4245
      %v4260 = vadd.f32 %v4220, %v4247
      %v4261 = vadd.f32 %v4222, %v4249
      %v4262 = vadd.f32 %v4224, %v4251
      %v4263 = vadd.f32 %v4226, %v4253
      %v4264 = vadd.f32 %v4228, %v4255
      %v4265 = vsub.f32 %v4175, %v4193
      %v4266 = vsub.f32 %v4176, %v4194
      %v4267 = vsub.f32 %v4177, %v4195
      %v4268 = vsub.f32 %v4178, %v4196
      %v4269 = vsub.f32 %v4179, %v4197
      %v4270 = vsub.f32 %v4180, %v4198
      %v4271 = vsub.f32 %v4181, %v4199
      %v4272 = vsub.f32 %v4182, %v4200
      %v4273 = vsub.f32 %v4183, %v4201
      %v4274 = vmul.f32 %v4265, 1.442695
      %v4275 = vpow.pop %v4274
      %v4276 = vmul.f32 %v4266, 1.442695
      %v4277 = vpow.pop %v4276
      %v4278 = vmul.f32 %v4267, 1.442695
      %v4279 = vpow.pop %v4278
      %v4280 = vmul.f32 %v4268, 1.442695
      %v4281 = vpow.pop %v4280
      %v4282 = vmul.f32 %v4269, 1.442695
      %v4283 = vpow.pop %v4282
      %v4284 = vmul.f32 %v4270, 1.442695
      %v4285 = vpow.pop %v4284
      %v4286 = vmul.f32 %v4271, 1.442695
      %v4287 = vpow.pop %v4286
      %v4288 = vmul.f32 %v4272, 1.442695
      %v4289 = vpow.pop %v4288
      %v4290 = vmul.f32 %v4273, 1.442695
      %v4291 = vpow.pop %v4290
      %v4292 = vadd.f32 %v4256, %v4275
      %v4293 = vadd.f32 %v4257, %v4277
      %v4294 = vadd.f32 %v4258, %v4279
      %v4295 = vadd.f32 %v4259, %v4281
      %v4296 = vadd.f32 %v4260, %v4283
      %v4297 = vadd.f32 %v4261, %v4285
      %v4298 = vadd.f32 %v4262, %v4287
      %v4299 = vadd.f32 %v4263, %v4289
      %v4300 = vadd.f32 %v4264, %v4291
      %v4301 = vlog2.pop %v4292
      %v4302 = vmul.f32 %v4301, 0.6931472
      %v4303 = vlog2.pop %v4293
      %v4304 = vmul.f32 %v4303, 0.6931472
      %v4305 = vlog2.pop %v4294
      %v4306 = vmul.f32 %v4305, 0.6931472
      %v4307 = vlog2.pop %v4295
      %v4308 = vmul.f32 %v4307, 0.6931472
      %v4309 = vlog2.pop %v4296
      %v4310 = vmul.f32 %v4309, 0.6931472
      %v4311 = vlog2.pop %v4297
      %v4312 = vmul.f32 %v4311, 0.6931472
      %v4313 = vlog2.pop %v4298
      %v4314 = vmul.f32 %v4313, 0.6931472
      %v4315 = vlog2.pop %v4299
      %v4316 = vmul.f32 %v4315, 0.6931472
      %v4317 = vlog2.pop %v4300
      %v4318 = vmul.f32 %v4317, 0.6931472
      %v4319 = vadd.f32 %v4193, %v4302
      %v4320 = vadd.f32 %v4194, %v4304
      %v4321 = vadd.f32 %v4195, %v4306
      %v4322 = vadd.f32 %v4196, %v4308
      %v4323 = vadd.f32 %v4197, %v4310
      %v4324 = vadd.f32 %v4198, %v4312
      %v4325 = vadd.f32 %v4199, %v4314
      %v4326 = vadd.f32 %v4200, %v4316
      %v4327 = vadd.f32 %v4201, %v4318
      %v4328 = vadd.f32 %v4147, %v4319
      %v4329 = vadd.f32 %v4148, %v4320
      %v4330 = vadd.f32 %v4149, %v4321
      %v4331 = vadd.f32 %v4150, %v4322
      %v4332 = vadd.f32 %v4151, %v4323
      %v4333 = vadd.f32 %v4152, %v4324
      %v4334 = vadd.f32 %v4153, %v4325
      %v4335 = vadd.f32 %v4154, %v4326
      %v4336 = vadd.f32 %v4155, %v4327
      %v4337 = vmax.f32 %v4328, -1e+30
      %v4338 = vmax.f32 %v4329, -1e+30
      %v4339 = vmax.f32 %v4330, -1e+30
      %v4340 = vmax.f32 %v4331, -1e+30
      %v4341 = vmax.f32 %v4332, -1e+30
      %v4342 = vmax.f32 %v4333, -1e+30
      %v4343 = vmax.f32 %v4334, -1e+30
      %v4344 = vmax.f32 %v4335, -1e+30
      %v4345 = vmax.f32 %v4336, -1e+30
      %p4346 = scmp.lt.s32.totalorder %s4146, 12
      %s4347 = scalar_select %p4346, 1, 0
      %v4348 = vstv %s4347
      %vm4349 = vcmp.eq.s32.totalorder %v4348, 1
      %v4350 = vsel %vm4349, %v4337, %v4156
      %v4351 = vsel %vm4349, %v4338, %v4157
      %v4352 = vsel %vm4349, %v4339, %v4158
      %v4353 = vsel %vm4349, %v4340, %v4159
      %v4354 = vsel %vm4349, %v4341, %v4160
      %v4355 = vsel %vm4349, %v4342, %v4161
      %v4356 = vsel %vm4349, %v4343, %v4162
      %v4357 = vsel %vm4349, %v4344, %v4163
      %v4358 = vsel %vm4349, %v4345, %v4164
      %4359 = vst [vmem:[#allocation2 + $0x10] sm:$0xff] %v4350
      %4360 = vst [vmem:[#allocation2 + $0x18] sm:$0xff] %v4351
      %4361 = vst [vmem:[#allocation2 + $0x20] sm:$0xff] %v4352
      %4362 = vst [vmem:[#allocation2 + $0x28] sm:$0xff] %v4353
      %4363 = vst [vmem:[#allocation2 + $0x30] sm:$0xff] %v4354
      %4364 = vst [vmem:[#allocation2 + $0x38] sm:$0xff] %v4355
      %4365 = vst [vmem:[#allocation2 + $0x40] sm:$0xff] %v4356
      %4366 = vst [vmem:[#allocation2 + $0x48] sm:$0xff] %v4357
      %4367 = vst [vmem:[#allocation2 + $0x50] sm:$0xff] %v4358
      %s4368 = sadd.s32 %s2979, 6
      %v4369 = vld [vmem:[#allocation3 + $0x30] sm:$0xff]
      %v4370 = vld [vmem:[#allocation3 + $0x70] sm:$0xff]
      %v4371 = vld [vmem:[#allocation3 + $0xb0] sm:$0xff]
      %v4372 = vld [vmem:[#allocation3 + $0xf0] sm:$0xff]
      %v4373 = vld [vmem:[#allocation3 + $0x130] sm:$0xff]
      %v4374 = vld [vmem:[#allocation3 + $0x170] sm:$0xff]
      %v4375 = vld [vmem:[#allocation3 + $0x1b0] sm:$0xff]
      %v4376 = vld [vmem:[#allocation3 + $0x1f0] sm:$0xff]
      %v4377 = vld [vmem:[#allocation3 + $0x230] sm:$0xff]
      %v4378 = vld [vmem:[#allocation2 + $0x10] sm:$0xff]
      %v4379 = vld [vmem:[#allocation2 + $0x18] sm:$0xff]
      %v4380 = vld [vmem:[#allocation2 + $0x20] sm:$0xff]
      %v4381 = vld [vmem:[#allocation2 + $0x28] sm:$0xff]
      %v4382 = vld [vmem:[#allocation2 + $0x30] sm:$0xff]
      %v4383 = vld [vmem:[#allocation2 + $0x38] sm:$0xff]
      %v4384 = vld [vmem:[#allocation2 + $0x40] sm:$0xff]
      %v4385 = vld [vmem:[#allocation2 + $0x48] sm:$0xff]
      %v4386 = vld [vmem:[#allocation2 + $0x50] sm:$0xff]
      %v4387 = vld [vmem:[#allocation2 + $0x8] sm:$0xff]
      %v4388 = vld [vmem:[#allocation2 + $0x10] sm:$0xff]
      %v4389 = vld [vmem:[#allocation2 + $0x18] sm:$0xff]
      %v4390 = vld [vmem:[#allocation2 + $0x20] sm:$0xff]
      %v4391 = vld [vmem:[#allocation2 + $0x28] sm:$0xff]
      %v4392 = vld [vmem:[#allocation2 + $0x30] sm:$0xff]
      %v4393 = vld [vmem:[#allocation2 + $0x38] sm:$0xff]
      %v4394 = vld [vmem:[#allocation2 + $0x40] sm:$0xff]
      %v4395 = vld [vmem:[#allocation2 + $0x48] sm:$0xff]
      %v4396 = vld [vmem:[#allocation2] sm:$0xff]
      %v4397 = vadd.f32 %v4396, %v3011
      %v4398 = vadd.f32 %v4387, %v3016
      %v4399 = vadd.f32 %v4388, %v3021
      %v4400 = vadd.f32 %v4389, %v3026
      %v4401 = vadd.f32 %v4390, %v3031
      %v4402 = vadd.f32 %v4391, %v3036
      %v4403 = vadd.f32 %v4392, %v3041
      %v4404 = vadd.f32 %v4393, %v3046
      %v4405 = vadd.f32 %v4394, %v3051
      %v4406 = vmax.f32 %v4378, %v4387
      %v4407 = vmax.f32 %v4379, %v4388
      %v4408 = vmax.f32 %v4380, %v4389
      %v4409 = vmax.f32 %v4381, %v4390
      %v4410 = vmax.f32 %v4382, %v4391
      %v4411 = vmax.f32 %v4383, %v4392
      %v4412 = vmax.f32 %v4384, %v4393
      %v4413 = vmax.f32 %v4385, %v4394
      %v4414 = vmax.f32 %v4386, %v4395
      %v4415 = vmax.f32 %v4406, %v4397
      %v4416 = vmax.f32 %v4407, %v4398
      %v4417 = vmax.f32 %v4408, %v4399
      %v4418 = vmax.f32 %v4409, %v4400
      %v4419 = vmax.f32 %v4410, %v4401
      %v4420 = vmax.f32 %v4411, %v4402
      %v4421 = vmax.f32 %v4412, %v4403
      %v4422 = vmax.f32 %v4413, %v4404
      %v4423 = vmax.f32 %v4414, %v4405
      %v4424 = vsub.f32 %v4378, %v4415
      %v4425 = vsub.f32 %v4379, %v4416
      %v4426 = vsub.f32 %v4380, %v4417
      %v4427 = vsub.f32 %v4381, %v4418
      %v4428 = vsub.f32 %v4382, %v4419
      %v4429 = vsub.f32 %v4383, %v4420
      %v4430 = vsub.f32 %v4384, %v4421
      %v4431 = vsub.f32 %v4385, %v4422
      %v4432 = vsub.f32 %v4386, %v4423
      %v4433 = vmul.f32 %v4424, 1.442695
      %v4434 = vpow.pop %v4433
      %v4435 = vmul.f32 %v4425, 1.442695
      %v4436 = vpow.pop %v4435
      %v4437 = vmul.f32 %v4426, 1.442695
      %v4438 = vpow.pop %v4437
      %v4439 = vmul.f32 %v4427, 1.442695
      %v4440 = vpow.pop %v4439
      %v4441 = vmul.f32 %v4428, 1.442695
      %v4442 = vpow.pop %v4441
      %v4443 = vmul.f32 %v4429, 1.442695
      %v4444 = vpow.pop %v4443
      %v4445 = vmul.f32 %v4430, 1.442695
      %v4446 = vpow.pop %v4445
      %v4447 = vmul.f32 %v4431, 1.442695
      %v4448 = vpow.pop %v4447
      %v4449 = vmul.f32 %v4432, 1.442695
      %v4450 = vpow.pop %v4449
      %v4451 = vsub.f32 %v4387, %v4415
      %v4452 = vsub.f32 %v4388, %v4416
      %v4453 = vsub.f32 %v4389, %v4417
      %v4454 = vsub.f32 %v4390, %v4418
      %v4455 = vsub.f32 %v4391, %v4419
      %v4456 = vsub.f32 %v4392, %v4420
      %v4457 = vsub.f32 %v4393, %v4421
      %v4458 = vsub.f32 %v4394, %v4422
      %v4459 = vsub.f32 %v4395, %v4423
      %v4460 = vmul.f32 %v4451, 1.442695
      %v4461 = vpow.pop %v4460
      %v4462 = vmul.f32 %v4452, 1.442695
      %v4463 = vpow.pop %v4462
      %v4464 = vmul.f32 %v4453, 1.442695
      %v4465 = vpow.pop %v4464
      %v4466 = vmul.f32 %v4454, 1.442695
      %v4467 = vpow.pop %v4466
      %v4468 = vmul.f32 %v4455, 1.442695
      %v4469 = vpow.pop %v4468
      %v4470 = vmul.f32 %v4456, 1.442695
      %v4471 = vpow.pop %v4470
      %v4472 = vmul.f32 %v4457, 1.442695
      %v4473 = vpow.pop %v4472
      %v4474 = vmul.f32 %v4458, 1.442695
      %v4475 = vpow.pop %v4474
      %v4476 = vmul.f32 %v4459, 1.442695
      %v4477 = vpow.pop %v4476
      %v4478 = vadd.f32 %v4434, %v4461
      %v4479 = vadd.f32 %v4436, %v4463
      %v4480 = vadd.f32 %v4438, %v4465
      %v4481 = vadd.f32 %v4440, %v4467
      %v4482 = vadd.f32 %v4442, %v4469
      %v4483 = vadd.f32 %v4444, %v4471
      %v4484 = vadd.f32 %v4446, %v4473
      %v4485 = vadd.f32 %v4448, %v4475
      %v4486 = vadd.f32 %v4450, %v4477
      %v4487 = vsub.f32 %v4397, %v4415
      %v4488 = vsub.f32 %v4398, %v4416
      %v4489 = vsub.f32 %v4399, %v4417
      %v4490 = vsub.f32 %v4400, %v4418
      %v4491 = vsub.f32 %v4401, %v4419
      %v4492 = vsub.f32 %v4402, %v4420
      %v4493 = vsub.f32 %v4403, %v4421
      %v4494 = vsub.f32 %v4404, %v4422
      %v4495 = vsub.f32 %v4405, %v4423
      %v4496 = vmul.f32 %v4487, 1.442695
      %v4497 = vpow.pop %v4496
      %v4498 = vmul.f32 %v4488, 1.442695
      %v4499 = vpow.pop %v4498
      %v4500 = vmul.f32 %v4489, 1.442695
      %v4501 = vpow.pop %v4500
      %v4502 = vmul.f32 %v4490, 1.442695
      %v4503 = vpow.pop %v4502
      %v4504 = vmul.f32 %v4491, 1.442695
      %v4505 = vpow.pop %v4504
      %v4506 = vmul.f32 %v4492, 1.442695
      %v4507 = vpow.pop %v4506
      %v4508 = vmul.f32 %v4493, 1.442695
      %v4509 = vpow.pop %v4508
      %v4510 = vmul.f32 %v4494, 1.442695
      %v4511 = vpow.pop %v4510
      %v4512 = vmul.f32 %v4495, 1.442695
      %v4513 = vpow.pop %v4512
      %v4514 = vadd.f32 %v4478, %v4497
      %v4515 = vadd.f32 %v4479, %v4499
      %v4516 = vadd.f32 %v4480, %v4501
      %v4517 = vadd.f32 %v4481, %v4503
      %v4518 = vadd.f32 %v4482, %v4505
      %v4519 = vadd.f32 %v4483, %v4507
      %v4520 = vadd.f32 %v4484, %v4509
      %v4521 = vadd.f32 %v4485, %v4511
      %v4522 = vadd.f32 %v4486, %v4513
      %v4523 = vlog2.pop %v4514
      %v4524 = vmul.f32 %v4523, 0.6931472
      %v4525 = vlog2.pop %v4515
      %v4526 = vmul.f32 %v4525, 0.6931472
      %v4527 = vlog2.pop %v4516
      %v4528 = vmul.f32 %v4527, 0.6931472
      %v4529 = vlog2.pop %v4517
      %v4530 = vmul.f32 %v4529, 0.6931472
      %v4531 = vlog2.pop %v4518
      %v4532 = vmul.f32 %v4531, 0.6931472
      %v4533 = vlog2.pop %v4519
      %v4534 = vmul.f32 %v4533, 0.6931472
      %v4535 = vlog2.pop %v4520
      %v4536 = vmul.f32 %v4535, 0.6931472
      %v4537 = vlog2.pop %v4521
      %v4538 = vmul.f32 %v4537, 0.6931472
      %v4539 = vlog2.pop %v4522
      %v4540 = vmul.f32 %v4539, 0.6931472
      %v4541 = vadd.f32 %v4415, %v4524
      %v4542 = vadd.f32 %v4416, %v4526
      %v4543 = vadd.f32 %v4417, %v4528
      %v4544 = vadd.f32 %v4418, %v4530
      %v4545 = vadd.f32 %v4419, %v4532
      %v4546 = vadd.f32 %v4420, %v4534
      %v4547 = vadd.f32 %v4421, %v4536
      %v4548 = vadd.f32 %v4422, %v4538
      %v4549 = vadd.f32 %v4423, %v4540
      %v4550 = vadd.f32 %v4369, %v4541
      %v4551 = vadd.f32 %v4370, %v4542
      %v4552 = vadd.f32 %v4371, %v4543
      %v4553 = vadd.f32 %v4372, %v4544
      %v4554 = vadd.f32 %v4373, %v4545
      %v4555 = vadd.f32 %v4374, %v4546
      %v4556 = vadd.f32 %v4375, %v4547
      %v4557 = vadd.f32 %v4376, %v4548
      %v4558 = vadd.f32 %v4377, %v4549
      %v4559 = vmax.f32 %v4550, -1e+30
      %v4560 = vmax.f32 %v4551, -1e+30
      %v4561 = vmax.f32 %v4552, -1e+30
      %v4562 = vmax.f32 %v4553, -1e+30
      %v4563 = vmax.f32 %v4554, -1e+30
      %v4564 = vmax.f32 %v4555, -1e+30
      %v4565 = vmax.f32 %v4556, -1e+30
      %v4566 = vmax.f32 %v4557, -1e+30
      %v4567 = vmax.f32 %v4558, -1e+30
      %p4568 = scmp.lt.s32.totalorder %s4368, 12
      %s4569 = scalar_select %p4568, 1, 0
      %v4570 = vstv %s4569
      %vm4571 = vcmp.eq.s32.totalorder %v4570, 1
      %v4572 = vsel %vm4571, %v4559, %v4378
      %v4573 = vsel %vm4571, %v4560, %v4379
      %v4574 = vsel %vm4571, %v4561, %v4380
      %v4575 = vsel %vm4571, %v4562, %v4381
      %v4576 = vsel %vm4571, %v4563, %v4382
      %v4577 = vsel %vm4571, %v4564, %v4383
      %v4578 = vsel %vm4571, %v4565, %v4384
      %v4579 = vsel %vm4571, %v4566, %v4385
      %v4580 = vsel %vm4571, %v4567, %v4386
      %4581 = vst [vmem:[#allocation2 + $0x10] sm:$0xff] %v4572
      %4582 = vst [vmem:[#allocation2 + $0x18] sm:$0xff] %v4573
      %4583 = vst [vmem:[#allocation2 + $0x20] sm:$0xff] %v4574
      %4584 = vst [vmem:[#allocation2 + $0x28] sm:$0xff] %v4575
      %4585 = vst [vmem:[#allocation2 + $0x30] sm:$0xff] %v4576
      %4586 = vst [vmem:[#allocation2 + $0x38] sm:$0xff] %v4577
      %4587 = vst [vmem:[#allocation2 + $0x40] sm:$0xff] %v4578
      %4588 = vst [vmem:[#allocation2 + $0x48] sm:$0xff] %v4579
      %4589 = vst [vmem:[#allocation2 + $0x50] sm:$0xff] %v4580
      %s4590 = sadd.s32 %s2979, 7
      %v4591 = vld [vmem:[#allocation3 + $0x38] sm:$0xff]
      %v4592 = vld [vmem:[#allocation3 + $0x78] sm:$0xff]
      %v4593 = vld [vmem:[#allocation3 + $0xb8] sm:$0xff]
      %v4594 = vld [vmem:[#allocation3 + $0xf8] sm:$0xff]
      %v4595 = vld [vmem:[#allocation3 + $0x138] sm:$0xff]
      %v4596 = vld [vmem:[#allocation3 + $0x178] sm:$0xff]
      %v4597 = vld [vmem:[#allocation3 + $0x1b8] sm:$0xff]
      %v4598 = vld [vmem:[#allocation3 + $0x1f8] sm:$0xff]
      %v4599 = vld [vmem:[#allocation3 + $0x238] sm:$0xff]
      %v4600 = vld [vmem:[#allocation2 + $0x10] sm:$0xff]
      %v4601 = vld [vmem:[#allocation2 + $0x18] sm:$0xff]
      %v4602 = vld [vmem:[#allocation2 + $0x20] sm:$0xff]
      %v4603 = vld [vmem:[#allocation2 + $0x28] sm:$0xff]
      %v4604 = vld [vmem:[#allocation2 + $0x30] sm:$0xff]
      %v4605 = vld [vmem:[#allocation2 + $0x38] sm:$0xff]
      %v4606 = vld [vmem:[#allocation2 + $0x40] sm:$0xff]
      %v4607 = vld [vmem:[#allocation2 + $0x48] sm:$0xff]
      %v4608 = vld [vmem:[#allocation2 + $0x50] sm:$0xff]
      %v4609 = vld [vmem:[#allocation2 + $0x8] sm:$0xff]
      %v4610 = vld [vmem:[#allocation2 + $0x10] sm:$0xff]
      %v4611 = vld [vmem:[#allocation2 + $0x18] sm:$0xff]
      %v4612 = vld [vmem:[#allocation2 + $0x20] sm:$0xff]
      %v4613 = vld [vmem:[#allocation2 + $0x28] sm:$0xff]
      %v4614 = vld [vmem:[#allocation2 + $0x30] sm:$0xff]
      %v4615 = vld [vmem:[#allocation2 + $0x38] sm:$0xff]
      %v4616 = vld [vmem:[#allocation2 + $0x40] sm:$0xff]
      %v4617 = vld [vmem:[#allocation2 + $0x48] sm:$0xff]
      %v4618 = vld [vmem:[#allocation2] sm:$0xff]
      %v4619 = vadd.f32 %v4618, %v3011
      %v4620 = vadd.f32 %v4609, %v3016
      %v4621 = vadd.f32 %v4610, %v3021
      %v4622 = vadd.f32 %v4611, %v3026
      %v4623 = vadd.f32 %v4612, %v3031
      %v4624 = vadd.f32 %v4613, %v3036
      %v4625 = vadd.f32 %v4614, %v3041
      %v4626 = vadd.f32 %v4615, %v3046
      %v4627 = vadd.f32 %v4616, %v3051
      %v4628 = vmax.f32 %v4600, %v4609
      %v4629 = vmax.f32 %v4601, %v4610
      %v4630 = vmax.f32 %v4602, %v4611
      %v4631 = vmax.f32 %v4603, %v4612
      %v4632 = vmax.f32 %v4604, %v4613
      %v4633 = vmax.f32 %v4605, %v4614
      %v4634 = vmax.f32 %v4606, %v4615
      %v4635 = vmax.f32 %v4607, %v4616
      %v4636 = vmax.f32 %v4608, %v4617
      %v4637 = vmax.f32 %v4628, %v4619
      %v4638 = vmax.f32 %v4629, %v4620
      %v4639 = vmax.f32 %v4630, %v4621
      %v4640 = vmax.f32 %v4631, %v4622
      %v4641 = vmax.f32 %v4632, %v4623
      %v4642 = vmax.f32 %v4633, %v4624
      %v4643 = vmax.f32 %v4634, %v4625
      %v4644 = vmax.f32 %v4635, %v4626
      %v4645 = vmax.f32 %v4636, %v4627
      %v4646 = vsub.f32 %v4600, %v4637
      %v4647 = vsub.f32 %v4601, %v4638
      %v4648 = vsub.f32 %v4602, %v4639
      %v4649 = vsub.f32 %v4603, %v4640
      %v4650 = vsub.f32 %v4604, %v4641
      %v4651 = vsub.f32 %v4605, %v4642
      %v4652 = vsub.f32 %v4606, %v4643
      %v4653 = vsub.f32 %v4607, %v4644
      %v4654 = vsub.f32 %v4608, %v4645
      %v4655 = vmul.f32 %v4646, 1.442695
      %v4656 = vpow.pop %v4655
      %v4657 = vmul.f32 %v4647, 1.442695
      %v4658 = vpow.pop %v4657
      %v4659 = vmul.f32 %v4648, 1.442695
      %v4660 = vpow.pop %v4659
      %v4661 = vmul.f32 %v4649, 1.442695
      %v4662 = vpow.pop %v4661
      %v4663 = vmul.f32 %v4650, 1.442695
      %v4664 = vpow.pop %v4663
      %v4665 = vmul.f32 %v4651, 1.442695
      %v4666 = vpow.pop %v4665
      %v4667 = vmul.f32 %v4652, 1.442695
      %v4668 = vpow.pop %v4667
      %v4669 = vmul.f32 %v4653, 1.442695
      %v4670 = vpow.pop %v4669
      %v4671 = vmul.f32 %v4654, 1.442695
      %v4672 = vpow.pop %v4671
      %v4673 = vsub.f32 %v4609, %v4637
      %v4674 = vsub.f32 %v4610, %v4638
      %v4675 = vsub.f32 %v4611, %v4639
      %v4676 = vsub.f32 %v4612, %v4640
      %v4677 = vsub.f32 %v4613, %v4641
      %v4678 = vsub.f32 %v4614, %v4642
      %v4679 = vsub.f32 %v4615, %v4643
      %v4680 = vsub.f32 %v4616, %v4644
      %v4681 = vsub.f32 %v4617, %v4645
      %v4682 = vmul.f32 %v4673, 1.442695
      %v4683 = vpow.pop %v4682
      %v4684 = vmul.f32 %v4674, 1.442695
      %v4685 = vpow.pop %v4684
      %v4686 = vmul.f32 %v4675, 1.442695
      %v4687 = vpow.pop %v4686
      %v4688 = vmul.f32 %v4676, 1.442695
      %v4689 = vpow.pop %v4688
      %v4690 = vmul.f32 %v4677, 1.442695
      %v4691 = vpow.pop %v4690
      %v4692 = vmul.f32 %v4678, 1.442695
      %v4693 = vpow.pop %v4692
      %v4694 = vmul.f32 %v4679, 1.442695
      %v4695 = vpow.pop %v4694
      %v4696 = vmul.f32 %v4680, 1.442695
      %v4697 = vpow.pop %v4696
      %v4698 = vmul.f32 %v4681, 1.442695
      %v4699 = vpow.pop %v4698
      %v4700 = vadd.f32 %v4656, %v4683
      %v4701 = vadd.f32 %v4658, %v4685
      %v4702 = vadd.f32 %v4660, %v4687
      %v4703 = vadd.f32 %v4662, %v4689
      %v4704 = vadd.f32 %v4664, %v4691
      %v4705 = vadd.f32 %v4666, %v4693
      %v4706 = vadd.f32 %v4668, %v4695
      %v4707 = vadd.f32 %v4670, %v4697
      %v4708 = vadd.f32 %v4672, %v4699
      %v4709 = vsub.f32 %v4619, %v4637
      %v4710 = vsub.f32 %v4620, %v4638
      %v4711 = vsub.f32 %v4621, %v4639
      %v4712 = vsub.f32 %v4622, %v4640
      %v4713 = vsub.f32 %v4623, %v4641
      %v4714 = vsub.f32 %v4624, %v4642
      %v4715 = vsub.f32 %v4625, %v4643
      %v4716 = vsub.f32 %v4626, %v4644
      %v4717 = vsub.f32 %v4627, %v4645
      %v4718 = vmul.f32 %v4709, 1.442695
      %v4719 = vpow.pop %v4718
      %v4720 = vmul.f32 %v4710, 1.442695
      %v4721 = vpow.pop %v4720
      %v4722 = vmul.f32 %v4711, 1.442695
      %v4723 = vpow.pop %v4722
      %v4724 = vmul.f32 %v4712, 1.442695
      %v4725 = vpow.pop %v4724
      %v4726 = vmul.f32 %v4713, 1.442695
      %v4727 = vpow.pop %v4726
      %v4728 = vmul.f32 %v4714, 1.442695
      %v4729 = vpow.pop %v4728
      %v4730 = vmul.f32 %v4715, 1.442695
      %v4731 = vpow.pop %v4730
      %v4732 = vmul.f32 %v4716, 1.442695
      %v4733 = vpow.pop %v4732
      %v4734 = vmul.f32 %v4717, 1.442695
      %v4735 = vpow.pop %v4734
      %v4736 = vadd.f32 %v4700, %v4719
      %v4737 = vadd.f32 %v4701, %v4721
      %v4738 = vadd.f32 %v4702, %v4723
      %v4739 = vadd.f32 %v4703, %v4725
      %v4740 = vadd.f32 %v4704, %v4727
      %v4741 = vadd.f32 %v4705, %v4729
      %v4742 = vadd.f32 %v4706, %v4731
      %v4743 = vadd.f32 %v4707, %v4733
      %v4744 = vadd.f32 %v4708, %v4735
      %v4745 = vlog2.pop %v4736
      %v4746 = vmul.f32 %v4745, 0.6931472
      %v4747 = vlog2.pop %v4737
      %v4748 = vmul.f32 %v4747, 0.6931472
      %v4749 = vlog2.pop %v4738
      %v4750 = vmul.f32 %v4749, 0.6931472
      %v4751 = vlog2.pop %v4739
      %v4752 = vmul.f32 %v4751, 0.6931472
      %v4753 = vlog2.pop %v4740
      %v4754 = vmul.f32 %v4753, 0.6931472
      %v4755 = vlog2.pop %v4741
      %v4756 = vmul.f32 %v4755, 0.6931472
      %v4757 = vlog2.pop %v4742
      %v4758 = vmul.f32 %v4757, 0.6931472
      %v4759 = vlog2.pop %v4743
      %v4760 = vmul.f32 %v4759, 0.6931472
      %v4761 = vlog2.pop %v4744
      %v4762 = vmul.f32 %v4761, 0.6931472
      %v4763 = vadd.f32 %v4637, %v4746
      %v4764 = vadd.f32 %v4638, %v4748
      %v4765 = vadd.f32 %v4639, %v4750
      %v4766 = vadd.f32 %v4640, %v4752
      %v4767 = vadd.f32 %v4641, %v4754
      %v4768 = vadd.f32 %v4642, %v4756
      %v4769 = vadd.f32 %v4643, %v4758
      %v4770 = vadd.f32 %v4644, %v4760
      %v4771 = vadd.f32 %v4645, %v4762
      %v4772 = vadd.f32 %v4591, %v4763
      %v4773 = vadd.f32 %v4592, %v4764
      %v4774 = vadd.f32 %v4593, %v4765
      %v4775 = vadd.f32 %v4594, %v4766
      %v4776 = vadd.f32 %v4595, %v4767
      %v4777 = vadd.f32 %v4596, %v4768
      %v4778 = vadd.f32 %v4597, %v4769
      %v4779 = vadd.f32 %v4598, %v4770
      %v4780 = vadd.f32 %v4599, %v4771
      %v4781 = vmax.f32 %v4772, -1e+30
      %v4782 = vmax.f32 %v4773, -1e+30
      %v4783 = vmax.f32 %v4774, -1e+30
      %v4784 = vmax.f32 %v4775, -1e+30
      %v4785 = vmax.f32 %v4776, -1e+30
      %v4786 = vmax.f32 %v4777, -1e+30
      %v4787 = vmax.f32 %v4778, -1e+30
      %v4788 = vmax.f32 %v4779, -1e+30
      %v4789 = vmax.f32 %v4780, -1e+30
      %p4790 = scmp.lt.s32.totalorder %s4590, 12
      %s4791 = scalar_select %p4790, 1, 0
      %v4792 = vstv %s4791
      %vm4793 = vcmp.eq.s32.totalorder %v4792, 1
      %v4794 = vsel %vm4793, %v4781, %v4600
      %v4795 = vsel %vm4793, %v4782, %v4601
      %v4796 = vsel %vm4793, %v4783, %v4602
      %v4797 = vsel %vm4793, %v4784, %v4603
      %v4798 = vsel %vm4793, %v4785, %v4604
      %v4799 = vsel %vm4793, %v4786, %v4605
      %v4800 = vsel %vm4793, %v4787, %v4606
      %v4801 = vsel %vm4793, %v4788, %v4607
      %v4802 = vsel %vm4793, %v4789, %v4608
      %4803 = vst [vmem:[#allocation2 + $0x10] sm:$0xff] %v4794
      %4804 = vst [vmem:[#allocation2 + $0x18] sm:$0xff] %v4795
      %4805 = vst [vmem:[#allocation2 + $0x20] sm:$0xff] %v4796
      %4806 = vst [vmem:[#allocation2 + $0x28] sm:$0xff] %v4797
      %4807 = vst [vmem:[#allocation2 + $0x30] sm:$0xff] %v4798
      %4808 = vst [vmem:[#allocation2 + $0x38] sm:$0xff] %v4799
      %4809 = vst [vmem:[#allocation2 + $0x40] sm:$0xff] %v4800
      %4810 = vst [vmem:[#allocation2 + $0x48] sm:$0xff] %v4801
      %4811 = vst [vmem:[#allocation2 + $0x50] sm:$0xff] %v4802
      %p4812 = scmp.eq.s32.totalorder %s22, 1
      // Predicated region
      $region41: #{_device_costs.1} parent=35 // pred_check
        %p4813 = pneg %p4812
      $region42: #{_device_costs.1} parent=35 // pred_check_branch
        %4815 = sbr.rel (%p4813) target = $region44
      $region43: #{_device_costs.1} parent=35 // pred_region
        %v4816 = vld [vmem:[#allocation2 + $0x10] sm:$0xff]
        %v4817 = vld [vmem:[#allocation2 + $0x18] sm:$0xff]
        %v4818 = vld [vmem:[#allocation2 + $0x20] sm:$0xff]
        %v4819 = vld [vmem:[#allocation2 + $0x28] sm:$0xff]
        %v4820 = vld [vmem:[#allocation2 + $0x30] sm:$0xff]
        %v4821 = vld [vmem:[#allocation2 + $0x38] sm:$0xff]
        %v4822 = vld [vmem:[#allocation2 + $0x40] sm:$0xff]
        %v4823 = vld [vmem:[#allocation2 + $0x48] sm:$0xff]
        %v4824 = vld [vmem:[#allocation2 + $0x50] sm:$0xff]
        %v4825 = vld [vmem:[%s304] sm:$0xff]
        %v4826 = vld [vmem:[%s304 + $0x8] sm:$0xff]
        %v4827 = vld [vmem:[%s304 + $0x10] sm:$0xff]
        %v4828 = vld [vmem:[%s304 + $0x18] sm:$0xff]
        %v4829 = vld [vmem:[%s304 + $0x20] sm:$0xff]
        %v4830 = vld [vmem:[%s304 + $0x28] sm:$0xff]
        %v4831 = vld [vmem:[%s304 + $0x30] sm:$0xff]
        %v4832 = vld [vmem:[%s304 + $0x38] sm:$0xff]
        %v4833 = vld [vmem:[%s304 + $0x40] sm:$0xff]
        %4835 = vset.pattern.permute.xlu0 33
        %4836 = vperm.xlu0 %4835, %v4825
        %v4837 = vpop.permute.xlu0 %4836
        %4840 = vset.pattern.permute.xlu0 33
        %4841 = vperm.xlu0 %4840, %v4826
        %v4842 = vpop.permute.xlu0 %4841
        %4845 = vset.pattern.permute.xlu0 33
        %4846 = vperm.xlu0 %4845, %v4827
        %v4847 = vpop.permute.xlu0 %4846
        %4850 = vset.pattern.permute.xlu0 33
        %4851 = vperm.xlu0 %4850, %v4828
        %v4852 = vpop.permute.xlu0 %4851
        %4855 = vset.pattern.permute.xlu0 33
        %4856 = vperm.xlu0 %4855, %v4829
        %v4857 = vpop.permute.xlu0 %4856
        %4860 = vset.pattern.permute.xlu0 33
        %4861 = vperm.xlu0 %4860, %v4830
        %v4862 = vpop.permute.xlu0 %4861
        %4865 = vset.pattern.permute.xlu0 33
        %4866 = vperm.xlu0 %4865, %v4831
        %v4867 = vpop.permute.xlu0 %4866
        %4870 = vset.pattern.permute.xlu0 33
        %4871 = vperm.xlu0 %4870, %v4832
        %v4872 = vpop.permute.xlu0 %4871
        %4875 = vset.pattern.permute.xlu0 33
        %4876 = vperm.xlu0 %4875, %v4833
        %v4877 = vpop.permute.xlu0 %4876
        %v4879 = vmul.f32 %v4816, %v4837
        %v4880 = vmul.f32 %v4817, %v4842
        %v4881 = vmul.f32 %v4818, %v4847
        %v4882 = vmul.f32 %v4819, %v4852
        %v4883 = vmul.f32 %v4820, %v4857
        %v4884 = vmul.f32 %v4821, %v4862
        %v4885 = vmul.f32 %v4822, %v4867
        %v4886 = vmul.f32 %v4823, %v4872
        %v4887 = vmul.f32 %v4824, %v4877
        %v4888 = vadd.f32 %v4879, %v4880
        %v4889 = vadd.f32 %v4888, %v4881
        %v4890 = vadd.f32 %v4889, %v4882
        %v4891 = vadd.f32 %v4890, %v4883
        %v4892 = vadd.f32 %v4891, %v4884
        %v4893 = vadd.f32 %v4892, %v4885
        %v4894 = vadd.f32 %v4893, %v4886
        %v4895 = vadd.f32 %v4894, %v4887
        %4896 = vset.pattern.permute.xlu0 34
        %4897 = vperm.xlu0 %4896, %v4825
        %v4898 = vpop.permute.xlu0 %4897
        %4900 = vset.pattern.permute.xlu0 34
        %4901 = vperm.xlu0 %4900, %v4826
        %v4902 = vpop.permute.xlu0 %4901
        %4904 = vset.pattern.permute.xlu0 34
        %4905 = vperm.xlu0 %4904, %v4827
        %v4906 = vpop.permute.xlu0 %4905
        %4908 = vset.pattern.permute.xlu0 34
        %4909 = vperm.xlu0 %4908, %v4828
        %v4910 = vpop.permute.xlu0 %4909
        %4912 = vset.pattern.permute.xlu0 34
        %4913 = vperm.xlu0 %4912, %v4829
        %v4914 = vpop.permute.xlu0 %4913
        %4916 = vset.pattern.permute.xlu0 34
        %4917 = vperm.xlu0 %4916, %v4830
        %v4918 = vpop.permute.xlu0 %4917
        %4920 = vset.pattern.permute.xlu0 34
        %4921 = vperm.xlu0 %4920, %v4831
        %v4922 = vpop.permute.xlu0 %4921
        %4924 = vset.pattern.permute.xlu0 34
        %4925 = vperm.xlu0 %4924, %v4832
        %v4926 = vpop.permute.xlu0 %4925
        %4928 = vset.pattern.permute.xlu0 34
        %4929 = vperm.xlu0 %4928, %v4833
        %v4930 = vpop.permute.xlu0 %4929
        %v4932 = vmul.f32 %v4816, %v4898
        %v4933 = vmul.f32 %v4817, %v4902
        %v4934 = vmul.f32 %v4818, %v4906
        %v4935 = vmul.f32 %v4819, %v4910
        %v4936 = vmul.f32 %v4820, %v4914
        %v4937 = vmul.f32 %v4821, %v4918
        %v4938 = vmul.f32 %v4822, %v4922
        %v4939 = vmul.f32 %v4823, %v4926
        %v4940 = vmul.f32 %v4824, %v4930
        %v4941 = vadd.f32 %v4932, %v4933
        %v4942 = vadd.f32 %v4941, %v4934
        %v4943 = vadd.f32 %v4942, %v4935
        %v4944 = vadd.f32 %v4943, %v4936
        %v4945 = vadd.f32 %v4944, %v4937
        %v4946 = vadd.f32 %v4945, %v4938
        %v4947 = vadd.f32 %v4946, %v4939
        %v4948 = vadd.f32 %v4947, %v4940
        %v4949 = vmax.f32 %v4895, %v4948
        %v4950 = vsub.f32 %v4895, %v4949
        %v4951 = vmul.f32 %v4950, 1.442695
        %v4952 = vpow.pop %v4951
        %v4953 = vsub.f32 %v4948, %v4949
        %v4954 = vmul.f32 %v4953, 1.442695
        %v4955 = vpow.pop %v4954
        %v4956 = vadd.f32 %v4952, %v4955
        %v4957 = vlog2.pop %v4956
        %v4958 = vmul.f32 %v4957, 0.6931472
        %v4959 = vadd.f32 %v4949, %v4958
        %v4960 = vld [vmem:[%s304] sm:$0xff]
        %vm4961 = vcmp.lt.f32.partialorder %v4959, -1e+20
        %v4962 = vsub.f32 0.0, %v4959
        %v4963 = vsel %vm4961, 0.0, %v4962
        %4965 = vset.pattern.permute.xlu0 35
        %4966 = vperm.xlu0 %4965, %v4960
        %v4967 = vpop.permute.xlu0 %4966
        %v4969 = vmul.f32 %v4963, %v4967
        %4970 = vst [vmem:[%s317] sm:$0xff] %v4969
        %v4971 = vld [vmem:[%s309] sm:$0xff]
        %v4972 = vld [vmem:[%s309 + $0x8] sm:$0xff]
        %v4973 = vld [vmem:[%s313] sm:$0xff]
        %4975 = vset.pattern.permute.xlu0 0
        %4976 = vperm.xlu0 %4975, %v4973
        %v4977 = vpop.permute.xlu0 %4976
        %v4979 = vlaneseq
        %v4980 = vshrl.u32 %v4979, 7
        %v4981 = vsub.s32 0, %v4980
        %v4982 = vrot.slane %v4971, %v4981
        %v4983 = vsub.f32 %v4977, %v4982
        %v4984 = vand.u32 2147483647, %v4983
        %v4985 = vadd.f32 %v4984, 0.0
        %4986 = vset.pattern.permute.xlu0 1
        %4987 = vperm.xlu0 %4986, %v4973
        %v4988 = vpop.permute.xlu0 %4987
        %v4990 = vlaneseq
        %v4991 = vshrl.u32 %v4990, 7
        %v4992 = vsub.s32 1, %v4991
        %v4993 = vrot.slane %v4971, %v4992
        %v4994 = vsub.f32 %v4988, %v4993
        %v4995 = vand.u32 2147483647, %v4994
        %v4996 = vadd.f32 %v4985, %v4995
        %4997 = vset.pattern.permute.xlu0 2
        %4998 = vperm.xlu0 %4997, %v4973
        %v4999 = vpop.permute.xlu0 %4998
        %v5001 = vlaneseq
        %v5002 = vshrl.u32 %v5001, 7
        %v5003 = vsub.s32 2, %v5002
        %v5004 = vrot.slane %v4971, %v5003
        %v5005 = vsub.f32 %v4999, %v5004
        %v5006 = vand.u32 2147483647, %v5005
        %v5007 = vadd.f32 %v4996, %v5006
        %5008 = vset.pattern.permute.xlu0 3
        %5009 = vperm.xlu0 %5008, %v4973
        %v5010 = vpop.permute.xlu0 %5009
        %v5012 = vlaneseq
        %v5013 = vshrl.u32 %v5012, 7
        %v5014 = vsub.s32 3, %v5013
        %v5015 = vrot.slane %v4971, %v5014
        %v5016 = vsub.f32 %v5010, %v5015
        %v5017 = vand.u32 2147483647, %v5016
        %v5018 = vadd.f32 %v5007, %v5017
        %5019 = vset.pattern.permute.xlu0 4
        %5020 = vperm.xlu0 %5019, %v4973
        %v5021 = vpop.permute.xlu0 %5020
        %v5023 = vlaneseq
        %v5024 = vshrl.u32 %v5023, 7
        %v5025 = vsub.s32 4, %v5024
        %v5026 = vrot.slane %v4971, %v5025
        %v5027 = vsub.f32 %v5021, %v5026
        %v5028 = vand.u32 2147483647, %v5027
        %v5029 = vadd.f32 %v5018, %v5028
        %5030 = vset.pattern.permute.xlu0 5
        %5031 = vperm.xlu0 %5030, %v4973
        %v5032 = vpop.permute.xlu0 %5031
        %v5034 = vlaneseq
        %v5035 = vshrl.u32 %v5034, 7
        %v5036 = vsub.s32 5, %v5035
        %v5037 = vrot.slane %v4971, %v5036
        %v5038 = vsub.f32 %v5032, %v5037
        %v5039 = vand.u32 2147483647, %v5038
        %v5040 = vadd.f32 %v5029, %v5039
        %5041 = vset.pattern.permute.xlu0 6
        %5042 = vperm.xlu0 %5041, %v4973
        %v5043 = vpop.permute.xlu0 %5042
        %v5045 = vlaneseq
        %v5046 = vshrl.u32 %v5045, 7
        %v5047 = vsub.s32 6, %v5046
        %v5048 = vrot.slane %v4971, %v5047
        %v5049 = vsub.f32 %v5043, %v5048
        %v5050 = vand.u32 2147483647, %v5049
        %v5051 = vadd.f32 %v5040, %v5050
        %5052 = vset.pattern.permute.xlu0 7
        %5053 = vperm.xlu0 %5052, %v4973
        %v5054 = vpop.permute.xlu0 %5053
        %v5056 = vlaneseq
        %v5057 = vshrl.u32 %v5056, 7
        %v5058 = vsub.s32 7, %v5057
        %v5059 = vrot.slane %v4971, %v5058
        %v5060 = vsub.f32 %v5054, %v5059
        %v5061 = vand.u32 2147483647, %v5060
        %v5062 = vadd.f32 %v5051, %v5061
        %5063 = vset.pattern.permute.xlu0 8
        %5064 = vperm.xlu0 %5063, %v4973
        %v5065 = vpop.permute.xlu0 %5064
        %v5067 = vlaneseq
        %v5068 = vshrl.u32 %v5067, 7
        %v5069 = vsub.s32 0, %v5068
        %v5070 = vrot.slane %v4972, %v5069
        %v5071 = vsub.f32 %v5065, %v5070
        %v5072 = vand.u32 2147483647, %v5071
        %v5073 = vadd.f32 %v5062, %v5072
        %5074 = vset.pattern.permute.xlu0 9
        %5075 = vperm.xlu0 %5074, %v4973
        %v5076 = vpop.permute.xlu0 %5075
        %v5078 = vlaneseq
        %v5079 = vshrl.u32 %v5078, 7
        %v5080 = vsub.s32 1, %v5079
        %v5081 = vrot.slane %v4972, %v5080
        %v5082 = vsub.f32 %v5076, %v5081
        %v5083 = vand.u32 2147483647, %v5082
        %v5084 = vadd.f32 %v5073, %v5083
        %5085 = vset.pattern.permute.xlu0 10
        %5086 = vperm.xlu0 %5085, %v4973
        %v5087 = vpop.permute.xlu0 %5086
        %v5089 = vlaneseq
        %v5090 = vshrl.u32 %v5089, 7
        %v5091 = vsub.s32 2, %v5090
        %v5092 = vrot.slane %v4972, %v5091
        %v5093 = vsub.f32 %v5087, %v5092
        %v5094 = vand.u32 2147483647, %v5093
        %v5095 = vadd.f32 %v5084, %v5094
        %5096 = vset.pattern.permute.xlu0 11
        %5097 = vperm.xlu0 %5096, %v4973
        %v5098 = vpop.permute.xlu0 %5097
        %v5100 = vlaneseq
        %v5101 = vshrl.u32 %v5100, 7
        %v5102 = vsub.s32 3, %v5101
        %v5103 = vrot.slane %v4972, %v5102
        %v5104 = vsub.f32 %v5098, %v5103
        %v5105 = vand.u32 2147483647, %v5104
        %v5106 = vadd.f32 %v5095, %v5105
        %5107 = vset.pattern.permute.xlu0 12
        %5108 = vperm.xlu0 %5107, %v4973
        %v5109 = vpop.permute.xlu0 %5108
        %v5111 = vlaneseq
        %v5112 = vshrl.u32 %v5111, 7
        %v5113 = vsub.s32 4, %v5112
        %v5114 = vrot.slane %v4972, %v5113
        %v5115 = vsub.f32 %v5109, %v5114
        %v5116 = vand.u32 2147483647, %v5115
        %v5117 = vadd.f32 %v5106, %v5116
        %5118 = vset.pattern.permute.xlu0 13
        %5119 = vperm.xlu0 %5118, %v4973
        %v5120 = vpop.permute.xlu0 %5119
        %v5122 = vlaneseq
        %v5123 = vshrl.u32 %v5122, 7
        %v5124 = vsub.s32 5, %v5123
        %v5125 = vrot.slane %v4972, %v5124
        %v5126 = vsub.f32 %v5120, %v5125
        %v5127 = vand.u32 2147483647, %v5126
        %v5128 = vadd.f32 %v5117, %v5127
        %5129 = vset.pattern.permute.xlu0 14
        %5130 = vperm.xlu0 %5129, %v4973
        %v5131 = vpop.permute.xlu0 %5130
        %v5133 = vlaneseq
        %v5134 = vshrl.u32 %v5133, 7
        %v5135 = vsub.s32 6, %v5134
        %v5136 = vrot.slane %v4972, %v5135
        %v5137 = vsub.f32 %v5131, %v5136
        %v5138 = vand.u32 2147483647, %v5137
        %v5139 = vadd.f32 %v5128, %v5138
        %5140 = vset.pattern.permute.xlu0 15
        %5141 = vperm.xlu0 %5140, %v4973
        %v5142 = vpop.permute.xlu0 %5141
        %v5144 = vlaneseq
        %v5145 = vshrl.u32 %v5144, 7
        %v5146 = vsub.s32 7, %v5145
        %v5147 = vrot.slane %v4972, %v5146
        %v5148 = vsub.f32 %v5142, %v5147
        %v5149 = vand.u32 2147483647, %v5148
        %v5150 = vadd.f32 %v5139, %v5149
        %5151 = vst [vmem:[%s321] sm:$0xff] %v5150
      $region44: #{_device_costs.1} parent=35 // pred_fallthru
        _
      %p5152 = scmp.lt.s32.totalorder %s21, 1
      %s5153 = scalar_select %p5152, %s21, 1
      %s5154 = smul.addr %s5153, 8
      %s5155 = scalar_lea.vmem %s4, %s5154
      %p5156 = scmp.lt.s32.totalorder %s21, 1
      %s5157 = scalar_select %p5156, %s21, 1
      %s5158 = smul.addr %s5157, 8
      %s5159 = scalar_lea.vmem %s5, %s5158
      // Predicated region
      $region45: #{_device_costs.1} parent=35 // pred_check
        %p5160 = pneg %p153
      $region46: #{_device_costs.1} parent=35 // pred_check_branch
        %5162 = sbr.rel (%p5160) target = $region48
      $region47: #{_device_costs.1} parent=35 // pred_region
        _
      $region48: #{_device_costs.1} parent=35 // pred_fallthru
        _
      // Predicated region
      $region49: #{_device_costs.1} parent=35 // pred_check
        %p5163 = pneg %p179
      $region50: #{_device_costs.1} parent=35 // pred_check_branch
        %5165 = sbr.rel (%p5163) target = $region52
      $region51: #{_device_costs.1} parent=35 // pred_region
        _
      $region52: #{_device_costs.1} parent=35 // pred_fallthru
        _
    $region36: #{_device_costs.1} parent=5 // pred_fallthru
      _
    %p5166 = scmp.le.s32.totalorder 2, %s12
    // Predicated region
    $region53: #{_device_costs.1} parent=5 // pred_check
      %p5167 = pneg %p5166
    $region54: #{_device_costs.1} parent=5 // pred_check_branch
      %5169 = sbr.rel (%p5167) target = $region56
    $region55: #{_device_costs.1} parent=5 // pred_region
      %s5170 = ssub.s32 %s12, 2
      // Predicated region
      $region57: #{_device_costs.1} parent=55 // pred_check
        %p5171 = pneg %p159
      $region58: #{_device_costs.1} parent=55 // pred_check_branch
        %5173 = sbr.rel (%p5171) target = $region60
      $region59: #{_device_costs.1} parent=55 // pred_region
        %p5174 = scmp.lt.s32.totalorder %s23, 1
        %s5175 = scalar_select %p5174, %s23, 1
        %s5176 = smul.addr %s5175, 8
        %s5177 = scalar_lea.vmem %s4, %s5176
      $region60: #{_device_costs.1} parent=55 // pred_fallthru
        _
      // Predicated region
      $region61: #{_device_costs.1} parent=55 // pred_check
        %p5178 = pneg %p185
      $region62: #{_device_costs.1} parent=55 // pred_check_branch
        %5180 = sbr.rel (%p5178) target = $region64
      $region63: #{_device_costs.1} parent=55 // pred_region
        %p5181 = scmp.lt.s32.totalorder %s23, 1
        %s5182 = scalar_select %p5181, %s23, 1
        %s5183 = smul.addr %s5182, 8
        %s5184 = scalar_lea.vmem %s5, %s5183
      $region64: #{_device_costs.1} parent=55 // pred_fallthru
        _
    $region56: #{_device_costs.1} parent=5 // pred_fallthru
      _
  $region6: #{_device_costs.1} parent=0 // loop_footer
    %s16 = sadd.s32 1, %s12
  $region7: #{_device_costs.1} parent=0 // loop_footer_branch
    %11 = sbr.rel target = $region3
  $region8: #{_device_costs.1} parent=0 // loop_exit
    _

</llo_original>
